<compile_context>
chip_gen: v5e
topology: v5e:2x2
jax: 0.10.0
libtpu: 0.0.40
codegen_flags: <defaults>
</compile_context>

<pallas_src>
import jax
import jax.numpy as jnp
from jax import lax
from jax.experimental import pallas as pl
from jax.experimental.pallas import tpu as pltpu

# dot_general dimension numbers for  A^T @ B  (contract dim 0 of both 2-D operands);
# absorbs the adjacency transpose into the MXU instead of an explicit XLU transpose.
_TN_DIMS = (((0,), (0,)), ((), ()))


def gcn_kernel(x_ref, adj_ref, inv_d1_ref, inv_d2_ref,
               w1h_ref, w2h_ref, w1o_ref, w2o_ref, out_ref):
    G, N, _ = adj_ref.shape            # graphs in this step, nodes per graph

    # ---- Layer-1 projection, shared across all G graphs of this step:
    # one [G*N, D] @ [D, H] matmul per branch (project first, aggregate after).
    xf = x_ref[...]                                                           # [G*N, D]
    xw1 = jnp.dot(xf, w1h_ref[...], preferred_element_type=jnp.float32)       # [G*N, H]
    xw2 = jnp.dot(xf, w2h_ref[...], preferred_element_type=jnp.float32)       # [G*N, H]

    w1o = w1o_ref[...]                                                        # [H, OP]
    w2o = w2o_ref[...]                                                        # [H, OP]

    # ---- Per-graph aggregation (statically unrolled; G is small).
    for g in range(G):
        a = adj_ref[g]                                                        # [N, N]
        inv_d1 = inv_d1_ref[g]                                                # [N, 1]
        inv_d2 = inv_d2_ref[g]                                                # [N, 1]
        xw1g = xw1[g * N:(g + 1) * N]                                         # [N, H]
        xw2g = xw2[g * N:(g + 1) * N]                                         # [N, H]

        # (A + I) @ v == adj @ v + v ;  (A + I)^T @ v == adj^T @ v + v.
        agg1 = jnp.dot(a, xw1g, preferred_element_type=jnp.float32) + xw1g    # [N, H]
        agg2 = lax.dot_general(a, xw2g, _TN_DIMS,
                               preferred_element_type=jnp.float32) + xw2g     # [N, H]
        h1 = jnp.maximum(inv_d1 * agg1, 0.0)
        h2 = jnp.maximum(inv_d2 * agg2, 0.0)

        # Layer 2: both branches use 1/deg1 (reference-module quirk); the row scale
        # commutes past the output projection, so apply it once on the [N, OP] result.
        b1 = jnp.dot(a, h1, preferred_element_type=jnp.float32) + h1          # (A+I)   @ h1
        b2 = lax.dot_general(a, h2, _TN_DIMS,
                             preferred_element_type=jnp.float32) + h2         # (A+I)^T @ h2

        out = (jnp.dot(b1, w1o, preferred_element_type=jnp.float32)
               + jnp.dot(b2, w2o, preferred_element_type=jnp.float32))        # [N, OP]
        out_ref[g] = (0.5 * inv_d1) * out                                     # lane-dense store


def prepare_output_weights(w1o, w2o, lane_width=128):
    """One-time (init) prep: zero-pad the [H, O] output weights along O to a multiple
    of 128 lanes so the kernel's final matmul + store are lane-dense. Costs nothing
    on the MXU; padded output columns are exact zeros and stripped after the call."""
    _, o = w1o.shape
    op = ((o + lane_width - 1) // lane_width) * lane_width
    pad = ((0, 0), (0, op - o))
    return jnp.pad(w1o, pad), jnp.pad(w2o, pad)


def gcn_forward(x, adj, w1h, w2h, w1o_pad, w2o_pad, *, sz_out, graphs_per_step=None):
    """x: [B, N, D], adj: [B, N, N]; weights stored [in, out] (output weights padded)."""
    B, N, D = x.shape
    H = w1h.shape[1]
    OP = w1o_pad.shape[1]

    # Graphs per grid step. Default keeps 2 parallel steps (both v7x TensorCores busy);
    # on single-TC v5e/v6e pass graphs_per_step=B to fold everything into one step.
    G = graphs_per_step
    if G is None:
        G = B // 2 if (B >= 2 and B % 2 == 0) else B
    assert B % G == 0, "batch must be divisible by graphs_per_step"
    steps = B // G

    # Inverse degrees of (adj + I): row sums / column sums of adj, +1 for the self
    # loop. Exact integer sums -> exact 1/deg, computed once outside the kernel.
    inv_d1 = 1.0 / (jnp.sum(adj, axis=2, keepdims=True) + 1.0)                # [B, N, 1]
    inv_d2 = 1.0 / (jnp.sum(adj, axis=1)[..., None] + 1.0)                    # [B, N, 1]

    x2d = x.reshape(B * N, D)   # free metadata reshape; avoids in-kernel reshape

    out_pad = pl.pallas_call(
        gcn_kernel,
        out_shape=jax.ShapeDtypeStruct((B, N, OP), jnp.float32),
        grid=(steps,),
        in_specs=[
            pl.BlockSpec((G * N, D), lambda s: (s, 0)),
            pl.BlockSpec((G, N, N), lambda s: (s, 0, 0)),
            pl.BlockSpec((G, N, 1), lambda s: (s, 0, 0)),
            pl.BlockSpec((G, N, 1), lambda s: (s, 0, 0)),
            pl.BlockSpec((D, H), lambda s: (0, 0)),
            pl.BlockSpec((D, H), lambda s: (0, 0)),
            pl.BlockSpec((H, OP), lambda s: (0, 0)),
            pl.BlockSpec((H, OP), lambda s: (0, 0)),
        ],
        out_specs=pl.BlockSpec((G, N, OP), lambda s: (s, 0, 0)),
        compiler_params=pltpu.CompilerParams(
            dimension_semantics=("parallel",)),
    )(x2d, adj, inv_d1, inv_d2, w1h, w2h, w1o_pad, w2o_pad)

    return out_pad[..., :sz_out]   # strip the lane padding (exact zeros)


def gcn_reference(x, adj, w1h, w1o, w2h, w2o):
    """Pure-JAX transcription of the PyTorch module (single graph)."""
    n = adj.shape[0]
    adj1 = adj + jnp.eye(n, dtype=adj.dtype)
    deg1 = adj1.sum(axis=1, keepdims=True)
    adj2 = adj1.T
    deg2 = adj2.sum(axis=1, keepdims=True)
    x1 = jax.nn.relu((1.0 / deg1 * adj1) @ x @ w1h)
    x1 = (1.0 / deg1 * adj1) @ x1 @ w1o
    x2 = jax.nn.relu((1.0 / deg2 * adj2) @ x @ w2h)
    x2 = (1.0 / deg1 * adj2) @ x2 @ w2o   # reference uses deg1 here (module quirk)
    return (x1 + x2) / 2.0


if __name__ == "__main__":
    # Small shapes consistent with the module (sz_in scaled down, sz_hid=32, sz_out=7),
    # batched over B graphs with 4 graphs per grid step (-> 2 parallel grid steps).
    B, N, D, H, O = 8, 64, 256, 32, 7

    key = jax.random.PRNGKey(0)
    kx, ka, k1, k2, k3, k4 = jax.random.split(key, 6)

    x = jax.random.normal(kx, (B, N, D), dtype=jnp.float32)
    adj = (jax.random.uniform(ka, (B, N, N)) < 0.1).astype(jnp.float32)

    # nn.Linear(in, out, bias=False): weight is [out, in]; store the transpose [in, out].
    def init_linear(k, fan_in, fan_out):
        bound = 1.0 / jnp.sqrt(fan_in)
        w = jax.random.uniform(k, (fan_out, fan_in), minval=-bound, maxval=bound,
                               dtype=jnp.float32)
        return w.T

    w1h = init_linear(k1, D, H)   # hidden1
    w1o = init_linear(k2, H, O)   # out1
    w2h = init_linear(k3, D, H)   # hidden2
    w2o = init_linear(k4, H, O)   # out2

    # One-time init-side prep (hoisted out of the per-call forward path).
    w1o_pad, w2o_pad = prepare_output_weights(w1o, w2o)

    fwd = jax.jit(gcn_forward, static_argnames=("sz_out", "graphs_per_step"))
    out = fwd(x, adj, w1h, w2h, w1o_pad, w2o_pad, sz_out=O, graphs_per_step=4)
    out = jax.block_until_ready(out)

    ref = jax.vmap(gcn_reference, in_axes=(0, 0, None, None, None, None))(
        x, adj, w1h, w1o, w2h, w2o)
    assert out.shape == (B, N, O)
    assert jnp.allclose(out, ref, rtol=1e-4, atol=1e-4), "mismatch vs reference"

    print("KERNEL_OK")
</pallas_src>

<mosaic_0001>
module attributes {stable_mosaic.version = 11 : i64} {
  func.func @gcn_kernel(%arg0: i32, %arg1: memref<256x256xf32, #tpu.memory_space<vmem>>, %arg2: memref<4x64x64xf32, #tpu.memory_space<vmem>>, %arg3: memref<4x64x1xf32, #tpu.memory_space<vmem>>, %arg4: memref<4x64x1xf32, #tpu.memory_space<vmem>>, %arg5: memref<256x32xf32, #tpu.memory_space<vmem>>, %arg6: memref<256x32xf32, #tpu.memory_space<vmem>>, %arg7: memref<32x128xf32, #tpu.memory_space<vmem>>, %arg8: memref<32x128xf32, #tpu.memory_space<vmem>>, %arg9: memref<4x64x128xf32, #tpu.memory_space<vmem>>) attributes {dimension_semantics = [#tpu.dimension_semantics<parallel>], iteration_bounds = array<i64: 2>, scalar_prefetch = 0 : i64, scratch_operands = 0 : i64, tpu.core_type = #tpu.core_type<tc>, window_params = [{transform_indices = @transform_0, window_bounds = array<i64: 256, 256>}, {transform_indices = @transform_1, window_bounds = array<i64: 4, 64, 64>}, {transform_indices = @transform_2, window_bounds = array<i64: 4, 64, 1>}, {transform_indices = @transform_3, window_bounds = array<i64: 4, 64, 1>}, {pipeline_mode = #tpu.pipeline_mode<synchronous>, transform_indices = @transform_4, window_bounds = array<i64: 256, 32>}, {pipeline_mode = #tpu.pipeline_mode<synchronous>, transform_indices = @transform_5, window_bounds = array<i64: 256, 32>}, {pipeline_mode = #tpu.pipeline_mode<synchronous>, transform_indices = @transform_6, window_bounds = array<i64: 32, 128>}, {pipeline_mode = #tpu.pipeline_mode<synchronous>, transform_indices = @transform_7, window_bounds = array<i64: 32, 128>}, {transform_indices = @transform_8, window_bounds = array<i64: 4, 64, 128>}]} {
    %c0 = arith.constant 0 : index
    %c0_0 = arith.constant 0 : index
    %0 = vector.load %arg1[%c0, %c0_0] : memref<256x256xf32, #tpu.memory_space<vmem>>, vector<256x256xf32>
    %c0_1 = arith.constant 0 : index
    %c0_2 = arith.constant 0 : index
    %1 = vector.load %arg5[%c0_1, %c0_2] : memref<256x32xf32, #tpu.memory_space<vmem>>, vector<256x32xf32>
    %cst = arith.constant dense<0.000000e+00> : vector<256x32xf32>
    %2 = tpu.matmul %0, %1, %cst {dimension_numbers = #tpu.dot_dimension_numbers<[1], [0], [0], [1], [0, 0, 1, 1], [], []>} : vector<256x256xf32>, vector<256x32xf32>, vector<256x32xf32> -> vector<256x32xf32>
    %c0_3 = arith.constant 0 : index
    %c0_4 = arith.constant 0 : index
    %3 = vector.load %arg6[%c0_3, %c0_4] : memref<256x32xf32, #tpu.memory_space<vmem>>, vector<256x32xf32>
    %cst_5 = arith.constant dense<0.000000e+00> : vector<256x32xf32>
    %4 = tpu.matmul %0, %3, %cst_5 {dimension_numbers = #tpu.dot_dimension_numbers<[1], [0], [0], [1], [0, 0, 1, 1], [], []>} : vector<256x256xf32>, vector<256x32xf32>, vector<256x32xf32> -> vector<256x32xf32>
    %c0_6 = arith.constant 0 : index
    %c0_7 = arith.constant 0 : index
    %5 = vector.load %arg7[%c0_6, %c0_7] : memref<32x128xf32, #tpu.memory_space<vmem>>, vector<32x128xf32>
    %c0_8 = arith.constant 0 : index
    %c0_9 = arith.constant 0 : index
    %6 = vector.load %arg8[%c0_8, %c0_9] : memref<32x128xf32, #tpu.memory_space<vmem>>, vector<32x128xf32>
    %c0_10 = arith.constant 0 : index
    %c0_11 = arith.constant 0 : index
    %c0_12 = arith.constant 0 : index
    %7 = vector.load %arg2[%c0_10, %c0_11, %c0_12] : memref<4x64x64xf32, #tpu.memory_space<vmem>>, vector<1x64x64xf32>
    %8 = vector.shape_cast %7 : vector<1x64x64xf32> to vector<64x64xf32>
    %c0_13 = arith.constant 0 : index
    %c0_14 = arith.constant 0 : index
    %c0_15 = arith.constant 0 : index
    %9 = vector.load %arg3[%c0_13, %c0_14, %c0_15] : memref<4x64x1xf32, #tpu.memory_space<vmem>>, vector<1x64x1xf32>
    %10 = vector.shape_cast %9 : vector<1x64x1xf32> to vector<64x1xf32>
    %c0_16 = arith.constant 0 : index
    %c0_17 = arith.constant 0 : index
    %c0_18 = arith.constant 0 : index
    %11 = vector.load %arg4[%c0_16, %c0_17, %c0_18] : memref<4x64x1xf32, #tpu.memory_space<vmem>>, vector<1x64x1xf32>
    %12 = vector.shape_cast %11 : vector<1x64x1xf32> to vector<64x1xf32>
    %13 = vector.extract_strided_slice %2 {offsets = [0, 0], sizes = [64, 32], strides = [1, 1]} : vector<256x32xf32> to vector<64x32xf32>
    %14 = vector.extract_strided_slice %4 {offsets = [0, 0], sizes = [64, 32], strides = [1, 1]} : vector<256x32xf32> to vector<64x32xf32>
    %cst_19 = arith.constant dense<0.000000e+00> : vector<64x32xf32>
    %15 = tpu.matmul %8, %13, %cst_19 {dimension_numbers = #tpu.dot_dimension_numbers<[1], [0], [0], [1], [0, 0, 1, 1], [], []>} : vector<64x64xf32>, vector<64x32xf32>, vector<64x32xf32> -> vector<64x32xf32>
    %16 = arith.addf %15, %13 : vector<64x32xf32>
    %cst_20 = arith.constant dense<0.000000e+00> : vector<64x32xf32>
    %17 = tpu.matmul %8, %14, %cst_20 {dimension_numbers = #tpu.dot_dimension_numbers<[0], [0], [1], [1], [0, 1, 1, 1], [], []>} : vector<64x64xf32>, vector<64x32xf32>, vector<64x32xf32> -> vector<64x32xf32>
    %18 = arith.addf %17, %14 : vector<64x32xf32>
    %19 = vector.broadcast %10 : vector<64x1xf32> to vector<64x32xf32>
    %20 = arith.mulf %19, %16 : vector<64x32xf32>
    %cst_21 = arith.constant 0.000000e+00 : f32
    %21 = vector.broadcast %cst_21 : f32 to vector<64x32xf32>
    %22 = arith.maximumf %20, %21 : vector<64x32xf32>
    %23 = vector.broadcast %12 : vector<64x1xf32> to vector<64x32xf32>
    %24 = arith.mulf %23, %18 : vector<64x32xf32>
    %cst_22 = arith.constant 0.000000e+00 : f32
    %25 = vector.broadcast %cst_22 : f32 to vector<64x32xf32>
    %26 = arith.maximumf %24, %25 : vector<64x32xf32>
    %cst_23 = arith.constant dense<0.000000e+00> : vector<64x32xf32>
    %27 = tpu.matmul %8, %22, %cst_23 {dimension_numbers = #tpu.dot_dimension_numbers<[1], [0], [0], [1], [0, 0, 1, 1], [], []>} : vector<64x64xf32>, vector<64x32xf32>, vector<64x32xf32> -> vector<64x32xf32>
    %28 = arith.addf %27, %22 : vector<64x32xf32>
    %cst_24 = arith.constant dense<0.000000e+00> : vector<64x32xf32>
    %29 = tpu.matmul %8, %26, %cst_24 {dimension_numbers = #tpu.dot_dimension_numbers<[0], [0], [1], [1], [0, 1, 1, 1], [], []>} : vector<64x64xf32>, vector<64x32xf32>, vector<64x32xf32> -> vector<64x32xf32>
    %30 = arith.addf %29, %26 : vector<64x32xf32>
    %cst_25 = arith.constant dense<0.000000e+00> : vector<64x128xf32>
    %31 = tpu.matmul %28, %5, %cst_25 {dimension_numbers = #tpu.dot_dimension_numbers<[1], [0], [0], [1], [0, 0, 1, 1], [], []>} : vector<64x32xf32>, vector<32x128xf32>, vector<64x128xf32> -> vector<64x128xf32>
    %cst_26 = arith.constant dense<0.000000e+00> : vector<64x128xf32>
    %32 = tpu.matmul %30, %6, %cst_26 {dimension_numbers = #tpu.dot_dimension_numbers<[1], [0], [0], [1], [0, 0, 1, 1], [], []>} : vector<64x32xf32>, vector<32x128xf32>, vector<64x128xf32> -> vector<64x128xf32>
    %33 = arith.addf %31, %32 : vector<64x128xf32>
    %cst_27 = arith.constant 5.000000e-01 : f32
    %34 = vector.broadcast %cst_27 : f32 to vector<64x1xf32>
    %35 = arith.mulf %34, %10 : vector<64x1xf32>
    %36 = vector.broadcast %35 : vector<64x1xf32> to vector<64x128xf32>
    %37 = arith.mulf %36, %33 : vector<64x128xf32>
    %c0_28 = arith.constant 0 : index
    %c0_29 = arith.constant 0 : index
    %c0_30 = arith.constant 0 : index
    %38 = vector.load %arg9[%c0_28, %c0_29, %c0_30] : memref<4x64x128xf32, #tpu.memory_space<vmem>>, vector<1x64x128xf32>
    %39 = vector.shape_cast %38 : vector<1x64x128xf32> to vector<64x128xf32>
    %40 = vector.shape_cast %37 : vector<64x128xf32> to vector<1x64x128xf32>
    tpu.vector_store %arg9[%c0_28, %c0_29, %c0_30], %40 {strides = array<i32>} : memref<4x64x128xf32, #tpu.memory_space<vmem>>, vector<1x64x128xf32>,
    %c1 = arith.constant 1 : index
    %c0_31 = arith.constant 0 : index
    %c0_32 = arith.constant 0 : index
    %41 = vector.load %arg2[%c1, %c0_31, %c0_32] : memref<4x64x64xf32, #tpu.memory_space<vmem>>, vector<1x64x64xf32>
    %42 = vector.shape_cast %41 : vector<1x64x64xf32> to vector<64x64xf32>
    %c1_33 = arith.constant 1 : index
    %c0_34 = arith.constant 0 : index
    %c0_35 = arith.constant 0 : index
    %43 = vector.load %arg3[%c1_33, %c0_34, %c0_35] : memref<4x64x1xf32, #tpu.memory_space<vmem>>, vector<1x64x1xf32>
    %44 = vector.shape_cast %43 : vector<1x64x1xf32> to vector<64x1xf32>
    %c1_36 = arith.constant 1 : index
    %c0_37 = arith.constant 0 : index
    %c0_38 = arith.constant 0 : index
    %45 = vector.load %arg4[%c1_36, %c0_37, %c0_38] : memref<4x64x1xf32, #tpu.memory_space<vmem>>, vector<1x64x1xf32>
    %46 = vector.shape_cast %45 : vector<1x64x1xf32> to vector<64x1xf32>
    %47 = vector.extract_strided_slice %2 {offsets = [64, 0], sizes = [64, 32], strides = [1, 1]} : vector<256x32xf32> to vector<64x32xf32>
    %48 = vector.extract_strided_slice %4 {offsets = [64, 0], sizes = [64, 32], strides = [1, 1]} : vector<256x32xf32> to vector<64x32xf32>
    %cst_39 = arith.constant dense<0.000000e+00> : vector<64x32xf32>
    %49 = tpu.matmul %42, %47, %cst_39 {dimension_numbers = #tpu.dot_dimension_numbers<[1], [0], [0], [1], [0, 0, 1, 1], [], []>} : vector<64x64xf32>, vector<64x32xf32>, vector<64x32xf32> -> vector<64x32xf32>
    %50 = arith.addf %49, %47 : vector<64x32xf32>
    %cst_40 = arith.constant dense<0.000000e+00> : vector<64x32xf32>
    %51 = tpu.matmul %42, %48, %cst_40 {dimension_numbers = #tpu.dot_dimension_numbers<[0], [0], [1], [1], [0, 1, 1, 1], [], []>} : vector<64x64xf32>, vector<64x32xf32>, vector<64x32xf32> -> vector<64x32xf32>
    %52 = arith.addf %51, %48 : vector<64x32xf32>
    %53 = vector.broadcast %44 : vector<64x1xf32> to vector<64x32xf32>
    %54 = arith.mulf %53, %50 : vector<64x32xf32>
    %cst_41 = arith.constant 0.000000e+00 : f32
    %55 = vector.broadcast %cst_41 : f32 to vector<64x32xf32>
    %56 = arith.maximumf %54, %55 : vector<64x32xf32>
    %57 = vector.broadcast %46 : vector<64x1xf32> to vector<64x32xf32>
    %58 = arith.mulf %57, %52 : vector<64x32xf32>
    %cst_42 = arith.constant 0.000000e+00 : f32
    %59 = vector.broadcast %cst_42 : f32 to vector<64x32xf32>
    %60 = arith.maximumf %58, %59 : vector<64x32xf32>
    %cst_43 = arith.constant dense<0.000000e+00> : vector<64x32xf32>
    %61 = tpu.matmul %42, %56, %cst_43 {dimension_numbers = #tpu.dot_dimension_numbers<[1], [0], [0], [1], [0, 0, 1, 1], [], []>} : vector<64x64xf32>, vector<64x32xf32>, vector<64x32xf32> -> vector<64x32xf32>
    %62 = arith.addf %61, %56 : vector<64x32xf32>
    %cst_44 = arith.constant dense<0.000000e+00> : vector<64x32xf32>
    %63 = tpu.matmul %42, %60, %cst_44 {dimension_numbers = #tpu.dot_dimension_numbers<[0], [0], [1], [1], [0, 1, 1, 1], [], []>} : vector<64x64xf32>, vector<64x32xf32>, vector<64x32xf32> -> vector<64x32xf32>
    %64 = arith.addf %63, %60 : vector<64x32xf32>
    %cst_45 = arith.constant dense<0.000000e+00> : vector<64x128xf32>
    %65 = tpu.matmul %62, %5, %cst_45 {dimension_numbers = #tpu.dot_dimension_numbers<[1], [0], [0], [1], [0, 0, 1, 1], [], []>} : vector<64x32xf32>, vector<32x128xf32>, vector<64x128xf32> -> vector<64x128xf32>
    %cst_46 = arith.constant dense<0.000000e+00> : vector<64x128xf32>
    %66 = tpu.matmul %64, %6, %cst_46 {dimension_numbers = #tpu.dot_dimension_numbers<[1], [0], [0], [1], [0, 0, 1, 1], [], []>} : vector<64x32xf32>, vector<32x128xf32>, vector<64x128xf32> -> vector<64x128xf32>
    %67 = arith.addf %65, %66 : vector<64x128xf32>
    %cst_47 = arith.constant 5.000000e-01 : f32
    %68 = vector.broadcast %cst_47 : f32 to vector<64x1xf32>
    %69 = arith.mulf %68, %44 : vector<64x1xf32>
    %70 = vector.broadcast %69 : vector<64x1xf32> to vector<64x128xf32>
    %71 = arith.mulf %70, %67 : vector<64x128xf32>
    %c1_48 = arith.constant 1 : index
    %c0_49 = arith.constant 0 : index
    %c0_50 = arith.constant 0 : index
    %72 = vector.load %arg9[%c1_48, %c0_49, %c0_50] : memref<4x64x128xf32, #tpu.memory_space<vmem>>, vector<1x64x128xf32>
    %73 = vector.shape_cast %72 : vector<1x64x128xf32> to vector<64x128xf32>
    %74 = vector.shape_cast %71 : vector<64x128xf32> to vector<1x64x128xf32>
    tpu.vector_store %arg9[%c1_48, %c0_49, %c0_50], %74 {strides = array<i32>} : memref<4x64x128xf32, #tpu.memory_space<vmem>>, vector<1x64x128xf32>,
    %c2 = arith.constant 2 : index
    %c0_51 = arith.constant 0 : index
    %c0_52 = arith.constant 0 : index
    %75 = vector.load %arg2[%c2, %c0_51, %c0_52] : memref<4x64x64xf32, #tpu.memory_space<vmem>>, vector<1x64x64xf32>
    %76 = vector.shape_cast %75 : vector<1x64x64xf32> to vector<64x64xf32>
    %c2_53 = arith.constant 2 : index
    %c0_54 = arith.constant 0 : index
    %c0_55 = arith.constant 0 : index
    %77 = vector.load %arg3[%c2_53, %c0_54, %c0_55] : memref<4x64x1xf32, #tpu.memory_space<vmem>>, vector<1x64x1xf32>
    %78 = vector.shape_cast %77 : vector<1x64x1xf32> to vector<64x1xf32>
    %c2_56 = arith.constant 2 : index
    %c0_57 = arith.constant 0 : index
    %c0_58 = arith.constant 0 : index
    %79 = vector.load %arg4[%c2_56, %c0_57, %c0_58] : memref<4x64x1xf32, #tpu.memory_space<vmem>>, vector<1x64x1xf32>
    %80 = vector.shape_cast %79 : vector<1x64x1xf32> to vector<64x1xf32>
    %81 = vector.extract_strided_slice %2 {offsets = [128, 0], sizes = [64, 32], strides = [1, 1]} : vector<256x32xf32> to vector<64x32xf32>
    %82 = vector.extract_strided_slice %4 {offsets = [128, 0], sizes = [64, 32], strides = [1, 1]} : vector<256x32xf32> to vector<64x32xf32>
    %cst_59 = arith.constant dense<0.000000e+00> : vector<64x32xf32>
    %83 = tpu.matmul %76, %81, %cst_59 {dimension_numbers = #tpu.dot_dimension_numbers<[1], [0], [0], [1], [0, 0, 1, 1], [], []>} : vector<64x64xf32>, vector<64x32xf32>, vector<64x32xf32> -> vector<64x32xf32>
    %84 = arith.addf %83, %81 : vector<64x32xf32>
    %cst_60 = arith.constant dense<0.000000e+00> : vector<64x32xf32>
    %85 = tpu.matmul %76, %82, %cst_60 {dimension_numbers = #tpu.dot_dimension_numbers<[0], [0], [1], [1], [0, 1, 1, 1], [], []>} : vector<64x64xf32>, vector<64x32xf32>, vector<64x32xf32> -> vector<64x32xf32>
    %86 = arith.addf %85, %82 : vector<64x32xf32>
    %87 = vector.broadcast %78 : vector<64x1xf32> to vector<64x32xf32>
    %88 = arith.mulf %87, %84 : vector<64x32xf32>
    %cst_61 = arith.constant 0.000000e+00 : f32
    %89 = vector.broadcast %cst_61 : f32 to vector<64x32xf32>
    %90 = arith.maximumf %88, %89 : vector<64x32xf32>
    %91 = vector.broadcast %80 : vector<64x1xf32> to vector<64x32xf32>
    %92 = arith.mulf %91, %86 : vector<64x32xf32>
    %cst_62 = arith.constant 0.000000e+00 : f32
    %93 = vector.broadcast %cst_62 : f32 to vector<64x32xf32>
    %94 = arith.maximumf %92, %93 : vector<64x32xf32>
    %cst_63 = arith.constant dense<0.000000e+00> : vector<64x32xf32>
    %95 = tpu.matmul %76, %90, %cst_63 {dimension_numbers = #tpu.dot_dimension_numbers<[1], [0], [0], [1], [0, 0, 1, 1], [], []>} : vector<64x64xf32>, vector<64x32xf32>, vector<64x32xf32> -> vector<64x32xf32>
    %96 = arith.addf %95, %90 : vector<64x32xf32>
    %cst_64 = arith.constant dense<0.000000e+00> : vector<64x32xf32>
    %97 = tpu.matmul %76, %94, %cst_64 {dimension_numbers = #tpu.dot_dimension_numbers<[0], [0], [1], [1], [0, 1, 1, 1], [], []>} : vector<64x64xf32>, vector<64x32xf32>, vector<64x32xf32> -> vector<64x32xf32>
    %98 = arith.addf %97, %94 : vector<64x32xf32>
    %cst_65 = arith.constant dense<0.000000e+00> : vector<64x128xf32>
    %99 = tpu.matmul %96, %5, %cst_65 {dimension_numbers = #tpu.dot_dimension_numbers<[1], [0], [0], [1], [0, 0, 1, 1], [], []>} : vector<64x32xf32>, vector<32x128xf32>, vector<64x128xf32> -> vector<64x128xf32>
    %cst_66 = arith.constant dense<0.000000e+00> : vector<64x128xf32>
    %100 = tpu.matmul %98, %6, %cst_66 {dimension_numbers = #tpu.dot_dimension_numbers<[1], [0], [0], [1], [0, 0, 1, 1], [], []>} : vector<64x32xf32>, vector<32x128xf32>, vector<64x128xf32> -> vector<64x128xf32>
    %101 = arith.addf %99, %100 : vector<64x128xf32>
    %cst_67 = arith.constant 5.000000e-01 : f32
    %102 = vector.broadcast %cst_67 : f32 to vector<64x1xf32>
    %103 = arith.mulf %102, %78 : vector<64x1xf32>
    %104 = vector.broadcast %103 : vector<64x1xf32> to vector<64x128xf32>
    %105 = arith.mulf %104, %101 : vector<64x128xf32>
    %c2_68 = arith.constant 2 : index
    %c0_69 = arith.constant 0 : index
    %c0_70 = arith.constant 0 : index
    %106 = vector.load %arg9[%c2_68, %c0_69, %c0_70] : memref<4x64x128xf32, #tpu.memory_space<vmem>>, vector<1x64x128xf32>
    %107 = vector.shape_cast %106 : vector<1x64x128xf32> to vector<64x128xf32>
    %108 = vector.shape_cast %105 : vector<64x128xf32> to vector<1x64x128xf32>
    tpu.vector_store %arg9[%c2_68, %c0_69, %c0_70], %108 {strides = array<i32>} : memref<4x64x128xf32, #tpu.memory_space<vmem>>, vector<1x64x128xf32>,
    %c3 = arith.constant 3 : index
    %c0_71 = arith.constant 0 : index
    %c0_72 = arith.constant 0 : index
    %109 = vector.load %arg2[%c3, %c0_71, %c0_72] : memref<4x64x64xf32, #tpu.memory_space<vmem>>, vector<1x64x64xf32>
    %110 = vector.shape_cast %109 : vector<1x64x64xf32> to vector<64x64xf32>
    %c3_73 = arith.constant 3 : index
    %c0_74 = arith.constant 0 : index
    %c0_75 = arith.constant 0 : index
    %111 = vector.load %arg3[%c3_73, %c0_74, %c0_75] : memref<4x64x1xf32, #tpu.memory_space<vmem>>, vector<1x64x1xf32>
    %112 = vector.shape_cast %111 : vector<1x64x1xf32> to vector<64x1xf32>
    %c3_76 = arith.constant 3 : index
    %c0_77 = arith.constant 0 : index
    %c0_78 = arith.constant 0 : index
    %113 = vector.load %arg4[%c3_76, %c0_77, %c0_78] : memref<4x64x1xf32, #tpu.memory_space<vmem>>, vector<1x64x1xf32>
    %114 = vector.shape_cast %113 : vector<1x64x1xf32> to vector<64x1xf32>
    %115 = vector.extract_strided_slice %2 {offsets = [192, 0], sizes = [64, 32], strides = [1, 1]} : vector<256x32xf32> to vector<64x32xf32>
    %116 = vector.extract_strided_slice %4 {offsets = [192, 0], sizes = [64, 32], strides = [1, 1]} : vector<256x32xf32> to vector<64x32xf32>
    %cst_79 = arith.constant dense<0.000000e+00> : vector<64x32xf32>
    %117 = tpu.matmul %110, %115, %cst_79 {dimension_numbers = #tpu.dot_dimension_numbers<[1], [0], [0], [1], [0, 0, 1, 1], [], []>} : vector<64x64xf32>, vector<64x32xf32>, vector<64x32xf32> -> vector<64x32xf32>
    %118 = arith.addf %117, %115 : vector<64x32xf32>
    %cst_80 = arith.constant dense<0.000000e+00> : vector<64x32xf32>
    %119 = tpu.matmul %110, %116, %cst_80 {dimension_numbers = #tpu.dot_dimension_numbers<[0], [0], [1], [1], [0, 1, 1, 1], [], []>} : vector<64x64xf32>, vector<64x32xf32>, vector<64x32xf32> -> vector<64x32xf32>
    %120 = arith.addf %119, %116 : vector<64x32xf32>
    %121 = vector.broadcast %112 : vector<64x1xf32> to vector<64x32xf32>
    %122 = arith.mulf %121, %118 : vector<64x32xf32>
    %cst_81 = arith.constant 0.000000e+00 : f32
    %123 = vector.broadcast %cst_81 : f32 to vector<64x32xf32>
    %124 = arith.maximumf %122, %123 : vector<64x32xf32>
    %125 = vector.broadcast %114 : vector<64x1xf32> to vector<64x32xf32>
    %126 = arith.mulf %125, %120 : vector<64x32xf32>
    %cst_82 = arith.constant 0.000000e+00 : f32
    %127 = vector.broadcast %cst_82 : f32 to vector<64x32xf32>
    %128 = arith.maximumf %126, %127 : vector<64x32xf32>
    %cst_83 = arith.constant dense<0.000000e+00> : vector<64x32xf32>
    %129 = tpu.matmul %110, %124, %cst_83 {dimension_numbers = #tpu.dot_dimension_numbers<[1], [0], [0], [1], [0, 0, 1, 1], [], []>} : vector<64x64xf32>, vector<64x32xf32>, vector<64x32xf32> -> vector<64x32xf32>
    %130 = arith.addf %129, %124 : vector<64x32xf32>
    %cst_84 = arith.constant dense<0.000000e+00> : vector<64x32xf32>
    %131 = tpu.matmul %110, %128, %cst_84 {dimension_numbers = #tpu.dot_dimension_numbers<[0], [0], [1], [1], [0, 1, 1, 1], [], []>} : vector<64x64xf32>, vector<64x32xf32>, vector<64x32xf32> -> vector<64x32xf32>
    %132 = arith.addf %131, %128 : vector<64x32xf32>
    %cst_85 = arith.constant dense<0.000000e+00> : vector<64x128xf32>
    %133 = tpu.matmul %130, %5, %cst_85 {dimension_numbers = #tpu.dot_dimension_numbers<[1], [0], [0], [1], [0, 0, 1, 1], [], []>} : vector<64x32xf32>, vector<32x128xf32>, vector<64x128xf32> -> vector<64x128xf32>
    %cst_86 = arith.constant dense<0.000000e+00> : vector<64x128xf32>
    %134 = tpu.matmul %132, %6, %cst_86 {dimension_numbers = #tpu.dot_dimension_numbers<[1], [0], [0], [1], [0, 0, 1, 1], [], []>} : vector<64x32xf32>, vector<32x128xf32>, vector<64x128xf32> -> vector<64x128xf32>
    %135 = arith.addf %133, %134 : vector<64x128xf32>
    %cst_87 = arith.constant 5.000000e-01 : f32
    %136 = vector.broadcast %cst_87 : f32 to vector<64x1xf32>
    %137 = arith.mulf %136, %112 : vector<64x1xf32>
    %138 = vector.broadcast %137 : vector<64x1xf32> to vector<64x128xf32>
    %139 = arith.mulf %138, %135 : vector<64x128xf32>
    %c3_88 = arith.constant 3 : index
    %c0_89 = arith.constant 0 : index
    %c0_90 = arith.constant 0 : index
    %140 = vector.load %arg9[%c3_88, %c0_89, %c0_90] : memref<4x64x128xf32, #tpu.memory_space<vmem>>, vector<1x64x128xf32>
    %141 = vector.shape_cast %140 : vector<1x64x128xf32> to vector<64x128xf32>
    %142 = vector.shape_cast %139 : vector<64x128xf32> to vector<1x64x128xf32>
    tpu.vector_store %arg9[%c3_88, %c0_89, %c0_90], %142 {strides = array<i32>} : memref<4x64x128xf32, #tpu.memory_space<vmem>>, vector<1x64x128xf32>,
    return
  }
  func.func @transform_0(%arg0: i32) -> (i32, i32) {
    %c0_i32 = arith.constant 0 : i32
    %c0_i32_0 = arith.constant 0 : i32
    return %arg0, %c0_i32 : i32, i32
  }
  func.func @transform_1(%arg0: i32) -> (i32, i32, i32) {
    %c0_i32 = arith.constant 0 : i32
    %c0_i32_0 = arith.constant 0 : i32
    %c0_i32_1 = arith.constant 0 : i32
    return %arg0, %c0_i32, %c0_i32_0 : i32, i32, i32
  }
  func.func @transform_2(%arg0: i32) -> (i32, i32, i32) {
    %c0_i32 = arith.constant 0 : i32
    %c0_i32_0 = arith.constant 0 : i32
    %c0_i32_1 = arith.constant 0 : i32
    return %arg0, %c0_i32, %c0_i32_0 : i32, i32, i32
  }
  func.func @transform_3(%arg0: i32) -> (i32, i32, i32) {
    %c0_i32 = arith.constant 0 : i32
    %c0_i32_0 = arith.constant 0 : i32
    %c0_i32_1 = arith.constant 0 : i32
    return %arg0, %c0_i32, %c0_i32_0 : i32, i32, i32
  }
  func.func @transform_4(%arg0: i32) -> (i32, i32) {
    %c0_i32 = arith.constant 0 : i32
    %c0_i32_0 = arith.constant 0 : i32
    %c0_i32_1 = arith.constant 0 : i32
    return %c0_i32, %c0_i32_0 : i32, i32
  }
  func.func @transform_5(%arg0: i32) -> (i32, i32) {
    %c0_i32 = arith.constant 0 : i32
    %c0_i32_0 = arith.constant 0 : i32
    %c0_i32_1 = arith.constant 0 : i32
    return %c0_i32, %c0_i32_0 : i32, i32
  }
  func.func @transform_6(%arg0: i32) -> (i32, i32) {
    %c0_i32 = arith.constant 0 : i32
    %c0_i32_0 = arith.constant 0 : i32
    %c0_i32_1 = arith.constant 0 : i32
    return %c0_i32, %c0_i32_0 : i32, i32
  }
  func.func @transform_7(%arg0: i32) -> (i32, i32) {
    %c0_i32 = arith.constant 0 : i32
    %c0_i32_0 = arith.constant 0 : i32
    %c0_i32_1 = arith.constant 0 : i32
    return %c0_i32, %c0_i32_0 : i32, i32
  }
  func.func @transform_8(%arg0: i32) -> (i32, i32, i32) {
    %c0_i32 = arith.constant 0 : i32
    %c0_i32_0 = arith.constant 0 : i32
    %c0_i32_1 = arith.constant 0 : i32
    return %arg0, %c0_i32, %c0_i32_0 : i32, i32, i32
  }
}

</mosaic_0001>

<llo_original>
// kernel: gcn_forward.1
$region0: #{gcn_forward.1}
  #allocation0 [shape = 'u32[]', space=smem, size = 0x4, offset = 0x4, fixed_abs, tag = 'smem constant byte address 0x4 - core index']
  #allocation1 [shape = 'u32[72,128]{1,0:T(1,128)}', space=vmem, size = 0x9000, scoped, tag = 'internal scratch']
  %s0 = inlined_call_operand.vmem [shape: f32[512,256], index: 0, kind: input, shape index: {}]
  %s1 = inlined_call_operand.vmem [shape: f32[8,64,64], index: 1, kind: input, shape index: {}]
  %s2 = inlined_call_operand.vmem [shape: f32[8,64,1], index: 2, kind: input, shape index: {}]
  %s3 = inlined_call_operand.vmem [shape: f32[8,64,1], index: 3, kind: input, shape index: {}]
  %s4 = inlined_call_operand.vmem [shape: f32[256,32], index: 4, kind: input, shape index: {}]
  %s5 = inlined_call_operand.vmem [shape: f32[256,32], index: 5, kind: input, shape index: {}]
  %s6 = inlined_call_operand.vmem [shape: f32[32,128], index: 6, kind: input, shape index: {}]
  %s7 = inlined_call_operand.vmem [shape: f32[32,128], index: 7, kind: input, shape index: {}]
  %s8 = inlined_call_operand.vmem [shape: f32[8,64,128], index: 8, kind: output, shape index: {}]
  %s9 = sld [smem:[#allocation0]]
  $region65: #{gcn_forward.1} parent=0
    _
  %s11 = ssub.s32 1, %s9
  %s12 = scalar_select 0, %s11, %s9
  loop: start=0, step=1, limit=4
  $region2: #{gcn_forward.1} parent=0 // loop_pre_header
    _
  $region3: #{gcn_forward.1} parent=0 // loop_header
    %s14 = sphi 0, %s18
    %p15 = scmp.ge.s32.totalorder %s14, 4
    %s24 = sphi 0, %s26
    %s27 = sphi 0, %s24
    %s28 = sphi 0, %s27
    %s44 = sphi 0, %s28
    %s50 = sphi 0, %s52
    %s53 = sphi 0, %s50
    %s54 = sphi 0, %s53
    %s70 = sphi 0, %s54
    %s76 = sphi 0, %s78
    %s79 = sphi 0, %s76
    %s80 = sphi 0, %s79
    %s96 = sphi 0, %s80
    %s102 = sphi 0, %s104
    %s105 = sphi 0, %s102
    %s106 = sphi 0, %s105
    %s122 = sphi 0, %s106
    %s126 = sphi 0, %s126
    %s128 = sphi 0, %s126
    %s129 = sphi 0, %s128
    %s143 = sphi 0, %s129
    %s147 = sphi 0, %s147
    %s149 = sphi 0, %s147
    %s150 = sphi 0, %s149
    %s164 = sphi 0, %s150
    %s168 = sphi 0, %s168
    %s170 = sphi 0, %s168
    %s171 = sphi 0, %s170
    %s185 = sphi 0, %s171
    %s189 = sphi 0, %s189
    %s191 = sphi 0, %s189
    %s192 = sphi 0, %s191
    %s206 = sphi 0, %s192
    %s212 = sphi 0, %s214
    %s215 = sphi 0, %s212
    %s216 = sphi 0, %s215
    %s232 = sphi 0, %s216
  $region4: #{gcn_forward.1} parent=0 // loop_header_branch
    %17 = sbr.rel (%p15) target = $region8
  $region5: #{gcn_forward.1} parent=0 // loop_body
    %s19 = ssub.s32 %s14, 1
    %s20 = ssub.s32 %s14, 2
    %s21 = sadd.s32 %s14, 1
    %s22 = ssub.s32 %s14, %s21
    %p23 = scmp.eq.s32.totalorder %s22, 0
    %s25 = sadd.s32 %s24, 1
    %s26 = scalar_select %p23, %s24, %s25
    %p29 = pneg %p23
    %p30 = scmp.eq.s32.totalorder %s14, 1
    %p31 = por %p29, %p30
    %p32 = scmp.ne.s32.totalorder %s24, %s27
    %p33 = scmp.eq.s32.totalorder %s14, 0
    %p34 = por %p32, %p33
    %p35 = scmp.ne.s32.totalorder %s24, %s27
    %p36 = scmp.eq.s32.totalorder %s19, 1
    %p37 = por %p35, %p36
    %p38 = scmp.ne.s32.totalorder %s27, %s28
    %p39 = scmp.eq.s32.totalorder %s19, 0
    %p40 = por %p38, %p39
    %p41 = scmp.ne.s32.totalorder %s27, %s28
    %p42 = scmp.eq.s32.totalorder %s20, 1
    %p43 = por %p41, %p42
    %p45 = scmp.ne.s32.totalorder %s28, %s44
    %p46 = scmp.eq.s32.totalorder %s20, 0
    %p47 = por %p45, %p46
    %s48 = ssub.s32 %s14, %s21
    %p49 = scmp.eq.s32.totalorder %s48, 0
    %s51 = sadd.s32 %s50, 1
    %s52 = scalar_select %p49, %s50, %s51
    %p55 = pneg %p49
    %p56 = scmp.eq.s32.totalorder %s14, 1
    %p57 = por %p55, %p56
    %p58 = scmp.ne.s32.totalorder %s50, %s53
    %p59 = scmp.eq.s32.totalorder %s14, 0
    %p60 = por %p58, %p59
    %p61 = scmp.ne.s32.totalorder %s50, %s53
    %p62 = scmp.eq.s32.totalorder %s19, 1
    %p63 = por %p61, %p62
    %p64 = scmp.ne.s32.totalorder %s53, %s54
    %p65 = scmp.eq.s32.totalorder %s19, 0
    %p66 = por %p64, %p65
    %p67 = scmp.ne.s32.totalorder %s53, %s54
    %p68 = scmp.eq.s32.totalorder %s20, 1
    %p69 = por %p67, %p68
    %p71 = scmp.ne.s32.totalorder %s54, %s70
    %p72 = scmp.eq.s32.totalorder %s20, 0
    %p73 = por %p71, %p72
    %s74 = ssub.s32 %s14, %s21
    %p75 = scmp.eq.s32.totalorder %s74, 0
    %s77 = sadd.s32 %s76, 1
    %s78 = scalar_select %p75, %s76, %s77
    %p81 = pneg %p75
    %p82 = scmp.eq.s32.totalorder %s14, 1
    %p83 = por %p81, %p82
    %p84 = scmp.ne.s32.totalorder %s76, %s79
    %p85 = scmp.eq.s32.totalorder %s14, 0
    %p86 = por %p84, %p85
    %p87 = scmp.ne.s32.totalorder %s76, %s79
    %p88 = scmp.eq.s32.totalorder %s19, 1
    %p89 = por %p87, %p88
    %p90 = scmp.ne.s32.totalorder %s79, %s80
    %p91 = scmp.eq.s32.totalorder %s19, 0
    %p92 = por %p90, %p91
    %p93 = scmp.ne.s32.totalorder %s79, %s80
    %p94 = scmp.eq.s32.totalorder %s20, 1
    %p95 = por %p93, %p94
    %p97 = scmp.ne.s32.totalorder %s80, %s96
    %p98 = scmp.eq.s32.totalorder %s20, 0
    %p99 = por %p97, %p98
    %s100 = ssub.s32 %s14, %s21
    %p101 = scmp.eq.s32.totalorder %s100, 0
    %s103 = sadd.s32 %s102, 1
    %s104 = scalar_select %p101, %s102, %s103
    %p107 = pneg %p101
    %p108 = scmp.eq.s32.totalorder %s14, 1
    %p109 = por %p107, %p108
    %p110 = scmp.ne.s32.totalorder %s102, %s105
    %p111 = scmp.eq.s32.totalorder %s14, 0
    %p112 = por %p110, %p111
    %p113 = scmp.ne.s32.totalorder %s102, %s105
    %p114 = scmp.eq.s32.totalorder %s19, 1
    %p115 = por %p113, %p114
    %p116 = scmp.ne.s32.totalorder %s105, %s106
    %p117 = scmp.eq.s32.totalorder %s19, 0
    %p118 = por %p116, %p117
    %p119 = scmp.ne.s32.totalorder %s105, %s106
    %p120 = scmp.eq.s32.totalorder %s20, 1
    %p121 = por %p119, %p120
    %p123 = scmp.ne.s32.totalorder %s106, %s122
    %p124 = scmp.eq.s32.totalorder %s20, 0
    %p125 = por %p123, %p124
    %s127 = sadd.s32 %s126, 1
    %p130 = scmp.eq.s32.totalorder %s14, 1
    %p131 = scmp.ne.s32.totalorder %s126, %s128
    %p132 = scmp.eq.s32.totalorder %s14, 0
    %p133 = por %p131, %p132
    %p134 = scmp.ne.s32.totalorder %s126, %s128
    %p135 = scmp.eq.s32.totalorder %s19, 1
    %p136 = por %p134, %p135
    %p137 = scmp.ne.s32.totalorder %s128, %s129
    %p138 = scmp.eq.s32.totalorder %s19, 0
    %p139 = por %p137, %p138
    %p140 = scmp.ne.s32.totalorder %s128, %s129
    %p141 = scmp.eq.s32.totalorder %s20, 1
    %p142 = por %p140, %p141
    %p144 = scmp.ne.s32.totalorder %s129, %s143
    %p145 = scmp.eq.s32.totalorder %s20, 0
    %p146 = por %p144, %p145
    %s148 = sadd.s32 %s147, 1
    %p151 = scmp.eq.s32.totalorder %s14, 1
    %p152 = scmp.ne.s32.totalorder %s147, %s149
    %p153 = scmp.eq.s32.totalorder %s14, 0
    %p154 = por %p152, %p153
    %p155 = scmp.ne.s32.totalorder %s147, %s149
    %p156 = scmp.eq.s32.totalorder %s19, 1
    %p157 = por %p155, %p156
    %p158 = scmp.ne.s32.totalorder %s149, %s150
    %p159 = scmp.eq.s32.totalorder %s19, 0
    %p160 = por %p158, %p159
    %p161 = scmp.ne.s32.totalorder %s149, %s150
    %p162 = scmp.eq.s32.totalorder %s20, 1
    %p163 = por %p161, %p162
    %p165 = scmp.ne.s32.totalorder %s150, %s164
    %p166 = scmp.eq.s32.totalorder %s20, 0
    %p167 = por %p165, %p166
    %s169 = sadd.s32 %s168, 1
    %p172 = scmp.eq.s32.totalorder %s14, 1
    %p173 = scmp.ne.s32.totalorder %s168, %s170
    %p174 = scmp.eq.s32.totalorder %s14, 0
    %p175 = por %p173, %p174
    %p176 = scmp.ne.s32.totalorder %s168, %s170
    %p177 = scmp.eq.s32.totalorder %s19, 1
    %p178 = por %p176, %p177
    %p179 = scmp.ne.s32.totalorder %s170, %s171
    %p180 = scmp.eq.s32.totalorder %s19, 0
    %p181 = por %p179, %p180
    %p182 = scmp.ne.s32.totalorder %s170, %s171
    %p183 = scmp.eq.s32.totalorder %s20, 1
    %p184 = por %p182, %p183
    %p186 = scmp.ne.s32.totalorder %s171, %s185
    %p187 = scmp.eq.s32.totalorder %s20, 0
    %p188 = por %p186, %p187
    %s190 = sadd.s32 %s189, 1
    %p193 = scmp.eq.s32.totalorder %s14, 1
    %p194 = scmp.ne.s32.totalorder %s189, %s191
    %p195 = scmp.eq.s32.totalorder %s14, 0
    %p196 = por %p194, %p195
    %p197 = scmp.ne.s32.totalorder %s189, %s191
    %p198 = scmp.eq.s32.totalorder %s19, 1
    %p199 = por %p197, %p198
    %p200 = scmp.ne.s32.totalorder %s191, %s192
    %p201 = scmp.eq.s32.totalorder %s19, 0
    %p202 = por %p200, %p201
    %p203 = scmp.ne.s32.totalorder %s191, %s192
    %p204 = scmp.eq.s32.totalorder %s20, 1
    %p205 = por %p203, %p204
    %p207 = scmp.ne.s32.totalorder %s192, %s206
    %p208 = scmp.eq.s32.totalorder %s20, 0
    %p209 = por %p207, %p208
    %s210 = ssub.s32 %s14, %s21
    %p211 = scmp.eq.s32.totalorder %s210, 0
    %s213 = sadd.s32 %s212, 1
    %s214 = scalar_select %p211, %s212, %s213
    %p217 = pneg %p211
    %p218 = scmp.eq.s32.totalorder %s14, 1
    %p219 = por %p217, %p218
    %p220 = scmp.ne.s32.totalorder %s212, %s215
    %p221 = scmp.eq.s32.totalorder %s14, 0
    %p222 = por %p220, %p221
    %p223 = scmp.ne.s32.totalorder %s212, %s215
    %p224 = scmp.eq.s32.totalorder %s19, 1
    %p225 = por %p223, %p224
    %p226 = scmp.ne.s32.totalorder %s215, %s216
    %p227 = scmp.eq.s32.totalorder %s19, 0
    %p228 = por %p226, %p227
    %p229 = scmp.ne.s32.totalorder %s215, %s216
    %p230 = scmp.eq.s32.totalorder %s20, 1
    %p231 = por %p229, %p230
    %p233 = scmp.ne.s32.totalorder %s216, %s232
    %p234 = scmp.eq.s32.totalorder %s20, 0
    %p235 = por %p233, %p234
    %p236 = scmp.le.s32.totalorder 1, %s14
    %p237 = scmp.lt.s32.totalorder %s14, 3
    %p238 = pnand %p236, %p237
    %p239 = pneg %p238
    // Predicated region
    $region9: #{gcn_forward.1} parent=5 // pred_check
      _
    $region10: #{gcn_forward.1} parent=5 // pred_check_branch
      %241 = sbr.rel (%p238) target = $region12
    $region11: #{gcn_forward.1} parent=5 // pred_region
      %s242 = ssub.s32 %s14, 1
      // Predicated region
      $region13: #{gcn_forward.1} parent=11 // pred_check
        %p243 = pneg %p139
      $region14: #{gcn_forward.1} parent=11 // pred_check_branch
        %245 = sbr.rel (%p243) target = $region16
      $region15: #{gcn_forward.1} parent=11 // pred_region
        _
      $region16: #{gcn_forward.1} parent=11 // pred_fallthru
        _
      // Predicated region
      $region17: #{gcn_forward.1} parent=11 // pred_check
        %p246 = pneg %p160
      $region18: #{gcn_forward.1} parent=11 // pred_check_branch
        %248 = sbr.rel (%p246) target = $region20
      $region19: #{gcn_forward.1} parent=11 // pred_region
        _
      $region20: #{gcn_forward.1} parent=11 // pred_fallthru
        _
      // Predicated region
      $region21: #{gcn_forward.1} parent=11 // pred_check
        %p249 = pneg %p181
      $region22: #{gcn_forward.1} parent=11 // pred_check_branch
        %251 = sbr.rel (%p249) target = $region24
      $region23: #{gcn_forward.1} parent=11 // pred_region
        _
      $region24: #{gcn_forward.1} parent=11 // pred_fallthru
        _
      // Predicated region
      $region25: #{gcn_forward.1} parent=11 // pred_check
        %p252 = pneg %p202
      $region26: #{gcn_forward.1} parent=11 // pred_check_branch
        %254 = sbr.rel (%p252) target = $region28
      $region27: #{gcn_forward.1} parent=11 // pred_region
        _
      $region28: #{gcn_forward.1} parent=11 // pred_fallthru
        _
    $region12: #{gcn_forward.1} parent=5 // pred_fallthru
      _
    %p255 = scmp.lt.s32.totalorder %s14, 2
    // Predicated region
    $region29: #{gcn_forward.1} parent=5 // pred_check
      %p256 = pneg %p255
    $region30: #{gcn_forward.1} parent=5 // pred_check_branch
      %258 = sbr.rel (%p256) target = $region32
    $region31: #{gcn_forward.1} parent=5 // pred_region
      // Predicated region
      $region33: #{gcn_forward.1} parent=31 // pred_check
        %p259 = pneg %p34
      $region34: #{gcn_forward.1} parent=31 // pred_check_branch
        %261 = sbr.rel (%p259) target = $region36
      $region35: #{gcn_forward.1} parent=31 // pred_region
        %s262 = smul.u32 32, %s14
        %p263 = scmp.lt.s32.totalorder %s262, 63
        %s264 = scalar_select %p263, %s262, 63
        %s265 = smul.addr %s264, 2
        %s266 = smul.addr %s265, 8
        %s267 = scalar_lea.vmem %s0, %s266
        %s268 = smul.u32 32, %s14
      $region36: #{gcn_forward.1} parent=31 // pred_fallthru
        _
      // Predicated region
      $region37: #{gcn_forward.1} parent=31 // pred_check
        %p269 = pneg %p60
      $region38: #{gcn_forward.1} parent=31 // pred_check_branch
        %271 = sbr.rel (%p269) target = $region40
      $region39: #{gcn_forward.1} parent=31 // pred_region
        %s272 = smul.u32 4, %s14
        %p273 = scmp.lt.s32.totalorder %s272, 7
        %s274 = scalar_select %p273, %s272, 7
        %s275 = smul.addr %s274, 8
        %s276 = smul.addr %s275, 8
        %s277 = scalar_lea.vmem %s1, %s276
        %s278 = smul.u32 4, %s14
      $region40: #{gcn_forward.1} parent=31 // pred_fallthru
        _
      // Predicated region
      $region41: #{gcn_forward.1} parent=31 // pred_check
        %p279 = pneg %p86
      $region42: #{gcn_forward.1} parent=31 // pred_check_branch
        %281 = sbr.rel (%p279) target = $region44
      $region43: #{gcn_forward.1} parent=31 // pred_region
        %s282 = smul.u32 4, %s14
        %p283 = scmp.lt.s32.totalorder %s282, 7
        %s284 = scalar_select %p283, %s282, 7
        %s285 = smul.addr %s284, 8
        %s286 = smul.addr %s285, 8
        %s287 = scalar_lea.vmem %s2, %s286
        %s288 = smul.u32 4, %s14
      $region44: #{gcn_forward.1} parent=31 // pred_fallthru
        _
      // Predicated region
      $region45: #{gcn_forward.1} parent=31 // pred_check
        %p289 = pneg %p112
      $region46: #{gcn_forward.1} parent=31 // pred_check_branch
        %291 = sbr.rel (%p289) target = $region48
      $region47: #{gcn_forward.1} parent=31 // pred_region
        %s292 = smul.u32 4, %s14
        %p293 = scmp.lt.s32.totalorder %s292, 7
        %s294 = scalar_select %p293, %s292, 7
        %s295 = smul.addr %s294, 8
        %s296 = smul.addr %s295, 8
        %s297 = scalar_lea.vmem %s3, %s296
        %s298 = smul.u32 4, %s14
      $region48: #{gcn_forward.1} parent=31 // pred_fallthru
        _
    $region32: #{gcn_forward.1} parent=5 // pred_fallthru
      _
    %p299 = scmp.le.s32.totalorder 1, %s14
    %p300 = scmp.lt.s32.totalorder %s14, 3
    %p301 = pnand %p299, %p300
    %p302 = pneg %p301
    // Predicated region
    $region49: #{gcn_forward.1} parent=5 // pred_check
      _
    $region50: #{gcn_forward.1} parent=5 // pred_check_branch
      %304 = sbr.rel (%p301) target = $region52
    $region51: #{gcn_forward.1} parent=5 // pred_region
      %s305 = ssub.s32 %s14, 1
      %s306 = smul.u32 32, %s19
      %p307 = scmp.lt.s32.totalorder %s306, 63
      %s308 = scalar_select %p307, %s306, 63
      %s309 = smul.addr %s308, 2
      %s310 = smul.addr %s309, 8
      %s311 = scalar_lea.vmem %s0, %s310
      %p312 = pneg %p40
      %p313 = pneg %p37
      %s314 = smul.u32 4, %s19
      %p315 = scmp.lt.s32.totalorder %s314, 7
      %s316 = scalar_select %p315, %s314, 7
      %s317 = smul.addr %s316, 8
      %s318 = smul.addr %s317, 8
      %s319 = scalar_lea.vmem %s1, %s318
      %p320 = pneg %p66
      %p321 = pneg %p63
      %s322 = smul.u32 4, %s19
      %p323 = scmp.lt.s32.totalorder %s322, 7
      %s324 = scalar_select %p323, %s322, 7
      %s325 = smul.addr %s324, 8
      %s326 = smul.addr %s325, 8
      %s327 = scalar_lea.vmem %s2, %s326
      %p328 = pneg %p92
      %p329 = pneg %p89
      %s330 = smul.u32 4, %s19
      %p331 = scmp.lt.s32.totalorder %s330, 7
      %s332 = scalar_select %p331, %s330, 7
      %s333 = smul.addr %s332, 8
      %s334 = smul.addr %s333, 8
      %s335 = scalar_lea.vmem %s3, %s334
      %p336 = pneg %p118
      %p337 = pneg %p115
      %p338 = pneg %p139
      %p339 = pneg %p136
      %p340 = pneg %p160
      %p341 = pneg %p157
      %p342 = pneg %p181
      %p343 = pneg %p178
      %p344 = pneg %p202
      %p345 = pneg %p199
      %p346 = pneg %p228
      %p347 = pneg %p225
      %s348 = smul.u32 4, %s19
      %p349 = scmp.lt.s32.totalorder %s348, 7
      %s350 = scalar_select %p349, %s348, 7
      %s351 = smul.addr %s350, 8
      %s352 = smul.addr %s351, 8
      %s353 = scalar_lea.vmem %s8, %s352
      %s354 = smul.u32 32, %s19
      %p355 = scmp.lt.s32.totalorder %s354, 63
      %s356 = scalar_select %p355, %s354, 63
      %s357 = smul.addr %s356, 2
      %s358 = smul.addr %s357, 8
      %s359 = scalar_lea.vmem %s0, %s358
      %s360 = smul.u32 32, %s19
      %s361 = smul.u32 4, %s19
      %p362 = scmp.lt.s32.totalorder %s361, 7
      %s363 = scalar_select %p362, %s361, 7
      %s364 = smul.addr %s363, 8
      %s365 = smul.addr %s364, 8
      %s366 = scalar_lea.vmem %s1, %s365
      %s367 = smul.u32 4, %s19
      %s368 = smul.u32 4, %s19
      %p369 = scmp.lt.s32.totalorder %s368, 7
      %s370 = scalar_select %p369, %s368, 7
      %s371 = smul.addr %s370, 8
      %s372 = smul.addr %s371, 8
      %s373 = scalar_lea.vmem %s2, %s372
      %s374 = smul.u32 4, %s19
      %s375 = smul.u32 4, %s19
      %p376 = scmp.lt.s32.totalorder %s375, 7
      %s377 = scalar_select %p376, %s375, 7
      %s378 = smul.addr %s377, 8
      %s379 = smul.addr %s378, 8
      %s380 = scalar_lea.vmem %s3, %s379
      %s381 = smul.u32 4, %s19
      %s382 = smul.u32 4, %s19
      %p383 = scmp.lt.s32.totalorder %s382, 7
      %s384 = scalar_select %p383, %s382, 7
      %s385 = smul.addr %s384, 8
      %s386 = smul.addr %s385, 8
      %s387 = scalar_lea.vmem %s8, %s386
      %s388 = smul.u32 4, %s19
      %v389 = vld [vmem:[%s359] sm:$0xff]
      %v390 = vld [vmem:[%s359 + $0x8] sm:$0xff]
      %v391 = vld [vmem:[%s359 + $0x10] sm:$0xff]
      %v392 = vld [vmem:[%s359 + $0x18] sm:$0xff]
      %v393 = vld [vmem:[%s359 + $0x20] sm:$0xff]
      %v394 = vld [vmem:[%s359 + $0x28] sm:$0xff]
      %v395 = vld [vmem:[%s359 + $0x30] sm:$0xff]
      %v396 = vld [vmem:[%s359 + $0x38] sm:$0xff]
      %v397 = vld [vmem:[%s359 + $0x40] sm:$0xff]
      %v398 = vld [vmem:[%s359 + $0x48] sm:$0xff]
      %v399 = vld [vmem:[%s359 + $0x50] sm:$0xff]
      %v400 = vld [vmem:[%s359 + $0x58] sm:$0xff]
      %v401 = vld [vmem:[%s359 + $0x60] sm:$0xff]
      %v402 = vld [vmem:[%s359 + $0x68] sm:$0xff]
      %v403 = vld [vmem:[%s359 + $0x70] sm:$0xff]
      %v404 = vld [vmem:[%s359 + $0x78] sm:$0xff]
      %v405 = vld [vmem:[%s359 + $0x80] sm:$0xff]
      %v406 = vld [vmem:[%s359 + $0x88] sm:$0xff]
      %v407 = vld [vmem:[%s359 + $0x90] sm:$0xff]
      %v408 = vld [vmem:[%s359 + $0x98] sm:$0xff]
      %v409 = vld [vmem:[%s359 + $0xa0] sm:$0xff]
      %v410 = vld [vmem:[%s359 + $0xa8] sm:$0xff]
      %v411 = vld [vmem:[%s359 + $0xb0] sm:$0xff]
      %v412 = vld [vmem:[%s359 + $0xb8] sm:$0xff]
      %v413 = vld [vmem:[%s359 + $0xc0] sm:$0xff]
      %v414 = vld [vmem:[%s359 + $0xc8] sm:$0xff]
      %v415 = vld [vmem:[%s359 + $0xd0] sm:$0xff]
      %v416 = vld [vmem:[%s359 + $0xd8] sm:$0xff]
      %v417 = vld [vmem:[%s359 + $0xe0] sm:$0xff]
      %v418 = vld [vmem:[%s359 + $0xe8] sm:$0xff]
      %v419 = vld [vmem:[%s359 + $0xf0] sm:$0xff]
      %v420 = vld [vmem:[%s359 + $0xf8] sm:$0xff]
      %v421 = vld [vmem:[%s359 + $0x100] sm:$0xff]
      %v422 = vld [vmem:[%s359 + $0x108] sm:$0xff]
      %v423 = vld [vmem:[%s359 + $0x110] sm:$0xff]
      %v424 = vld [vmem:[%s359 + $0x118] sm:$0xff]
      %v425 = vld [vmem:[%s359 + $0x120] sm:$0xff]
      %v426 = vld [vmem:[%s359 + $0x128] sm:$0xff]
      %v427 = vld [vmem:[%s359 + $0x130] sm:$0xff]
      %v428 = vld [vmem:[%s359 + $0x138] sm:$0xff]
      %v429 = vld [vmem:[%s359 + $0x140] sm:$0xff]
      %v430 = vld [vmem:[%s359 + $0x148] sm:$0xff]
      %v431 = vld [vmem:[%s359 + $0x150] sm:$0xff]
      %v432 = vld [vmem:[%s359 + $0x158] sm:$0xff]
      %v433 = vld [vmem:[%s359 + $0x160] sm:$0xff]
      %v434 = vld [vmem:[%s359 + $0x168] sm:$0xff]
      %v435 = vld [vmem:[%s359 + $0x170] sm:$0xff]
      %v436 = vld [vmem:[%s359 + $0x178] sm:$0xff]
      %v437 = vld [vmem:[%s359 + $0x180] sm:$0xff]
      %v438 = vld [vmem:[%s359 + $0x188] sm:$0xff]
      %v439 = vld [vmem:[%s359 + $0x190] sm:$0xff]
      %v440 = vld [vmem:[%s359 + $0x198] sm:$0xff]
      %v441 = vld [vmem:[%s359 + $0x1a0] sm:$0xff]
      %v442 = vld [vmem:[%s359 + $0x1a8] sm:$0xff]
      %v443 = vld [vmem:[%s359 + $0x1b0] sm:$0xff]
      %v444 = vld [vmem:[%s359 + $0x1b8] sm:$0xff]
      %v445 = vld [vmem:[%s359 + $0x1c0] sm:$0xff]
      %v446 = vld [vmem:[%s359 + $0x1c8] sm:$0xff]
      %v447 = vld [vmem:[%s359 + $0x1d0] sm:$0xff]
      %v448 = vld [vmem:[%s359 + $0x1d8] sm:$0xff]
      %v449 = vld [vmem:[%s359 + $0x1e0] sm:$0xff]
      %v450 = vld [vmem:[%s359 + $0x1e8] sm:$0xff]
      %v451 = vld [vmem:[%s359 + $0x1f0] sm:$0xff]
      %v452 = vld [vmem:[%s359 + $0x1f8] sm:$0xff]
      %v453 = vld [vmem:[%s4] sm:$0xff]
      %v454 = vld [vmem:[%s4 + $0x8] sm:$0xff]
      %v455 = vld [vmem:[%s4 + $0x10] sm:$0xff]
      %v456 = vld [vmem:[%s4 + $0x18] sm:$0xff]
      %v457 = vld [vmem:[%s4 + $0x20] sm:$0xff]
      %v458 = vld [vmem:[%s4 + $0x28] sm:$0xff]
      %v459 = vld [vmem:[%s4 + $0x30] sm:$0xff]
      %v460 = vld [vmem:[%s4 + $0x38] sm:$0xff]
      %v461 = vld [vmem:[%s4 + $0x40] sm:$0xff]
      %v462 = vld [vmem:[%s4 + $0x48] sm:$0xff]
      %v463 = vld [vmem:[%s4 + $0x50] sm:$0xff]
      %v464 = vld [vmem:[%s4 + $0x58] sm:$0xff]
      %v465 = vld [vmem:[%s4 + $0x60] sm:$0xff]
      %v466 = vld [vmem:[%s4 + $0x68] sm:$0xff]
      %v467 = vld [vmem:[%s4 + $0x70] sm:$0xff]
      %v468 = vld [vmem:[%s4 + $0x78] sm:$0xff]
      %v469 = vld [vmem:[%s4 + $0x80] sm:$0xff]
      %v470 = vld [vmem:[%s4 + $0x88] sm:$0xff]
      %v471 = vld [vmem:[%s4 + $0x90] sm:$0xff]
      %v472 = vld [vmem:[%s4 + $0x98] sm:$0xff]
      %v473 = vld [vmem:[%s4 + $0xa0] sm:$0xff]
      %v474 = vld [vmem:[%s4 + $0xa8] sm:$0xff]
      %v475 = vld [vmem:[%s4 + $0xb0] sm:$0xff]
      %v476 = vld [vmem:[%s4 + $0xb8] sm:$0xff]
      %v477 = vld [vmem:[%s4 + $0xc0] sm:$0xff]
      %v478 = vld [vmem:[%s4 + $0xc8] sm:$0xff]
      %v479 = vld [vmem:[%s4 + $0xd0] sm:$0xff]
      %v480 = vld [vmem:[%s4 + $0xd8] sm:$0xff]
      %v481 = vld [vmem:[%s4 + $0xe0] sm:$0xff]
      %v482 = vld [vmem:[%s4 + $0xe8] sm:$0xff]
      %v483 = vld [vmem:[%s4 + $0xf0] sm:$0xff]
      %v484 = vld [vmem:[%s4 + $0xf8] sm:$0xff]
      %485 = vmatpush.msra.mxu0 %v468
      %486 = vmatpush.msra.mxu0 %v467
      %487 = vmatpush.msra.mxu0 %v466
      %488 = vmatpush.msra.mxu0 %v465
      %489 = vmatpush.msra.mxu0 %v464
      %490 = vmatpush.msra.mxu0 %v463
      %491 = vmatpush.msra.mxu0 %v462
      %492 = vmatpush.msra.mxu0 %v461
      %493 = vmatpush.msra.mxu0 %v460
      %494 = vmatpush.msra.mxu0 %v459
      %495 = vmatpush.msra.mxu0 %v458
      %496 = vmatpush.msra.mxu0 %v457
      %497 = vmatpush.msra.mxu0 %v456
      %498 = vmatpush.msra.mxu0 %v455
      %499 = vmatpush.msra.mxu0 %v454
      %500 = vmatpush.msra.mxu0 %v453
      %501 = vmatmul.f32.gmra.mxu0 %v389
      %v502 = vpop.f32.mrf.mxu0
      %v503 = vadd.f32 0.0, %v502
      %504 = vmatmul.f32.gmra.mxu0 %v391
      %v505 = vpop.f32.mrf.mxu0
      %v506 = vadd.f32 0.0, %v505
      %507 = vmatmul.f32.gmra.mxu0 %v393
      %v508 = vpop.f32.mrf.mxu0
      %v509 = vadd.f32 0.0, %v508
      %510 = vmatmul.f32.gmra.mxu0 %v395
      %v511 = vpop.f32.mrf.mxu0
      %v512 = vadd.f32 0.0, %v511
      %513 = vmatmul.f32.gmra.mxu0 %v397
      %v514 = vpop.f32.mrf.mxu0
      %v515 = vadd.f32 0.0, %v514
      %516 = vmatmul.f32.gmra.mxu0 %v399
      %v517 = vpop.f32.mrf.mxu0
      %v518 = vadd.f32 0.0, %v517
      %519 = vmatmul.f32.gmra.mxu0 %v401
      %v520 = vpop.f32.mrf.mxu0
      %v521 = vadd.f32 0.0, %v520
      %522 = vmatmul.f32.gmra.mxu0 %v403
      %v523 = vpop.f32.mrf.mxu0
      %v524 = vadd.f32 0.0, %v523
      %525 = vmatmul.f32.gmra.mxu0 %v405
      %v526 = vpop.f32.mrf.mxu0
      %v527 = vadd.f32 0.0, %v526
      %528 = vmatmul.f32.gmra.mxu0 %v407
      %v529 = vpop.f32.mrf.mxu0
      %v530 = vadd.f32 0.0, %v529
      %531 = vmatmul.f32.gmra.mxu0 %v409
      %v532 = vpop.f32.mrf.mxu0
      %v533 = vadd.f32 0.0, %v532
      %534 = vmatmul.f32.gmra.mxu0 %v411
      %v535 = vpop.f32.mrf.mxu0
      %v536 = vadd.f32 0.0, %v535
      %537 = vmatmul.f32.gmra.mxu0 %v413
      %v538 = vpop.f32.mrf.mxu0
      %v539 = vadd.f32 0.0, %v538
      %540 = vmatmul.f32.gmra.mxu0 %v415
      %v541 = vpop.f32.mrf.mxu0
      %v542 = vadd.f32 0.0, %v541
      %543 = vmatmul.f32.gmra.mxu0 %v417
      %v544 = vpop.f32.mrf.mxu0
      %v545 = vadd.f32 0.0, %v544
      %546 = vmatmul.f32.gmra.mxu0 %v419
      %v547 = vpop.f32.mrf.mxu0
      %v548 = vadd.f32 0.0, %v547
      %549 = vmatmul.f32.gmra.mxu0 %v421
      %v550 = vpop.f32.mrf.mxu0
      %v551 = vadd.f32 0.0, %v550
      %552 = vmatmul.f32.gmra.mxu0 %v423
      %v553 = vpop.f32.mrf.mxu0
      %v554 = vadd.f32 0.0, %v553
      %555 = vmatmul.f32.gmra.mxu0 %v425
      %v556 = vpop.f32.mrf.mxu0
      %v557 = vadd.f32 0.0, %v556
      %558 = vmatmul.f32.gmra.mxu0 %v427
      %v559 = vpop.f32.mrf.mxu0
      %v560 = vadd.f32 0.0, %v559
      %561 = vmatmul.f32.gmra.mxu0 %v429
      %v562 = vpop.f32.mrf.mxu0
      %v563 = vadd.f32 0.0, %v562
      %564 = vmatmul.f32.gmra.mxu0 %v431
      %v565 = vpop.f32.mrf.mxu0
      %v566 = vadd.f32 0.0, %v565
      %567 = vmatmul.f32.gmra.mxu0 %v433
      %v568 = vpop.f32.mrf.mxu0
      %v569 = vadd.f32 0.0, %v568
      %570 = vmatmul.f32.gmra.mxu0 %v435
      %v571 = vpop.f32.mrf.mxu0
      %v572 = vadd.f32 0.0, %v571
      %573 = vmatmul.f32.gmra.mxu0 %v437
      %v574 = vpop.f32.mrf.mxu0
      %v575 = vadd.f32 0.0, %v574
      %576 = vmatmul.f32.gmra.mxu0 %v439
      %v577 = vpop.f32.mrf.mxu0
      %v578 = vadd.f32 0.0, %v577
      %579 = vmatmul.f32.gmra.mxu0 %v441
      %v580 = vpop.f32.mrf.mxu0
      %v581 = vadd.f32 0.0, %v580
      %582 = vmatmul.f32.gmra.mxu0 %v443
      %v583 = vpop.f32.mrf.mxu0
      %v584 = vadd.f32 0.0, %v583
      %585 = vmatmul.f32.gmra.mxu0 %v445
      %v586 = vpop.f32.mrf.mxu0
      %v587 = vadd.f32 0.0, %v586
      %588 = vmatmul.f32.gmra.mxu0 %v447
      %v589 = vpop.f32.mrf.mxu0
      %v590 = vadd.f32 0.0, %v589
      %591 = vmatmul.f32.gmra.mxu0 %v449
      %v592 = vpop.f32.mrf.mxu0
      %v593 = vadd.f32 0.0, %v592
      %594 = vmatmul.f32.gmra.mxu0 %v451
      %v595 = vpop.f32.mrf.mxu0
      %v596 = vadd.f32 0.0, %v595
      %597 = vdwg.mxu0
      %598 = vmatpush.msra.mxu0 %v484
      %599 = vmatpush.msra.mxu0 %v483
      %600 = vmatpush.msra.mxu0 %v482
      %601 = vmatpush.msra.mxu0 %v481
      %602 = vmatpush.msra.mxu0 %v480
      %603 = vmatpush.msra.mxu0 %v479
      %604 = vmatpush.msra.mxu0 %v478
      %605 = vmatpush.msra.mxu0 %v477
      %606 = vmatpush.msra.mxu0 %v476
      %607 = vmatpush.msra.mxu0 %v475
      %608 = vmatpush.msra.mxu0 %v474
      %609 = vmatpush.msra.mxu0 %v473
      %610 = vmatpush.msra.mxu0 %v472
      %611 = vmatpush.msra.mxu0 %v471
      %612 = vmatpush.msra.mxu0 %v470
      %613 = vmatpush.msra.mxu0 %v469
      %614 = vmatmul.f32.gmra.mxu0 %v390
      %v615 = vpop.f32.mrf.mxu0
      %v616 = vadd.f32 %v503, %v615
      %617 = vmatmul.f32.gmra.mxu0 %v392
      %v618 = vpop.f32.mrf.mxu0
      %v619 = vadd.f32 %v506, %v618
      %620 = vmatmul.f32.gmra.mxu0 %v394
      %v621 = vpop.f32.mrf.mxu0
      %v622 = vadd.f32 %v509, %v621
      %623 = vmatmul.f32.gmra.mxu0 %v396
      %v624 = vpop.f32.mrf.mxu0
      %v625 = vadd.f32 %v512, %v624
      %626 = vmatmul.f32.gmra.mxu0 %v398
      %v627 = vpop.f32.mrf.mxu0
      %v628 = vadd.f32 %v515, %v627
      %629 = vmatmul.f32.gmra.mxu0 %v400
      %v630 = vpop.f32.mrf.mxu0
      %v631 = vadd.f32 %v518, %v630
      %632 = vmatmul.f32.gmra.mxu0 %v402
      %v633 = vpop.f32.mrf.mxu0
      %v634 = vadd.f32 %v521, %v633
      %635 = vmatmul.f32.gmra.mxu0 %v404
      %v636 = vpop.f32.mrf.mxu0
      %v637 = vadd.f32 %v524, %v636
      %638 = vmatmul.f32.gmra.mxu0 %v406
      %v639 = vpop.f32.mrf.mxu0
      %v640 = vadd.f32 %v527, %v639
      %641 = vmatmul.f32.gmra.mxu0 %v408
      %v642 = vpop.f32.mrf.mxu0
      %v643 = vadd.f32 %v530, %v642
      %644 = vmatmul.f32.gmra.mxu0 %v410
      %v645 = vpop.f32.mrf.mxu0
      %v646 = vadd.f32 %v533, %v645
      %647 = vmatmul.f32.gmra.mxu0 %v412
      %v648 = vpop.f32.mrf.mxu0
      %v649 = vadd.f32 %v536, %v648
      %650 = vmatmul.f32.gmra.mxu0 %v414
      %v651 = vpop.f32.mrf.mxu0
      %v652 = vadd.f32 %v539, %v651
      %653 = vmatmul.f32.gmra.mxu0 %v416
      %v654 = vpop.f32.mrf.mxu0
      %v655 = vadd.f32 %v542, %v654
      %656 = vmatmul.f32.gmra.mxu0 %v418
      %v657 = vpop.f32.mrf.mxu0
      %v658 = vadd.f32 %v545, %v657
      %659 = vmatmul.f32.gmra.mxu0 %v420
      %v660 = vpop.f32.mrf.mxu0
      %v661 = vadd.f32 %v548, %v660
      %662 = vmatmul.f32.gmra.mxu0 %v422
      %v663 = vpop.f32.mrf.mxu0
      %v664 = vadd.f32 %v551, %v663
      %665 = vmatmul.f32.gmra.mxu0 %v424
      %v666 = vpop.f32.mrf.mxu0
      %v667 = vadd.f32 %v554, %v666
      %668 = vmatmul.f32.gmra.mxu0 %v426
      %v669 = vpop.f32.mrf.mxu0
      %v670 = vadd.f32 %v557, %v669
      %671 = vmatmul.f32.gmra.mxu0 %v428
      %v672 = vpop.f32.mrf.mxu0
      %v673 = vadd.f32 %v560, %v672
      %674 = vmatmul.f32.gmra.mxu0 %v430
      %v675 = vpop.f32.mrf.mxu0
      %v676 = vadd.f32 %v563, %v675
      %677 = vmatmul.f32.gmra.mxu0 %v432
      %v678 = vpop.f32.mrf.mxu0
      %v679 = vadd.f32 %v566, %v678
      %680 = vmatmul.f32.gmra.mxu0 %v434
      %v681 = vpop.f32.mrf.mxu0
      %v682 = vadd.f32 %v569, %v681
      %683 = vmatmul.f32.gmra.mxu0 %v436
      %v684 = vpop.f32.mrf.mxu0
      %v685 = vadd.f32 %v572, %v684
      %686 = vmatmul.f32.gmra.mxu0 %v438
      %v687 = vpop.f32.mrf.mxu0
      %v688 = vadd.f32 %v575, %v687
      %689 = vmatmul.f32.gmra.mxu0 %v440
      %v690 = vpop.f32.mrf.mxu0
      %v691 = vadd.f32 %v578, %v690
      %692 = vmatmul.f32.gmra.mxu0 %v442
      %v693 = vpop.f32.mrf.mxu0
      %v694 = vadd.f32 %v581, %v693
      %695 = vmatmul.f32.gmra.mxu0 %v444
      %v696 = vpop.f32.mrf.mxu0
      %v697 = vadd.f32 %v584, %v696
      %698 = vmatmul.f32.gmra.mxu0 %v446
      %v699 = vpop.f32.mrf.mxu0
      %v700 = vadd.f32 %v587, %v699
      %701 = vmatmul.f32.gmra.mxu0 %v448
      %v702 = vpop.f32.mrf.mxu0
      %v703 = vadd.f32 %v590, %v702
      %704 = vmatmul.f32.gmra.mxu0 %v450
      %v705 = vpop.f32.mrf.mxu0
      %v706 = vadd.f32 %v593, %v705
      %707 = vmatmul.f32.gmra.mxu0 %v452
      %v708 = vpop.f32.mrf.mxu0
      %v709 = vadd.f32 %v596, %v708
      %710 = vdwg.mxu0
      %v711 = vld [vmem:[%s5] sm:$0xff]
      %v712 = vld [vmem:[%s5 + $0x8] sm:$0xff]
      %v713 = vld [vmem:[%s5 + $0x10] sm:$0xff]
      %v714 = vld [vmem:[%s5 + $0x18] sm:$0xff]
      %v715 = vld [vmem:[%s5 + $0x20] sm:$0xff]
      %v716 = vld [vmem:[%s5 + $0x28] sm:$0xff]
      %v717 = vld [vmem:[%s5 + $0x30] sm:$0xff]
      %v718 = vld [vmem:[%s5 + $0x38] sm:$0xff]
      %v719 = vld [vmem:[%s5 + $0x40] sm:$0xff]
      %v720 = vld [vmem:[%s5 + $0x48] sm:$0xff]
      %v721 = vld [vmem:[%s5 + $0x50] sm:$0xff]
      %v722 = vld [vmem:[%s5 + $0x58] sm:$0xff]
      %v723 = vld [vmem:[%s5 + $0x60] sm:$0xff]
      %v724 = vld [vmem:[%s5 + $0x68] sm:$0xff]
      %v725 = vld [vmem:[%s5 + $0x70] sm:$0xff]
      %v726 = vld [vmem:[%s5 + $0x78] sm:$0xff]
      %v727 = vld [vmem:[%s5 + $0x80] sm:$0xff]
      %v728 = vld [vmem:[%s5 + $0x88] sm:$0xff]
      %v729 = vld [vmem:[%s5 + $0x90] sm:$0xff]
      %v730 = vld [vmem:[%s5 + $0x98] sm:$0xff]
      %v731 = vld [vmem:[%s5 + $0xa0] sm:$0xff]
      %v732 = vld [vmem:[%s5 + $0xa8] sm:$0xff]
      %v733 = vld [vmem:[%s5 + $0xb0] sm:$0xff]
      %v734 = vld [vmem:[%s5 + $0xb8] sm:$0xff]
      %v735 = vld [vmem:[%s5 + $0xc0] sm:$0xff]
      %v736 = vld [vmem:[%s5 + $0xc8] sm:$0xff]
      %v737 = vld [vmem:[%s5 + $0xd0] sm:$0xff]
      %v738 = vld [vmem:[%s5 + $0xd8] sm:$0xff]
      %v739 = vld [vmem:[%s5 + $0xe0] sm:$0xff]
      %v740 = vld [vmem:[%s5 + $0xe8] sm:$0xff]
      %v741 = vld [vmem:[%s5 + $0xf0] sm:$0xff]
      %v742 = vld [vmem:[%s5 + $0xf8] sm:$0xff]
      %743 = vmatpush.msra.mxu0 %v726
      %744 = vmatpush.msra.mxu0 %v725
      %745 = vmatpush.msra.mxu0 %v724
      %746 = vmatpush.msra.mxu0 %v723
      %747 = vmatpush.msra.mxu0 %v722
      %748 = vmatpush.msra.mxu0 %v721
      %749 = vmatpush.msra.mxu0 %v720
      %750 = vmatpush.msra.mxu0 %v719
      %751 = vmatpush.msra.mxu0 %v718
      %752 = vmatpush.msra.mxu0 %v717
      %753 = vmatpush.msra.mxu0 %v716
      %754 = vmatpush.msra.mxu0 %v715
      %755 = vmatpush.msra.mxu0 %v714
      %756 = vmatpush.msra.mxu0 %v713
      %757 = vmatpush.msra.mxu0 %v712
      %758 = vmatpush.msra.mxu0 %v711
      %759 = vmatmul.f32.gmra.mxu0 %v389
      %v760 = vpop.f32.mrf.mxu0
      %v761 = vadd.f32 0.0, %v760
      %762 = vmatmul.f32.gmra.mxu0 %v391
      %v763 = vpop.f32.mrf.mxu0
      %v764 = vadd.f32 0.0, %v763
      %765 = vmatmul.f32.gmra.mxu0 %v393
      %v766 = vpop.f32.mrf.mxu0
      %v767 = vadd.f32 0.0, %v766
      %768 = vmatmul.f32.gmra.mxu0 %v395
      %v769 = vpop.f32.mrf.mxu0
      %v770 = vadd.f32 0.0, %v769
      %771 = vmatmul.f32.gmra.mxu0 %v397
      %v772 = vpop.f32.mrf.mxu0
      %v773 = vadd.f32 0.0, %v772
      %774 = vmatmul.f32.gmra.mxu0 %v399
      %v775 = vpop.f32.mrf.mxu0
      %v776 = vadd.f32 0.0, %v775
      %777 = vmatmul.f32.gmra.mxu0 %v401
      %v778 = vpop.f32.mrf.mxu0
      %v779 = vadd.f32 0.0, %v778
      %780 = vmatmul.f32.gmra.mxu0 %v403
      %v781 = vpop.f32.mrf.mxu0
      %v782 = vadd.f32 0.0, %v781
      %783 = vmatmul.f32.gmra.mxu0 %v405
      %v784 = vpop.f32.mrf.mxu0
      %v785 = vadd.f32 0.0, %v784
      %786 = vmatmul.f32.gmra.mxu0 %v407
      %v787 = vpop.f32.mrf.mxu0
      %v788 = vadd.f32 0.0, %v787
      %789 = vmatmul.f32.gmra.mxu0 %v409
      %v790 = vpop.f32.mrf.mxu0
      %v791 = vadd.f32 0.0, %v790
      %792 = vmatmul.f32.gmra.mxu0 %v411
      %v793 = vpop.f32.mrf.mxu0
      %v794 = vadd.f32 0.0, %v793
      %795 = vmatmul.f32.gmra.mxu0 %v413
      %v796 = vpop.f32.mrf.mxu0
      %v797 = vadd.f32 0.0, %v796
      %798 = vmatmul.f32.gmra.mxu0 %v415
      %v799 = vpop.f32.mrf.mxu0
      %v800 = vadd.f32 0.0, %v799
      %801 = vmatmul.f32.gmra.mxu0 %v417
      %v802 = vpop.f32.mrf.mxu0
      %v803 = vadd.f32 0.0, %v802
      %804 = vmatmul.f32.gmra.mxu0 %v419
      %v805 = vpop.f32.mrf.mxu0
      %v806 = vadd.f32 0.0, %v805
      %807 = vmatmul.f32.gmra.mxu0 %v421
      %v808 = vpop.f32.mrf.mxu0
      %v809 = vadd.f32 0.0, %v808
      %810 = vmatmul.f32.gmra.mxu0 %v423
      %v811 = vpop.f32.mrf.mxu0
      %v812 = vadd.f32 0.0, %v811
      %813 = vmatmul.f32.gmra.mxu0 %v425
      %v814 = vpop.f32.mrf.mxu0
      %v815 = vadd.f32 0.0, %v814
      %816 = vmatmul.f32.gmra.mxu0 %v427
      %v817 = vpop.f32.mrf.mxu0
      %v818 = vadd.f32 0.0, %v817
      %819 = vmatmul.f32.gmra.mxu0 %v429
      %v820 = vpop.f32.mrf.mxu0
      %v821 = vadd.f32 0.0, %v820
      %822 = vmatmul.f32.gmra.mxu0 %v431
      %v823 = vpop.f32.mrf.mxu0
      %v824 = vadd.f32 0.0, %v823
      %825 = vmatmul.f32.gmra.mxu0 %v433
      %v826 = vpop.f32.mrf.mxu0
      %v827 = vadd.f32 0.0, %v826
      %828 = vmatmul.f32.gmra.mxu0 %v435
      %v829 = vpop.f32.mrf.mxu0
      %v830 = vadd.f32 0.0, %v829
      %831 = vmatmul.f32.gmra.mxu0 %v437
      %v832 = vpop.f32.mrf.mxu0
      %v833 = vadd.f32 0.0, %v832
      %834 = vmatmul.f32.gmra.mxu0 %v439
      %v835 = vpop.f32.mrf.mxu0
      %v836 = vadd.f32 0.0, %v835
      %837 = vmatmul.f32.gmra.mxu0 %v441
      %v838 = vpop.f32.mrf.mxu0
      %v839 = vadd.f32 0.0, %v838
      %840 = vmatmul.f32.gmra.mxu0 %v443
      %v841 = vpop.f32.mrf.mxu0
      %v842 = vadd.f32 0.0, %v841
      %843 = vmatmul.f32.gmra.mxu0 %v445
      %v844 = vpop.f32.mrf.mxu0
      %v845 = vadd.f32 0.0, %v844
      %846 = vmatmul.f32.gmra.mxu0 %v447
      %v847 = vpop.f32.mrf.mxu0
      %v848 = vadd.f32 0.0, %v847
      %849 = vmatmul.f32.gmra.mxu0 %v449
      %v850 = vpop.f32.mrf.mxu0
      %v851 = vadd.f32 0.0, %v850
      %852 = vmatmul.f32.gmra.mxu0 %v451
      %v853 = vpop.f32.mrf.mxu0
      %v854 = vadd.f32 0.0, %v853
      %855 = vdwg.mxu0
      %856 = vmatpush.msra.mxu0 %v742
      %857 = vmatpush.msra.mxu0 %v741
      %858 = vmatpush.msra.mxu0 %v740
      %859 = vmatpush.msra.mxu0 %v739
      %860 = vmatpush.msra.mxu0 %v738
      %861 = vmatpush.msra.mxu0 %v737
      %862 = vmatpush.msra.mxu0 %v736
      %863 = vmatpush.msra.mxu0 %v735
      %864 = vmatpush.msra.mxu0 %v734
      %865 = vmatpush.msra.mxu0 %v733
      %866 = vmatpush.msra.mxu0 %v732
      %867 = vmatpush.msra.mxu0 %v731
      %868 = vmatpush.msra.mxu0 %v730
      %869 = vmatpush.msra.mxu0 %v729
      %870 = vmatpush.msra.mxu0 %v728
      %871 = vmatpush.msra.mxu0 %v727
      %872 = vmatmul.f32.gmra.mxu0 %v390
      %v873 = vpop.f32.mrf.mxu0
      %v874 = vadd.f32 %v761, %v873
      %875 = vmatmul.f32.gmra.mxu0 %v392
      %v876 = vpop.f32.mrf.mxu0
      %v877 = vadd.f32 %v764, %v876
      %878 = vmatmul.f32.gmra.mxu0 %v394
      %v879 = vpop.f32.mrf.mxu0
      %v880 = vadd.f32 %v767, %v879
      %881 = vmatmul.f32.gmra.mxu0 %v396
      %v882 = vpop.f32.mrf.mxu0
      %v883 = vadd.f32 %v770, %v882
      %884 = vmatmul.f32.gmra.mxu0 %v398
      %v885 = vpop.f32.mrf.mxu0
      %v886 = vadd.f32 %v773, %v885
      %887 = vmatmul.f32.gmra.mxu0 %v400
      %v888 = vpop.f32.mrf.mxu0
      %v889 = vadd.f32 %v776, %v888
      %890 = vmatmul.f32.gmra.mxu0 %v402
      %v891 = vpop.f32.mrf.mxu0
      %v892 = vadd.f32 %v779, %v891
      %893 = vmatmul.f32.gmra.mxu0 %v404
      %v894 = vpop.f32.mrf.mxu0
      %v895 = vadd.f32 %v782, %v894
      %896 = vmatmul.f32.gmra.mxu0 %v406
      %v897 = vpop.f32.mrf.mxu0
      %v898 = vadd.f32 %v785, %v897
      %899 = vmatmul.f32.gmra.mxu0 %v408
      %v900 = vpop.f32.mrf.mxu0
      %v901 = vadd.f32 %v788, %v900
      %902 = vmatmul.f32.gmra.mxu0 %v410
      %v903 = vpop.f32.mrf.mxu0
      %v904 = vadd.f32 %v791, %v903
      %905 = vmatmul.f32.gmra.mxu0 %v412
      %v906 = vpop.f32.mrf.mxu0
      %v907 = vadd.f32 %v794, %v906
      %908 = vmatmul.f32.gmra.mxu0 %v414
      %v909 = vpop.f32.mrf.mxu0
      %v910 = vadd.f32 %v797, %v909
      %911 = vmatmul.f32.gmra.mxu0 %v416
      %v912 = vpop.f32.mrf.mxu0
      %v913 = vadd.f32 %v800, %v912
      %914 = vmatmul.f32.gmra.mxu0 %v418
      %v915 = vpop.f32.mrf.mxu0
      %v916 = vadd.f32 %v803, %v915
      %917 = vmatmul.f32.gmra.mxu0 %v420
      %v918 = vpop.f32.mrf.mxu0
      %v919 = vadd.f32 %v806, %v918
      %920 = vmatmul.f32.gmra.mxu0 %v422
      %v921 = vpop.f32.mrf.mxu0
      %v922 = vadd.f32 %v809, %v921
      %923 = vmatmul.f32.gmra.mxu0 %v424
      %v924 = vpop.f32.mrf.mxu0
      %v925 = vadd.f32 %v812, %v924
      %926 = vmatmul.f32.gmra.mxu0 %v426
      %v927 = vpop.f32.mrf.mxu0
      %v928 = vadd.f32 %v815, %v927
      %929 = vmatmul.f32.gmra.mxu0 %v428
      %v930 = vpop.f32.mrf.mxu0
      %v931 = vadd.f32 %v818, %v930
      %932 = vmatmul.f32.gmra.mxu0 %v430
      %v933 = vpop.f32.mrf.mxu0
      %v934 = vadd.f32 %v821, %v933
      %935 = vmatmul.f32.gmra.mxu0 %v432
      %v936 = vpop.f32.mrf.mxu0
      %v937 = vadd.f32 %v824, %v936
      %938 = vmatmul.f32.gmra.mxu0 %v434
      %v939 = vpop.f32.mrf.mxu0
      %v940 = vadd.f32 %v827, %v939
      %941 = vmatmul.f32.gmra.mxu0 %v436
      %v942 = vpop.f32.mrf.mxu0
      %v943 = vadd.f32 %v830, %v942
      %944 = vmatmul.f32.gmra.mxu0 %v438
      %v945 = vpop.f32.mrf.mxu0
      %v946 = vadd.f32 %v833, %v945
      %947 = vmatmul.f32.gmra.mxu0 %v440
      %v948 = vpop.f32.mrf.mxu0
      %v949 = vadd.f32 %v836, %v948
      %950 = vmatmul.f32.gmra.mxu0 %v442
      %v951 = vpop.f32.mrf.mxu0
      %v952 = vadd.f32 %v839, %v951
      %953 = vmatmul.f32.gmra.mxu0 %v444
      %v954 = vpop.f32.mrf.mxu0
      %v955 = vadd.f32 %v842, %v954
      %956 = vmatmul.f32.gmra.mxu0 %v446
      %v957 = vpop.f32.mrf.mxu0
      %v958 = vadd.f32 %v845, %v957
      %959 = vmatmul.f32.gmra.mxu0 %v448
      %v960 = vpop.f32.mrf.mxu0
      %v961 = vadd.f32 %v848, %v960
      %962 = vmatmul.f32.gmra.mxu0 %v450
      %v963 = vpop.f32.mrf.mxu0
      %v964 = vadd.f32 %v851, %v963
      %965 = vmatmul.f32.gmra.mxu0 %v452
      %v966 = vpop.f32.mrf.mxu0
      %v967 = vadd.f32 %v854, %v966
      %968 = vdwg.mxu0
      %v969 = vld [vmem:[%s6] sm:$0xff]
      %v970 = vld [vmem:[%s6 + $0x8] sm:$0xff]
      %v971 = vld [vmem:[%s6 + $0x10] sm:$0xff]
      %v972 = vld [vmem:[%s6 + $0x18] sm:$0xff]
      %v973 = vld [vmem:[%s7] sm:$0xff]
      %v974 = vld [vmem:[%s7 + $0x8] sm:$0xff]
      %v975 = vld [vmem:[%s7 + $0x10] sm:$0xff]
      %v976 = vld [vmem:[%s7 + $0x18] sm:$0xff]
      %v977 = vld [vmem:[%s366] sm:$0xff]
      %v978 = vld [vmem:[%s366 + $0x8] sm:$0xff]
      %v979 = vld [vmem:[%s366 + $0x10] sm:$0xff]
      %v980 = vld [vmem:[%s366 + $0x18] sm:$0xff]
      %v981 = vld [vmem:[%s366 + $0x20] sm:$0xff]
      %v982 = vld [vmem:[%s366 + $0x28] sm:$0xff]
      %v983 = vld [vmem:[%s366 + $0x30] sm:$0xff]
      %v984 = vld [vmem:[%s366 + $0x38] sm:$0xff]
      %v985 = vld [vmem:[%s373] sm:$0xff]
      %v986 = vld [vmem:[%s373 + $0x8] sm:$0xff]
      %v987 = vld [vmem:[%s373 + $0x10] sm:$0xff]
      %v988 = vld [vmem:[%s373 + $0x18] sm:$0xff]
      %v989 = vld [vmem:[%s373 + $0x20] sm:$0xff]
      %v990 = vld [vmem:[%s373 + $0x28] sm:$0xff]
      %v991 = vld [vmem:[%s373 + $0x30] sm:$0xff]
      %v992 = vld [vmem:[%s373 + $0x38] sm:$0xff]
      %v993 = vld [vmem:[%s380] sm:$0xff]
      %v994 = vld [vmem:[%s380 + $0x8] sm:$0xff]
      %v995 = vld [vmem:[%s380 + $0x10] sm:$0xff]
      %v996 = vld [vmem:[%s380 + $0x18] sm:$0xff]
      %v997 = vld [vmem:[%s380 + $0x20] sm:$0xff]
      %v998 = vld [vmem:[%s380 + $0x28] sm:$0xff]
      %v999 = vld [vmem:[%s380 + $0x30] sm:$0xff]
      %v1000 = vld [vmem:[%s380 + $0x38] sm:$0xff]
      %vm1001 = vcmask 523264
      %v1003 = vsel %vm1001, %v977, 0
      %v1006 = vsel %vm1001, %v978, 0
      %v1009 = vsel %vm1001, %v979, 0
      %v1012 = vsel %vm1001, %v980, 0
      %v1015 = vsel %vm1001, %v981, 0
      %v1018 = vsel %vm1001, %v982, 0
      %v1021 = vsel %vm1001, %v983, 0
      %v1024 = vsel %vm1001, %v984, 0
      %1026 = vmatpush.msra.mxu0 0.0
      %1027 = vmatpush.msra.mxu0 0.0
      %1028 = vmatpush.msra.mxu0 0.0
      %1029 = vmatpush.msra.mxu0 0.0
      %1030 = vmatpush.msra.mxu0 0.0
      %1031 = vmatpush.msra.mxu0 0.0
      %1032 = vmatpush.msra.mxu0 0.0
      %1033 = vmatpush.msra.mxu0 0.0
      %1034 = vmatpush.msra.mxu0 %v637
      %1035 = vmatpush.msra.mxu0 %v634
      %1036 = vmatpush.msra.mxu0 %v631
      %1037 = vmatpush.msra.mxu0 %v628
      %1038 = vmatpush.msra.mxu0 %v625
      %1039 = vmatpush.msra.mxu0 %v622
      %1040 = vmatpush.msra.mxu0 %v619
      %1041 = vmatpush.msra.mxu0 %v616
      %1042 = vmatmul.f32.gmra.mxu0 %v1003
      %v1043 = vpop.f32.mrf.mxu0
      %v1044 = vadd.f32 %v616, %v1043
      %1045 = vmatmul.f32.gmra.mxu0 %v1006
      %v1046 = vpop.f32.mrf.mxu0
      %v1047 = vadd.f32 %v619, %v1046
      %1048 = vmatmul.f32.gmra.mxu0 %v1009
      %v1049 = vpop.f32.mrf.mxu0
      %v1050 = vadd.f32 %v622, %v1049
      %1051 = vmatmul.f32.gmra.mxu0 %v1012
      %v1052 = vpop.f32.mrf.mxu0
      %v1053 = vadd.f32 %v625, %v1052
      %1054 = vmatmul.f32.gmra.mxu0 %v1015
      %v1055 = vpop.f32.mrf.mxu0
      %v1056 = vadd.f32 %v628, %v1055
      %1057 = vmatmul.f32.gmra.mxu0 %v1018
      %v1058 = vpop.f32.mrf.mxu0
      %v1059 = vadd.f32 %v631, %v1058
      %1060 = vmatmul.f32.gmra.mxu0 %v1021
      %v1061 = vpop.f32.mrf.mxu0
      %v1062 = vadd.f32 %v634, %v1061
      %1063 = vmatmul.f32.gmra.mxu0 %v1024
      %v1064 = vpop.f32.mrf.mxu0
      %v1065 = vadd.f32 %v637, %v1064
      %1066 = vdwg.mxu0
      %1067 = vxpose.xlu0.b32.start [1/16] %v977, 128
      %1068 = vxpose.xlu0.b32.cont [2/16] %v978, 128
      %1069 = vxpose.xlu0.b32.cont [3/16] %v979, 128
      %1070 = vxpose.xlu0.b32.cont [4/16] %v980, 128
      %1071 = vxpose.xlu0.b32.cont [5/16] %v981, 128
      %1072 = vxpose.xlu0.b32.cont [6/16] %v982, 128
      %1073 = vxpose.xlu0.b32.cont [7/16] %v983, 128
      %1074 = vxpose.xlu0.b32.cont [8/16] %v984, 128
      %1075 = vxpose.xlu0.b32.cont [9/16] 0.0, 128
      %1076 = vxpose.xlu0.b32.cont [10/16] 0.0, 128
      %1077 = vxpose.xlu0.b32.cont [11/16] 0.0, 128
      %1078 = vxpose.xlu0.b32.cont [12/16] 0.0, 128
      %1079 = vxpose.xlu0.b32.cont [13/16] 0.0, 128
      %1080 = vxpose.xlu0.b32.cont [14/16] 0.0, 128
      %1081 = vxpose.xlu0.b32.cont [15/16] 0.0, 128
      %1082 = vxpose.xlu0.b32.end [16/16] 0.0, 128
      %v1083 = vpop.trf.xlu0
      %v1084 = vpop.trf.xlu0
      %v1085 = vpop.trf.xlu0
      %v1086 = vpop.trf.xlu0
      %v1087 = vpop.trf.xlu0
      %v1088 = vpop.trf.xlu0
      %v1089 = vpop.trf.xlu0
      %v1090 = vpop.trf.xlu0
      %v1091 = vpop.trf.xlu0
      %v1092 = vpop.trf.xlu0
      %v1093 = vpop.trf.xlu0
      %v1094 = vpop.trf.xlu0
      %v1095 = vpop.trf.xlu0
      %v1096 = vpop.trf.xlu0
      %v1097 = vpop.trf.xlu0
      %v1098 = vpop.trf.xlu0
      %v1100 = vsel %vm1001, %v1083, 0
      %v1103 = vsel %vm1001, %v1084, 0
      %v1106 = vsel %vm1001, %v1085, 0
      %v1109 = vsel %vm1001, %v1086, 0
      %v1112 = vsel %vm1001, %v1087, 0
      %v1115 = vsel %vm1001, %v1088, 0
      %v1118 = vsel %vm1001, %v1089, 0
      %v1121 = vsel %vm1001, %v1090, 0
      %1123 = vmatpush.msra.mxu0 0.0
      %1124 = vmatpush.msra.mxu0 0.0
      %1125 = vmatpush.msra.mxu0 0.0
      %1126 = vmatpush.msra.mxu0 0.0
      %1127 = vmatpush.msra.mxu0 0.0
      %1128 = vmatpush.msra.mxu0 0.0
      %1129 = vmatpush.msra.mxu0 0.0
      %1130 = vmatpush.msra.mxu0 0.0
      %1131 = vmatpush.msra.mxu0 %v895
      %1132 = vmatpush.msra.mxu0 %v892
      %1133 = vmatpush.msra.mxu0 %v889
      %1134 = vmatpush.msra.mxu0 %v886
      %1135 = vmatpush.msra.mxu0 %v883
      %1136 = vmatpush.msra.mxu0 %v880
      %1137 = vmatpush.msra.mxu0 %v877
      %1138 = vmatpush.msra.mxu0 %v874
      %1139 = vmatmul.f32.gmra.mxu0 %v1100
      %v1140 = vpop.f32.mrf.mxu0
      %v1141 = vadd.f32 %v874, %v1140
      %1142 = vmatmul.f32.gmra.mxu0 %v1103
      %v1143 = vpop.f32.mrf.mxu0
      %v1144 = vadd.f32 %v877, %v1143
      %1145 = vmatmul.f32.gmra.mxu0 %v1106
      %v1146 = vpop.f32.mrf.mxu0
      %v1147 = vadd.f32 %v880, %v1146
      %1148 = vmatmul.f32.gmra.mxu0 %v1109
      %v1149 = vpop.f32.mrf.mxu0
      %v1150 = vadd.f32 %v883, %v1149
      %1151 = vmatmul.f32.gmra.mxu0 %v1112
      %v1152 = vpop.f32.mrf.mxu0
      %v1153 = vadd.f32 %v886, %v1152
      %1154 = vmatmul.f32.gmra.mxu0 %v1115
      %v1155 = vpop.f32.mrf.mxu0
      %v1156 = vadd.f32 %v889, %v1155
      %1157 = vmatmul.f32.gmra.mxu0 %v1118
      %v1158 = vpop.f32.mrf.mxu0
      %v1159 = vadd.f32 %v892, %v1158
      %1160 = vmatmul.f32.gmra.mxu0 %v1121
      %v1161 = vpop.f32.mrf.mxu0
      %v1162 = vadd.f32 %v895, %v1161
      %1163 = vdwg.mxu0
      %1165 = vset.pattern.permute.xlu0 0
      %1166 = vperm.xlu0 %1165, %v985
      %v1167 = vpop.permute.xlu0 %1166
      %1170 = vset.pattern.permute.xlu0 0
      %1171 = vperm.xlu0 %1170, %v986
      %v1172 = vpop.permute.xlu0 %1171
      %1175 = vset.pattern.permute.xlu0 0
      %1176 = vperm.xlu0 %1175, %v987
      %v1177 = vpop.permute.xlu0 %1176
      %1180 = vset.pattern.permute.xlu0 0
      %1181 = vperm.xlu0 %1180, %v988
      %v1182 = vpop.permute.xlu0 %1181
      %1185 = vset.pattern.permute.xlu0 0
      %1186 = vperm.xlu0 %1185, %v989
      %v1187 = vpop.permute.xlu0 %1186
      %1190 = vset.pattern.permute.xlu0 0
      %1191 = vperm.xlu0 %1190, %v990
      %v1192 = vpop.permute.xlu0 %1191
      %1195 = vset.pattern.permute.xlu0 0
      %1196 = vperm.xlu0 %1195, %v991
      %v1197 = vpop.permute.xlu0 %1196
      %1200 = vset.pattern.permute.xlu0 0
      %1201 = vperm.xlu0 %1200, %v992
      %v1202 = vpop.permute.xlu0 %1201
      %v1204 = vmul.f32 %v1167, %v1044
      %v1205 = vmul.f32 %v1172, %v1047
      %v1206 = vmul.f32 %v1177, %v1050
      %v1207 = vmul.f32 %v1182, %v1053
      %v1208 = vmul.f32 %v1187, %v1056
      %v1209 = vmul.f32 %v1192, %v1059
      %v1210 = vmul.f32 %v1197, %v1062
      %v1211 = vmul.f32 %v1202, %v1065
      %v1212 = vmax.f32 %v1204, 0.0
      %v1213 = vmax.f32 %v1205, 0.0
      %v1214 = vmax.f32 %v1206, 0.0
      %v1215 = vmax.f32 %v1207, 0.0
      %v1216 = vmax.f32 %v1208, 0.0
      %v1217 = vmax.f32 %v1209, 0.0
      %v1218 = vmax.f32 %v1210, 0.0
      %v1219 = vmax.f32 %v1211, 0.0
      %1221 = vset.pattern.permute.xlu0 0
      %1222 = vperm.xlu0 %1221, %v993
      %v1223 = vpop.permute.xlu0 %1222
      %1226 = vset.pattern.permute.xlu0 0
      %1227 = vperm.xlu0 %1226, %v994
      %v1228 = vpop.permute.xlu0 %1227
      %1231 = vset.pattern.permute.xlu0 0
      %1232 = vperm.xlu0 %1231, %v995
      %v1233 = vpop.permute.xlu0 %1232
      %1236 = vset.pattern.permute.xlu0 0
      %1237 = vperm.xlu0 %1236, %v996
      %v1238 = vpop.permute.xlu0 %1237
      %1241 = vset.pattern.permute.xlu0 0
      %1242 = vperm.xlu0 %1241, %v997
      %v1243 = vpop.permute.xlu0 %1242
      %1246 = vset.pattern.permute.xlu0 0
      %1247 = vperm.xlu0 %1246, %v998
      %v1248 = vpop.permute.xlu0 %1247
      %1251 = vset.pattern.permute.xlu0 0
      %1252 = vperm.xlu0 %1251, %v999
      %v1253 = vpop.permute.xlu0 %1252
      %1256 = vset.pattern.permute.xlu0 0
      %1257 = vperm.xlu0 %1256, %v1000
      %v1258 = vpop.permute.xlu0 %1257
      %v1260 = vmul.f32 %v1223, %v1141
      %v1261 = vmul.f32 %v1228, %v1144
      %v1262 = vmul.f32 %v1233, %v1147
      %v1263 = vmul.f32 %v1238, %v1150
      %v1264 = vmul.f32 %v1243, %v1153
      %v1265 = vmul.f32 %v1248, %v1156
      %v1266 = vmul.f32 %v1253, %v1159
      %v1267 = vmul.f32 %v1258, %v1162
      %v1268 = vmax.f32 %v1260, 0.0
      %v1269 = vmax.f32 %v1261, 0.0
      %v1270 = vmax.f32 %v1262, 0.0
      %v1271 = vmax.f32 %v1263, 0.0
      %v1272 = vmax.f32 %v1264, 0.0
      %v1273 = vmax.f32 %v1265, 0.0
      %v1274 = vmax.f32 %v1266, 0.0
      %v1275 = vmax.f32 %v1267, 0.0
      %1276 = vmatpush.msra.mxu0 0.0
      %1277 = vmatpush.msra.mxu0 0.0
      %1278 = vmatpush.msra.mxu0 0.0
      %1279 = vmatpush.msra.mxu0 0.0
      %1280 = vmatpush.msra.mxu0 0.0
      %1281 = vmatpush.msra.mxu0 0.0
      %1282 = vmatpush.msra.mxu0 0.0
      %1283 = vmatpush.msra.mxu0 0.0
      %1284 = vmatpush.msra.mxu0 %v1219
      %1285 = vmatpush.msra.mxu0 %v1218
      %1286 = vmatpush.msra.mxu0 %v1217
      %1287 = vmatpush.msra.mxu0 %v1216
      %1288 = vmatpush.msra.mxu0 %v1215
      %1289 = vmatpush.msra.mxu0 %v1214
      %1290 = vmatpush.msra.mxu0 %v1213
      %1291 = vmatpush.msra.mxu0 %v1212
      %1292 = vmatmul.f32.gmra.mxu0 %v1003
      %v1293 = vpop.f32.mrf.mxu0
      %v1294 = vadd.f32 %v1212, %v1293
      %1295 = vmatmul.f32.gmra.mxu0 %v1006
      %v1296 = vpop.f32.mrf.mxu0
      %v1297 = vadd.f32 %v1213, %v1296
      %1298 = vmatmul.f32.gmra.mxu0 %v1009
      %v1299 = vpop.f32.mrf.mxu0
      %v1300 = vadd.f32 %v1214, %v1299
      %1301 = vmatmul.f32.gmra.mxu0 %v1012
      %v1302 = vpop.f32.mrf.mxu0
      %v1303 = vadd.f32 %v1215, %v1302
      %1304 = vmatmul.f32.gmra.mxu0 %v1015
      %v1305 = vpop.f32.mrf.mxu0
      %v1306 = vadd.f32 %v1216, %v1305
      %1307 = vmatmul.f32.gmra.mxu0 %v1018
      %v1308 = vpop.f32.mrf.mxu0
      %v1309 = vadd.f32 %v1217, %v1308
      %1310 = vmatmul.f32.gmra.mxu0 %v1021
      %v1311 = vpop.f32.mrf.mxu0
      %v1312 = vadd.f32 %v1218, %v1311
      %1313 = vmatmul.f32.gmra.mxu0 %v1024
      %v1314 = vpop.f32.mrf.mxu0
      %v1315 = vadd.f32 %v1219, %v1314
      %1316 = vdwg.mxu0
      %1317 = vmatpush.msra.mxu0 0.0
      %1318 = vmatpush.msra.mxu0 0.0
      %1319 = vmatpush.msra.mxu0 0.0
      %1320 = vmatpush.msra.mxu0 0.0
      %1321 = vmatpush.msra.mxu0 0.0
      %1322 = vmatpush.msra.mxu0 0.0
      %1323 = vmatpush.msra.mxu0 0.0
      %1324 = vmatpush.msra.mxu0 0.0
      %1325 = vmatpush.msra.mxu0 %v1275
      %1326 = vmatpush.msra.mxu0 %v1274
      %1327 = vmatpush.msra.mxu0 %v1273
      %1328 = vmatpush.msra.mxu0 %v1272
      %1329 = vmatpush.msra.mxu0 %v1271
      %1330 = vmatpush.msra.mxu0 %v1270
      %1331 = vmatpush.msra.mxu0 %v1269
      %1332 = vmatpush.msra.mxu0 %v1268
      %1333 = vmatmul.f32.gmra.mxu0 %v1100
      %v1334 = vpop.f32.mrf.mxu0
      %v1335 = vadd.f32 %v1268, %v1334
      %1336 = vmatmul.f32.gmra.mxu0 %v1103
      %v1337 = vpop.f32.mrf.mxu0
      %v1338 = vadd.f32 %v1269, %v1337
      %1339 = vmatmul.f32.gmra.mxu0 %v1106
      %v1340 = vpop.f32.mrf.mxu0
      %v1341 = vadd.f32 %v1270, %v1340
      %1342 = vmatmul.f32.gmra.mxu0 %v1109
      %v1343 = vpop.f32.mrf.mxu0
      %v1344 = vadd.f32 %v1271, %v1343
      %1345 = vmatmul.f32.gmra.mxu0 %v1112
      %v1346 = vpop.f32.mrf.mxu0
      %v1347 = vadd.f32 %v1272, %v1346
      %1348 = vmatmul.f32.gmra.mxu0 %v1115
      %v1349 = vpop.f32.mrf.mxu0
      %v1350 = vadd.f32 %v1273, %v1349
      %1351 = vmatmul.f32.gmra.mxu0 %v1118
      %v1352 = vpop.f32.mrf.mxu0
      %v1353 = vadd.f32 %v1274, %v1352
      %1354 = vmatmul.f32.gmra.mxu0 %v1121
      %v1355 = vpop.f32.mrf.mxu0
      %v1356 = vadd.f32 %v1275, %v1355
      %1357 = vdwg.mxu0
      %vm1358 = vcmask 261120
      %v1360 = vsel %vm1358, %v1335, 0
      %v1363 = vsel %vm1358, %v1338, 0
      %v1366 = vsel %vm1358, %v1341, 0
      %v1369 = vsel %vm1358, %v1344, 0
      %v1372 = vsel %vm1358, %v1347, 0
      %v1375 = vsel %vm1358, %v1350, 0
      %v1378 = vsel %vm1358, %v1353, 0
      %v1381 = vsel %vm1358, %v1356, 0
      %1383 = vmatpush.msra.mxu0 0.0
      %1384 = vmatpush.msra.mxu0 0.0
      %1385 = vmatpush.msra.mxu0 0.0
      %1386 = vmatpush.msra.mxu0 0.0
      %1387 = vmatpush.msra.mxu0 0.0
      %1388 = vmatpush.msra.mxu0 0.0
      %1389 = vmatpush.msra.mxu0 0.0
      %1390 = vmatpush.msra.mxu0 0.0
      %1391 = vmatpush.msra.mxu0 0.0
      %1392 = vmatpush.msra.mxu0 0.0
      %1393 = vmatpush.msra.mxu0 0.0
      %1394 = vmatpush.msra.mxu0 0.0
      %1395 = vmatpush.msra.mxu0 %v976
      %1396 = vmatpush.msra.mxu0 %v975
      %1397 = vmatpush.msra.mxu0 %v974
      %1398 = vmatpush.msra.mxu0 %v973
      %1399 = vmatmul.f32.gmra.mxu0 %v1360
      %v1400 = vpop.f32.mrf.mxu0
      %v1401 = vadd.f32 0.0, %v1400
      %1402 = vmatmul.f32.gmra.mxu0 %v1363
      %v1403 = vpop.f32.mrf.mxu0
      %v1404 = vadd.f32 0.0, %v1403
      %1405 = vmatmul.f32.gmra.mxu0 %v1366
      %v1406 = vpop.f32.mrf.mxu0
      %v1407 = vadd.f32 0.0, %v1406
      %1408 = vmatmul.f32.gmra.mxu0 %v1369
      %v1409 = vpop.f32.mrf.mxu0
      %v1410 = vadd.f32 0.0, %v1409
      %1411 = vmatmul.f32.gmra.mxu0 %v1372
      %v1412 = vpop.f32.mrf.mxu0
      %v1413 = vadd.f32 0.0, %v1412
      %1414 = vmatmul.f32.gmra.mxu0 %v1375
      %v1415 = vpop.f32.mrf.mxu0
      %v1416 = vadd.f32 0.0, %v1415
      %1417 = vmatmul.f32.gmra.mxu0 %v1378
      %v1418 = vpop.f32.mrf.mxu0
      %v1419 = vadd.f32 0.0, %v1418
      %1420 = vmatmul.f32.gmra.mxu0 %v1381
      %v1421 = vpop.f32.mrf.mxu0
      %v1422 = vadd.f32 0.0, %v1421
      %1423 = vdwg.mxu0
      %v1425 = vsel %vm1358, %v1294, 0
      %v1428 = vsel %vm1358, %v1297, 0
      %v1431 = vsel %vm1358, %v1300, 0
      %v1434 = vsel %vm1358, %v1303, 0
      %v1437 = vsel %vm1358, %v1306, 0
      %v1440 = vsel %vm1358, %v1309, 0
      %v1443 = vsel %vm1358, %v1312, 0
      %v1446 = vsel %vm1358, %v1315, 0
      %1448 = vmatpush.msra.mxu0 0.0
      %1449 = vmatpush.msra.mxu0 0.0
      %1450 = vmatpush.msra.mxu0 0.0
      %1451 = vmatpush.msra.mxu0 0.0
      %1452 = vmatpush.msra.mxu0 0.0
      %1453 = vmatpush.msra.mxu0 0.0
      %1454 = vmatpush.msra.mxu0 0.0
      %1455 = vmatpush.msra.mxu0 0.0
      %1456 = vmatpush.msra.mxu0 0.0
      %1457 = vmatpush.msra.mxu0 0.0
      %1458 = vmatpush.msra.mxu0 0.0
      %1459 = vmatpush.msra.mxu0 0.0
      %1460 = vmatpush.msra.mxu0 %v972
      %1461 = vmatpush.msra.mxu0 %v971
      %1462 = vmatpush.msra.mxu0 %v970
      %1463 = vmatpush.msra.mxu0 %v969
      %1464 = vmatmul.f32.gmra.mxu0 %v1425
      %v1465 = vpop.f32.mrf.mxu0
      %v1466 = vadd.f32 %v1401, %v1465
      %1467 = vmatmul.f32.gmra.mxu0 %v1428
      %v1468 = vpop.f32.mrf.mxu0
      %v1469 = vadd.f32 %v1404, %v1468
      %1470 = vmatmul.f32.gmra.mxu0 %v1431
      %v1471 = vpop.f32.mrf.mxu0
      %v1472 = vadd.f32 %v1407, %v1471
      %1473 = vmatmul.f32.gmra.mxu0 %v1434
      %v1474 = vpop.f32.mrf.mxu0
      %v1475 = vadd.f32 %v1410, %v1474
      %1476 = vmatmul.f32.gmra.mxu0 %v1437
      %v1477 = vpop.f32.mrf.mxu0
      %v1478 = vadd.f32 %v1413, %v1477
      %1479 = vmatmul.f32.gmra.mxu0 %v1440
      %v1480 = vpop.f32.mrf.mxu0
      %v1481 = vadd.f32 %v1416, %v1480
      %1482 = vmatmul.f32.gmra.mxu0 %v1443
      %v1483 = vpop.f32.mrf.mxu0
      %v1484 = vadd.f32 %v1419, %v1483
      %1485 = vmatmul.f32.gmra.mxu0 %v1446
      %v1486 = vpop.f32.mrf.mxu0
      %v1487 = vadd.f32 %v1422, %v1486
      %1488 = vdwg.mxu0
      %v1489 = vmul.f32 %v985, 0.5
      %v1490 = vmul.f32 %v986, 0.5
      %v1491 = vmul.f32 %v987, 0.5
      %v1492 = vmul.f32 %v988, 0.5
      %v1493 = vmul.f32 %v989, 0.5
      %v1494 = vmul.f32 %v990, 0.5
      %v1495 = vmul.f32 %v991, 0.5
      %v1496 = vmul.f32 %v992, 0.5
      %1498 = vset.pattern.permute.xlu0 0
      %1499 = vperm.xlu0 %1498, %v1489
      %v1500 = vpop.permute.xlu0 %1499
      %1503 = vset.pattern.permute.xlu0 0
      %1504 = vperm.xlu0 %1503, %v1490
      %v1505 = vpop.permute.xlu0 %1504
      %1508 = vset.pattern.permute.xlu0 0
      %1509 = vperm.xlu0 %1508, %v1491
      %v1510 = vpop.permute.xlu0 %1509
      %1513 = vset.pattern.permute.xlu0 0
      %1514 = vperm.xlu0 %1513, %v1492
      %v1515 = vpop.permute.xlu0 %1514
      %1518 = vset.pattern.permute.xlu0 0
      %1519 = vperm.xlu0 %1518, %v1493
      %v1520 = vpop.permute.xlu0 %1519
      %1523 = vset.pattern.permute.xlu0 0
      %1524 = vperm.xlu0 %1523, %v1494
      %v1525 = vpop.permute.xlu0 %1524
      %1528 = vset.pattern.permute.xlu0 0
      %1529 = vperm.xlu0 %1528, %v1495
      %v1530 = vpop.permute.xlu0 %1529
      %1533 = vset.pattern.permute.xlu0 0
      %1534 = vperm.xlu0 %1533, %v1496
      %v1535 = vpop.permute.xlu0 %1534
      %v1537 = vmul.f32 %v1500, %v1466
      %v1538 = vmul.f32 %v1505, %v1469
      %v1539 = vmul.f32 %v1510, %v1472
      %v1540 = vmul.f32 %v1515, %v1475
      %v1541 = vmul.f32 %v1520, %v1478
      %v1542 = vmul.f32 %v1525, %v1481
      %v1543 = vmul.f32 %v1530, %v1484
      %v1544 = vmul.f32 %v1535, %v1487
      %1545 = vst [vmem:[%s387] sm:$0xff] %v1537
      %1546 = vst [vmem:[%s387 + $0x8] sm:$0xff] %v1538
      %1547 = vst [vmem:[%s387 + $0x10] sm:$0xff] %v1539
      %1548 = vst [vmem:[%s387 + $0x18] sm:$0xff] %v1540
      %1549 = vst [vmem:[%s387 + $0x20] sm:$0xff] %v1541
      %1550 = vst [vmem:[%s387 + $0x28] sm:$0xff] %v1542
      %1551 = vst [vmem:[%s387 + $0x30] sm:$0xff] %v1543
      %1552 = vst [vmem:[%s387 + $0x38] sm:$0xff] %v1544
      %s1553 = scalar_lea.vmem %s366, 64
      %v1554 = vld [vmem:[%s1553] sm:$0xff]
      %v1555 = vld [vmem:[%s1553 + $0x8] sm:$0xff]
      %v1556 = vld [vmem:[%s1553 + $0x10] sm:$0xff]
      %v1557 = vld [vmem:[%s1553 + $0x18] sm:$0xff]
      %v1558 = vld [vmem:[%s1553 + $0x20] sm:$0xff]
      %v1559 = vld [vmem:[%s1553 + $0x28] sm:$0xff]
      %v1560 = vld [vmem:[%s1553 + $0x30] sm:$0xff]
      %v1561 = vld [vmem:[%s1553 + $0x38] sm:$0xff]
      %s1562 = scalar_lea.vmem %s373, 64
      %v1563 = vld [vmem:[%s1562] sm:$0xff]
      %v1564 = vld [vmem:[%s1562 + $0x8] sm:$0xff]
      %v1565 = vld [vmem:[%s1562 + $0x10] sm:$0xff]
      %v1566 = vld [vmem:[%s1562 + $0x18] sm:$0xff]
      %v1567 = vld [vmem:[%s1562 + $0x20] sm:$0xff]
      %v1568 = vld [vmem:[%s1562 + $0x28] sm:$0xff]
      %v1569 = vld [vmem:[%s1562 + $0x30] sm:$0xff]
      %v1570 = vld [vmem:[%s1562 + $0x38] sm:$0xff]
      %s1571 = scalar_lea.vmem %s380, 64
      %v1572 = vld [vmem:[%s1571] sm:$0xff]
      %v1573 = vld [vmem:[%s1571 + $0x8] sm:$0xff]
      %v1574 = vld [vmem:[%s1571 + $0x10] sm:$0xff]
      %v1575 = vld [vmem:[%s1571 + $0x18] sm:$0xff]
      %v1576 = vld [vmem:[%s1571 + $0x20] sm:$0xff]
      %v1577 = vld [vmem:[%s1571 + $0x28] sm:$0xff]
      %v1578 = vld [vmem:[%s1571 + $0x30] sm:$0xff]
      %v1579 = vld [vmem:[%s1571 + $0x38] sm:$0xff]
      %v1581 = vsel %vm1001, %v1554, 0
      %v1584 = vsel %vm1001, %v1555, 0
      %v1587 = vsel %vm1001, %v1556, 0
      %v1590 = vsel %vm1001, %v1557, 0
      %v1593 = vsel %vm1001, %v1558, 0
      %v1596 = vsel %vm1001, %v1559, 0
      %v1599 = vsel %vm1001, %v1560, 0
      %v1602 = vsel %vm1001, %v1561, 0
      %1604 = vmatpush.msra.mxu0 0.0
      %1605 = vmatpush.msra.mxu0 0.0
      %1606 = vmatpush.msra.mxu0 0.0
      %1607 = vmatpush.msra.mxu0 0.0
      %1608 = vmatpush.msra.mxu0 0.0
      %1609 = vmatpush.msra.mxu0 0.0
      %1610 = vmatpush.msra.mxu0 0.0
      %1611 = vmatpush.msra.mxu0 0.0
      %1612 = vmatpush.msra.mxu0 %v661
      %1613 = vmatpush.msra.mxu0 %v658
      %1614 = vmatpush.msra.mxu0 %v655
      %1615 = vmatpush.msra.mxu0 %v652
      %1616 = vmatpush.msra.mxu0 %v649
      %1617 = vmatpush.msra.mxu0 %v646
      %1618 = vmatpush.msra.mxu0 %v643
      %1619 = vmatpush.msra.mxu0 %v640
      %1620 = vmatmul.f32.gmra.mxu0 %v1581
      %v1621 = vpop.f32.mrf.mxu0
      %v1622 = vadd.f32 %v640, %v1621
      %1623 = vmatmul.f32.gmra.mxu0 %v1584
      %v1624 = vpop.f32.mrf.mxu0
      %v1625 = vadd.f32 %v643, %v1624
      %1626 = vmatmul.f32.gmra.mxu0 %v1587
      %v1627 = vpop.f32.mrf.mxu0
      %v1628 = vadd.f32 %v646, %v1627
      %1629 = vmatmul.f32.gmra.mxu0 %v1590
      %v1630 = vpop.f32.mrf.mxu0
      %v1631 = vadd.f32 %v649, %v1630
      %1632 = vmatmul.f32.gmra.mxu0 %v1593
      %v1633 = vpop.f32.mrf.mxu0
      %v1634 = vadd.f32 %v652, %v1633
      %1635 = vmatmul.f32.gmra.mxu0 %v1596
      %v1636 = vpop.f32.mrf.mxu0
      %v1637 = vadd.f32 %v655, %v1636
      %1638 = vmatmul.f32.gmra.mxu0 %v1599
      %v1639 = vpop.f32.mrf.mxu0
      %v1640 = vadd.f32 %v658, %v1639
      %1641 = vmatmul.f32.gmra.mxu0 %v1602
      %v1642 = vpop.f32.mrf.mxu0
      %v1643 = vadd.f32 %v661, %v1642
      %1644 = vdwg.mxu0
      %1645 = vxpose.xlu0.b32.start [1/16] %v1554, 128
      %1646 = vxpose.xlu0.b32.cont [2/16] %v1555, 128
      %1647 = vxpose.xlu0.b32.cont [3/16] %v1556, 128
      %1648 = vxpose.xlu0.b32.cont [4/16] %v1557, 128
      %1649 = vxpose.xlu0.b32.cont [5/16] %v1558, 128
      %1650 = vxpose.xlu0.b32.cont [6/16] %v1559, 128
      %1651 = vxpose.xlu0.b32.cont [7/16] %v1560, 128
      %1652 = vxpose.xlu0.b32.cont [8/16] %v1561, 128
      %1653 = vxpose.xlu0.b32.cont [9/16] 0.0, 128
      %1654 = vxpose.xlu0.b32.cont [10/16] 0.0, 128
      %1655 = vxpose.xlu0.b32.cont [11/16] 0.0, 128
      %1656 = vxpose.xlu0.b32.cont [12/16] 0.0, 128
      %1657 = vxpose.xlu0.b32.cont [13/16] 0.0, 128
      %1658 = vxpose.xlu0.b32.cont [14/16] 0.0, 128
      %1659 = vxpose.xlu0.b32.cont [15/16] 0.0, 128
      %1660 = vxpose.xlu0.b32.end [16/16] 0.0, 128
      %v1661 = vpop.trf.xlu0
      %v1662 = vpop.trf.xlu0
      %v1663 = vpop.trf.xlu0
      %v1664 = vpop.trf.xlu0
      %v1665 = vpop.trf.xlu0
      %v1666 = vpop.trf.xlu0
      %v1667 = vpop.trf.xlu0
      %v1668 = vpop.trf.xlu0
      %v1669 = vpop.trf.xlu0
      %v1670 = vpop.trf.xlu0
      %v1671 = vpop.trf.xlu0
      %v1672 = vpop.trf.xlu0
      %v1673 = vpop.trf.xlu0
      %v1674 = vpop.trf.xlu0
      %v1675 = vpop.trf.xlu0
      %v1676 = vpop.trf.xlu0
      %v1678 = vsel %vm1001, %v1661, 0
      %v1681 = vsel %vm1001, %v1662, 0
      %v1684 = vsel %vm1001, %v1663, 0
      %v1687 = vsel %vm1001, %v1664, 0
      %v1690 = vsel %vm1001, %v1665, 0
      %v1693 = vsel %vm1001, %v1666, 0
      %v1696 = vsel %vm1001, %v1667, 0
      %v1699 = vsel %vm1001, %v1668, 0
      %1701 = vmatpush.msra.mxu0 0.0
      %1702 = vmatpush.msra.mxu0 0.0
      %1703 = vmatpush.msra.mxu0 0.0
      %1704 = vmatpush.msra.mxu0 0.0
      %1705 = vmatpush.msra.mxu0 0.0
      %1706 = vmatpush.msra.mxu0 0.0
      %1707 = vmatpush.msra.mxu0 0.0
      %1708 = vmatpush.msra.mxu0 0.0
      %1709 = vmatpush.msra.mxu0 %v919
      %1710 = vmatpush.msra.mxu0 %v916
      %1711 = vmatpush.msra.mxu0 %v913
      %1712 = vmatpush.msra.mxu0 %v910
      %1713 = vmatpush.msra.mxu0 %v907
      %1714 = vmatpush.msra.mxu0 %v904
      %1715 = vmatpush.msra.mxu0 %v901
      %1716 = vmatpush.msra.mxu0 %v898
      %1717 = vmatmul.f32.gmra.mxu0 %v1678
      %v1718 = vpop.f32.mrf.mxu0
      %v1719 = vadd.f32 %v898, %v1718
      %1720 = vmatmul.f32.gmra.mxu0 %v1681
      %v1721 = vpop.f32.mrf.mxu0
      %v1722 = vadd.f32 %v901, %v1721
      %1723 = vmatmul.f32.gmra.mxu0 %v1684
      %v1724 = vpop.f32.mrf.mxu0
      %v1725 = vadd.f32 %v904, %v1724
      %1726 = vmatmul.f32.gmra.mxu0 %v1687
      %v1727 = vpop.f32.mrf.mxu0
      %v1728 = vadd.f32 %v907, %v1727
      %1729 = vmatmul.f32.gmra.mxu0 %v1690
      %v1730 = vpop.f32.mrf.mxu0
      %v1731 = vadd.f32 %v910, %v1730
      %1732 = vmatmul.f32.gmra.mxu0 %v1693
      %v1733 = vpop.f32.mrf.mxu0
      %v1734 = vadd.f32 %v913, %v1733
      %1735 = vmatmul.f32.gmra.mxu0 %v1696
      %v1736 = vpop.f32.mrf.mxu0
      %v1737 = vadd.f32 %v916, %v1736
      %1738 = vmatmul.f32.gmra.mxu0 %v1699
      %v1739 = vpop.f32.mrf.mxu0
      %v1740 = vadd.f32 %v919, %v1739
      %1741 = vdwg.mxu0
      %1743 = vset.pattern.permute.xlu0 0
      %1744 = vperm.xlu0 %1743, %v1563
      %v1745 = vpop.permute.xlu0 %1744
      %1748 = vset.pattern.permute.xlu0 0
      %1749 = vperm.xlu0 %1748, %v1564
      %v1750 = vpop.permute.xlu0 %1749
      %1753 = vset.pattern.permute.xlu0 0
      %1754 = vperm.xlu0 %1753, %v1565
      %v1755 = vpop.permute.xlu0 %1754
      %1758 = vset.pattern.permute.xlu0 0
      %1759 = vperm.xlu0 %1758, %v1566
      %v1760 = vpop.permute.xlu0 %1759
      %1763 = vset.pattern.permute.xlu0 0
      %1764 = vperm.xlu0 %1763, %v1567
      %v1765 = vpop.permute.xlu0 %1764
      %1768 = vset.pattern.permute.xlu0 0
      %1769 = vperm.xlu0 %1768, %v1568
      %v1770 = vpop.permute.xlu0 %1769
      %1773 = vset.pattern.permute.xlu0 0
      %1774 = vperm.xlu0 %1773, %v1569
      %v1775 = vpop.permute.xlu0 %1774
      %1778 = vset.pattern.permute.xlu0 0
      %1779 = vperm.xlu0 %1778, %v1570
      %v1780 = vpop.permute.xlu0 %1779
      %v1782 = vmul.f32 %v1745, %v1622
      %v1783 = vmul.f32 %v1750, %v1625
      %v1784 = vmul.f32 %v1755, %v1628
      %v1785 = vmul.f32 %v1760, %v1631
      %v1786 = vmul.f32 %v1765, %v1634
      %v1787 = vmul.f32 %v1770, %v1637
      %v1788 = vmul.f32 %v1775, %v1640
      %v1789 = vmul.f32 %v1780, %v1643
      %v1790 = vmax.f32 %v1782, 0.0
      %v1791 = vmax.f32 %v1783, 0.0
      %v1792 = vmax.f32 %v1784, 0.0
      %v1793 = vmax.f32 %v1785, 0.0
      %v1794 = vmax.f32 %v1786, 0.0
      %v1795 = vmax.f32 %v1787, 0.0
      %v1796 = vmax.f32 %v1788, 0.0
      %v1797 = vmax.f32 %v1789, 0.0
      %1799 = vset.pattern.permute.xlu0 0
      %1800 = vperm.xlu0 %1799, %v1572
      %v1801 = vpop.permute.xlu0 %1800
      %1804 = vset.pattern.permute.xlu0 0
      %1805 = vperm.xlu0 %1804, %v1573
      %v1806 = vpop.permute.xlu0 %1805
      %1809 = vset.pattern.permute.xlu0 0
      %1810 = vperm.xlu0 %1809, %v1574
      %v1811 = vpop.permute.xlu0 %1810
      %1814 = vset.pattern.permute.xlu0 0
      %1815 = vperm.xlu0 %1814, %v1575
      %v1816 = vpop.permute.xlu0 %1815
      %1819 = vset.pattern.permute.xlu0 0
      %1820 = vperm.xlu0 %1819, %v1576
      %v1821 = vpop.permute.xlu0 %1820
      %1824 = vset.pattern.permute.xlu0 0
      %1825 = vperm.xlu0 %1824, %v1577
      %v1826 = vpop.permute.xlu0 %1825
      %1829 = vset.pattern.permute.xlu0 0
      %1830 = vperm.xlu0 %1829, %v1578
      %v1831 = vpop.permute.xlu0 %1830
      %1834 = vset.pattern.permute.xlu0 0
      %1835 = vperm.xlu0 %1834, %v1579
      %v1836 = vpop.permute.xlu0 %1835
      %v1838 = vmul.f32 %v1801, %v1719
      %v1839 = vmul.f32 %v1806, %v1722
      %v1840 = vmul.f32 %v1811, %v1725
      %v1841 = vmul.f32 %v1816, %v1728
      %v1842 = vmul.f32 %v1821, %v1731
      %v1843 = vmul.f32 %v1826, %v1734
      %v1844 = vmul.f32 %v1831, %v1737
      %v1845 = vmul.f32 %v1836, %v1740
      %v1846 = vmax.f32 %v1838, 0.0
      %v1847 = vmax.f32 %v1839, 0.0
      %v1848 = vmax.f32 %v1840, 0.0
      %v1849 = vmax.f32 %v1841, 0.0
      %v1850 = vmax.f32 %v1842, 0.0
      %v1851 = vmax.f32 %v1843, 0.0
      %v1852 = vmax.f32 %v1844, 0.0
      %v1853 = vmax.f32 %v1845, 0.0
      %1854 = vmatpush.msra.mxu0 0.0
      %1855 = vmatpush.msra.mxu0 0.0
      %1856 = vmatpush.msra.mxu0 0.0
      %1857 = vmatpush.msra.mxu0 0.0
      %1858 = vmatpush.msra.mxu0 0.0
      %1859 = vmatpush.msra.mxu0 0.0
      %1860 = vmatpush.msra.mxu0 0.0
      %1861 = vmatpush.msra.mxu0 0.0
      %1862 = vmatpush.msra.mxu0 %v1797
      %1863 = vmatpush.msra.mxu0 %v1796
      %1864 = vmatpush.msra.mxu0 %v1795
      %1865 = vmatpush.msra.mxu0 %v1794
      %1866 = vmatpush.msra.mxu0 %v1793
      %1867 = vmatpush.msra.mxu0 %v1792
      %1868 = vmatpush.msra.mxu0 %v1791
      %1869 = vmatpush.msra.mxu0 %v1790
      %1870 = vmatmul.f32.gmra.mxu0 %v1581
      %v1871 = vpop.f32.mrf.mxu0
      %v1872 = vadd.f32 %v1790, %v1871
      %1873 = vmatmul.f32.gmra.mxu0 %v1584
      %v1874 = vpop.f32.mrf.mxu0
      %v1875 = vadd.f32 %v1791, %v1874
      %1876 = vmatmul.f32.gmra.mxu0 %v1587
      %v1877 = vpop.f32.mrf.mxu0
      %v1878 = vadd.f32 %v1792, %v1877
      %1879 = vmatmul.f32.gmra.mxu0 %v1590
      %v1880 = vpop.f32.mrf.mxu0
      %v1881 = vadd.f32 %v1793, %v1880
      %1882 = vmatmul.f32.gmra.mxu0 %v1593
      %v1883 = vpop.f32.mrf.mxu0
      %v1884 = vadd.f32 %v1794, %v1883
      %1885 = vmatmul.f32.gmra.mxu0 %v1596
      %v1886 = vpop.f32.mrf.mxu0
      %v1887 = vadd.f32 %v1795, %v1886
      %1888 = vmatmul.f32.gmra.mxu0 %v1599
      %v1889 = vpop.f32.mrf.mxu0
      %v1890 = vadd.f32 %v1796, %v1889
      %1891 = vmatmul.f32.gmra.mxu0 %v1602
      %v1892 = vpop.f32.mrf.mxu0
      %v1893 = vadd.f32 %v1797, %v1892
      %1894 = vdwg.mxu0
      %1895 = vmatpush.msra.mxu0 0.0
      %1896 = vmatpush.msra.mxu0 0.0
      %1897 = vmatpush.msra.mxu0 0.0
      %1898 = vmatpush.msra.mxu0 0.0
      %1899 = vmatpush.msra.mxu0 0.0
      %1900 = vmatpush.msra.mxu0 0.0
      %1901 = vmatpush.msra.mxu0 0.0
      %1902 = vmatpush.msra.mxu0 0.0
      %1903 = vmatpush.msra.mxu0 %v1853
      %1904 = vmatpush.msra.mxu0 %v1852
      %1905 = vmatpush.msra.mxu0 %v1851
      %1906 = vmatpush.msra.mxu0 %v1850
      %1907 = vmatpush.msra.mxu0 %v1849
      %1908 = vmatpush.msra.mxu0 %v1848
      %1909 = vmatpush.msra.mxu0 %v1847
      %1910 = vmatpush.msra.mxu0 %v1846
      %1911 = vmatmul.f32.gmra.mxu0 %v1678
      %v1912 = vpop.f32.mrf.mxu0
      %v1913 = vadd.f32 %v1846, %v1912
      %1914 = vmatmul.f32.gmra.mxu0 %v1681
      %v1915 = vpop.f32.mrf.mxu0
      %v1916 = vadd.f32 %v1847, %v1915
      %1917 = vmatmul.f32.gmra.mxu0 %v1684
      %v1918 = vpop.f32.mrf.mxu0
      %v1919 = vadd.f32 %v1848, %v1918
      %1920 = vmatmul.f32.gmra.mxu0 %v1687
      %v1921 = vpop.f32.mrf.mxu0
      %v1922 = vadd.f32 %v1849, %v1921
      %1923 = vmatmul.f32.gmra.mxu0 %v1690
      %v1924 = vpop.f32.mrf.mxu0
      %v1925 = vadd.f32 %v1850, %v1924
      %1926 = vmatmul.f32.gmra.mxu0 %v1693
      %v1927 = vpop.f32.mrf.mxu0
      %v1928 = vadd.f32 %v1851, %v1927
      %1929 = vmatmul.f32.gmra.mxu0 %v1696
      %v1930 = vpop.f32.mrf.mxu0
      %v1931 = vadd.f32 %v1852, %v1930
      %1932 = vmatmul.f32.gmra.mxu0 %v1699
      %v1933 = vpop.f32.mrf.mxu0
      %v1934 = vadd.f32 %v1853, %v1933
      %1935 = vdwg.mxu0
      %v1937 = vsel %vm1358, %v1913, 0
      %v1940 = vsel %vm1358, %v1916, 0
      %v1943 = vsel %vm1358, %v1919, 0
      %v1946 = vsel %vm1358, %v1922, 0
      %v1949 = vsel %vm1358, %v1925, 0
      %v1952 = vsel %vm1358, %v1928, 0
      %v1955 = vsel %vm1358, %v1931, 0
      %v1958 = vsel %vm1358, %v1934, 0
      %1960 = vmatpush.msra.mxu0 0.0
      %1961 = vmatpush.msra.mxu0 0.0
      %1962 = vmatpush.msra.mxu0 0.0
      %1963 = vmatpush.msra.mxu0 0.0
      %1964 = vmatpush.msra.mxu0 0.0
      %1965 = vmatpush.msra.mxu0 0.0
      %1966 = vmatpush.msra.mxu0 0.0
      %1967 = vmatpush.msra.mxu0 0.0
      %1968 = vmatpush.msra.mxu0 0.0
      %1969 = vmatpush.msra.mxu0 0.0
      %1970 = vmatpush.msra.mxu0 0.0
      %1971 = vmatpush.msra.mxu0 0.0
      %1972 = vmatpush.msra.mxu0 %v976
      %1973 = vmatpush.msra.mxu0 %v975
      %1974 = vmatpush.msra.mxu0 %v974
      %1975 = vmatpush.msra.mxu0 %v973
      %1976 = vmatmul.f32.gmra.mxu0 %v1937
      %v1977 = vpop.f32.mrf.mxu0
      %v1978 = vadd.f32 0.0, %v1977
      %1979 = vmatmul.f32.gmra.mxu0 %v1940
      %v1980 = vpop.f32.mrf.mxu0
      %v1981 = vadd.f32 0.0, %v1980
      %1982 = vmatmul.f32.gmra.mxu0 %v1943
      %v1983 = vpop.f32.mrf.mxu0
      %v1984 = vadd.f32 0.0, %v1983
      %1985 = vmatmul.f32.gmra.mxu0 %v1946
      %v1986 = vpop.f32.mrf.mxu0
      %v1987 = vadd.f32 0.0, %v1986
      %1988 = vmatmul.f32.gmra.mxu0 %v1949
      %v1989 = vpop.f32.mrf.mxu0
      %v1990 = vadd.f32 0.0, %v1989
      %1991 = vmatmul.f32.gmra.mxu0 %v1952
      %v1992 = vpop.f32.mrf.mxu0
      %v1993 = vadd.f32 0.0, %v1992
      %1994 = vmatmul.f32.gmra.mxu0 %v1955
      %v1995 = vpop.f32.mrf.mxu0
      %v1996 = vadd.f32 0.0, %v1995
      %1997 = vmatmul.f32.gmra.mxu0 %v1958
      %v1998 = vpop.f32.mrf.mxu0
      %v1999 = vadd.f32 0.0, %v1998
      %2000 = vdwg.mxu0
      %v2002 = vsel %vm1358, %v1872, 0
      %v2005 = vsel %vm1358, %v1875, 0
      %v2008 = vsel %vm1358, %v1878, 0
      %v2011 = vsel %vm1358, %v1881, 0
      %v2014 = vsel %vm1358, %v1884, 0
      %v2017 = vsel %vm1358, %v1887, 0
      %v2020 = vsel %vm1358, %v1890, 0
      %v2023 = vsel %vm1358, %v1893, 0
      %2025 = vmatpush.msra.mxu0 0.0
      %2026 = vmatpush.msra.mxu0 0.0
      %2027 = vmatpush.msra.mxu0 0.0
      %2028 = vmatpush.msra.mxu0 0.0
      %2029 = vmatpush.msra.mxu0 0.0
      %2030 = vmatpush.msra.mxu0 0.0
      %2031 = vmatpush.msra.mxu0 0.0
      %2032 = vmatpush.msra.mxu0 0.0
      %2033 = vmatpush.msra.mxu0 0.0
      %2034 = vmatpush.msra.mxu0 0.0
      %2035 = vmatpush.msra.mxu0 0.0
      %2036 = vmatpush.msra.mxu0 0.0
      %2037 = vmatpush.msra.mxu0 %v972
      %2038 = vmatpush.msra.mxu0 %v971
      %2039 = vmatpush.msra.mxu0 %v970
      %2040 = vmatpush.msra.mxu0 %v969
      %2041 = vmatmul.f32.gmra.mxu0 %v2002
      %v2042 = vpop.f32.mrf.mxu0
      %v2043 = vadd.f32 %v1978, %v2042
      %2044 = vmatmul.f32.gmra.mxu0 %v2005
      %v2045 = vpop.f32.mrf.mxu0
      %v2046 = vadd.f32 %v1981, %v2045
      %2047 = vmatmul.f32.gmra.mxu0 %v2008
      %v2048 = vpop.f32.mrf.mxu0
      %v2049 = vadd.f32 %v1984, %v2048
      %2050 = vmatmul.f32.gmra.mxu0 %v2011
      %v2051 = vpop.f32.mrf.mxu0
      %v2052 = vadd.f32 %v1987, %v2051
      %2053 = vmatmul.f32.gmra.mxu0 %v2014
      %v2054 = vpop.f32.mrf.mxu0
      %v2055 = vadd.f32 %v1990, %v2054
      %2056 = vmatmul.f32.gmra.mxu0 %v2017
      %v2057 = vpop.f32.mrf.mxu0
      %v2058 = vadd.f32 %v1993, %v2057
      %2059 = vmatmul.f32.gmra.mxu0 %v2020
      %v2060 = vpop.f32.mrf.mxu0
      %v2061 = vadd.f32 %v1996, %v2060
      %2062 = vmatmul.f32.gmra.mxu0 %v2023
      %v2063 = vpop.f32.mrf.mxu0
      %v2064 = vadd.f32 %v1999, %v2063
      %2065 = vdwg.mxu0
      %v2066 = vmul.f32 %v1563, 0.5
      %v2067 = vmul.f32 %v1564, 0.5
      %v2068 = vmul.f32 %v1565, 0.5
      %v2069 = vmul.f32 %v1566, 0.5
      %v2070 = vmul.f32 %v1567, 0.5
      %v2071 = vmul.f32 %v1568, 0.5
      %v2072 = vmul.f32 %v1569, 0.5
      %v2073 = vmul.f32 %v1570, 0.5
      %2075 = vset.pattern.permute.xlu0 0
      %2076 = vperm.xlu0 %2075, %v2066
      %v2077 = vpop.permute.xlu0 %2076
      %2080 = vset.pattern.permute.xlu0 0
      %2081 = vperm.xlu0 %2080, %v2067
      %v2082 = vpop.permute.xlu0 %2081
      %2085 = vset.pattern.permute.xlu0 0
      %2086 = vperm.xlu0 %2085, %v2068
      %v2087 = vpop.permute.xlu0 %2086
      %2090 = vset.pattern.permute.xlu0 0
      %2091 = vperm.xlu0 %2090, %v2069
      %v2092 = vpop.permute.xlu0 %2091
      %2095 = vset.pattern.permute.xlu0 0
      %2096 = vperm.xlu0 %2095, %v2070
      %v2097 = vpop.permute.xlu0 %2096
      %2100 = vset.pattern.permute.xlu0 0
      %2101 = vperm.xlu0 %2100, %v2071
      %v2102 = vpop.permute.xlu0 %2101
      %2105 = vset.pattern.permute.xlu0 0
      %2106 = vperm.xlu0 %2105, %v2072
      %v2107 = vpop.permute.xlu0 %2106
      %2110 = vset.pattern.permute.xlu0 0
      %2111 = vperm.xlu0 %2110, %v2073
      %v2112 = vpop.permute.xlu0 %2111
      %v2114 = vmul.f32 %v2077, %v2043
      %v2115 = vmul.f32 %v2082, %v2046
      %v2116 = vmul.f32 %v2087, %v2049
      %v2117 = vmul.f32 %v2092, %v2052
      %v2118 = vmul.f32 %v2097, %v2055
      %v2119 = vmul.f32 %v2102, %v2058
      %v2120 = vmul.f32 %v2107, %v2061
      %v2121 = vmul.f32 %v2112, %v2064
      %s2122 = scalar_lea.vmem %s387, 64
      %2123 = vst [vmem:[%s2122] sm:$0xff] %v2114
      %2124 = vst [vmem:[%s2122 + $0x8] sm:$0xff] %v2115
      %2125 = vst [vmem:[%s2122 + $0x10] sm:$0xff] %v2116
      %2126 = vst [vmem:[%s2122 + $0x18] sm:$0xff] %v2117
      %2127 = vst [vmem:[%s2122 + $0x20] sm:$0xff] %v2118
      %2128 = vst [vmem:[%s2122 + $0x28] sm:$0xff] %v2119
      %2129 = vst [vmem:[%s2122 + $0x30] sm:$0xff] %v2120
      %2130 = vst [vmem:[%s2122 + $0x38] sm:$0xff] %v2121
      %s2131 = scalar_lea.vmem %s366, 128
      %v2132 = vld [vmem:[%s2131] sm:$0xff]
      %v2133 = vld [vmem:[%s2131 + $0x8] sm:$0xff]
      %v2134 = vld [vmem:[%s2131 + $0x10] sm:$0xff]
      %v2135 = vld [vmem:[%s2131 + $0x18] sm:$0xff]
      %v2136 = vld [vmem:[%s2131 + $0x20] sm:$0xff]
      %v2137 = vld [vmem:[%s2131 + $0x28] sm:$0xff]
      %v2138 = vld [vmem:[%s2131 + $0x30] sm:$0xff]
      %v2139 = vld [vmem:[%s2131 + $0x38] sm:$0xff]
      %s2140 = scalar_lea.vmem %s373, 128
      %v2141 = vld [vmem:[%s2140] sm:$0xff]
      %v2142 = vld [vmem:[%s2140 + $0x8] sm:$0xff]
      %v2143 = vld [vmem:[%s2140 + $0x10] sm:$0xff]
      %v2144 = vld [vmem:[%s2140 + $0x18] sm:$0xff]
      %v2145 = vld [vmem:[%s2140 + $0x20] sm:$0xff]
      %v2146 = vld [vmem:[%s2140 + $0x28] sm:$0xff]
      %v2147 = vld [vmem:[%s2140 + $0x30] sm:$0xff]
      %v2148 = vld [vmem:[%s2140 + $0x38] sm:$0xff]
      %s2149 = scalar_lea.vmem %s380, 128
      %v2150 = vld [vmem:[%s2149] sm:$0xff]
      %v2151 = vld [vmem:[%s2149 + $0x8] sm:$0xff]
      %v2152 = vld [vmem:[%s2149 + $0x10] sm:$0xff]
      %v2153 = vld [vmem:[%s2149 + $0x18] sm:$0xff]
      %v2154 = vld [vmem:[%s2149 + $0x20] sm:$0xff]
      %v2155 = vld [vmem:[%s2149 + $0x28] sm:$0xff]
      %v2156 = vld [vmem:[%s2149 + $0x30] sm:$0xff]
      %v2157 = vld [vmem:[%s2149 + $0x38] sm:$0xff]
      %v2159 = vsel %vm1001, %v2132, 0
      %v2162 = vsel %vm1001, %v2133, 0
      %v2165 = vsel %vm1001, %v2134, 0
      %v2168 = vsel %vm1001, %v2135, 0
      %v2171 = vsel %vm1001, %v2136, 0
      %v2174 = vsel %vm1001, %v2137, 0
      %v2177 = vsel %vm1001, %v2138, 0
      %v2180 = vsel %vm1001, %v2139, 0
      %2182 = vmatpush.msra.mxu0 0.0
      %2183 = vmatpush.msra.mxu0 0.0
      %2184 = vmatpush.msra.mxu0 0.0
      %2185 = vmatpush.msra.mxu0 0.0
      %2186 = vmatpush.msra.mxu0 0.0
      %2187 = vmatpush.msra.mxu0 0.0
      %2188 = vmatpush.msra.mxu0 0.0
      %2189 = vmatpush.msra.mxu0 0.0
      %2190 = vmatpush.msra.mxu0 %v685
      %2191 = vmatpush.msra.mxu0 %v682
      %2192 = vmatpush.msra.mxu0 %v679
      %2193 = vmatpush.msra.mxu0 %v676
      %2194 = vmatpush.msra.mxu0 %v673
      %2195 = vmatpush.msra.mxu0 %v670
      %2196 = vmatpush.msra.mxu0 %v667
      %2197 = vmatpush.msra.mxu0 %v664
      %2198 = vmatmul.f32.gmra.mxu0 %v2159
      %v2199 = vpop.f32.mrf.mxu0
      %v2200 = vadd.f32 %v664, %v2199
      %2201 = vmatmul.f32.gmra.mxu0 %v2162
      %v2202 = vpop.f32.mrf.mxu0
      %v2203 = vadd.f32 %v667, %v2202
      %2204 = vmatmul.f32.gmra.mxu0 %v2165
      %v2205 = vpop.f32.mrf.mxu0
      %v2206 = vadd.f32 %v670, %v2205
      %2207 = vmatmul.f32.gmra.mxu0 %v2168
      %v2208 = vpop.f32.mrf.mxu0
      %v2209 = vadd.f32 %v673, %v2208
      %2210 = vmatmul.f32.gmra.mxu0 %v2171
      %v2211 = vpop.f32.mrf.mxu0
      %v2212 = vadd.f32 %v676, %v2211
      %2213 = vmatmul.f32.gmra.mxu0 %v2174
      %v2214 = vpop.f32.mrf.mxu0
      %v2215 = vadd.f32 %v679, %v2214
      %2216 = vmatmul.f32.gmra.mxu0 %v2177
      %v2217 = vpop.f32.mrf.mxu0
      %v2218 = vadd.f32 %v682, %v2217
      %2219 = vmatmul.f32.gmra.mxu0 %v2180
      %v2220 = vpop.f32.mrf.mxu0
      %v2221 = vadd.f32 %v685, %v2220
      %2222 = vdwg.mxu0
      %2223 = vxpose.xlu0.b32.start [1/16] %v2132, 128
      %2224 = vxpose.xlu0.b32.cont [2/16] %v2133, 128
      %2225 = vxpose.xlu0.b32.cont [3/16] %v2134, 128
      %2226 = vxpose.xlu0.b32.cont [4/16] %v2135, 128
      %2227 = vxpose.xlu0.b32.cont [5/16] %v2136, 128
      %2228 = vxpose.xlu0.b32.cont [6/16] %v2137, 128
      %2229 = vxpose.xlu0.b32.cont [7/16] %v2138, 128
      %2230 = vxpose.xlu0.b32.cont [8/16] %v2139, 128
      %2231 = vxpose.xlu0.b32.cont [9/16] 0.0, 128
      %2232 = vxpose.xlu0.b32.cont [10/16] 0.0, 128
      %2233 = vxpose.xlu0.b32.cont [11/16] 0.0, 128
      %2234 = vxpose.xlu0.b32.cont [12/16] 0.0, 128
      %2235 = vxpose.xlu0.b32.cont [13/16] 0.0, 128
      %2236 = vxpose.xlu0.b32.cont [14/16] 0.0, 128
      %2237 = vxpose.xlu0.b32.cont [15/16] 0.0, 128
      %2238 = vxpose.xlu0.b32.end [16/16] 0.0, 128
      %v2239 = vpop.trf.xlu0
      %v2240 = vpop.trf.xlu0
      %v2241 = vpop.trf.xlu0
      %v2242 = vpop.trf.xlu0
      %v2243 = vpop.trf.xlu0
      %v2244 = vpop.trf.xlu0
      %v2245 = vpop.trf.xlu0
      %v2246 = vpop.trf.xlu0
      %v2247 = vpop.trf.xlu0
      %v2248 = vpop.trf.xlu0
      %v2249 = vpop.trf.xlu0
      %v2250 = vpop.trf.xlu0
      %v2251 = vpop.trf.xlu0
      %v2252 = vpop.trf.xlu0
      %v2253 = vpop.trf.xlu0
      %v2254 = vpop.trf.xlu0
      %v2256 = vsel %vm1001, %v2239, 0
      %v2259 = vsel %vm1001, %v2240, 0
      %v2262 = vsel %vm1001, %v2241, 0
      %v2265 = vsel %vm1001, %v2242, 0
      %v2268 = vsel %vm1001, %v2243, 0
      %v2271 = vsel %vm1001, %v2244, 0
      %v2274 = vsel %vm1001, %v2245, 0
      %v2277 = vsel %vm1001, %v2246, 0
      %2279 = vmatpush.msra.mxu0 0.0
      %2280 = vmatpush.msra.mxu0 0.0
      %2281 = vmatpush.msra.mxu0 0.0
      %2282 = vmatpush.msra.mxu0 0.0
      %2283 = vmatpush.msra.mxu0 0.0
      %2284 = vmatpush.msra.mxu0 0.0
      %2285 = vmatpush.msra.mxu0 0.0
      %2286 = vmatpush.msra.mxu0 0.0
      %2287 = vmatpush.msra.mxu0 %v943
      %2288 = vmatpush.msra.mxu0 %v940
      %2289 = vmatpush.msra.mxu0 %v937
      %2290 = vmatpush.msra.mxu0 %v934
      %2291 = vmatpush.msra.mxu0 %v931
      %2292 = vmatpush.msra.mxu0 %v928
      %2293 = vmatpush.msra.mxu0 %v925
      %2294 = vmatpush.msra.mxu0 %v922
      %2295 = vmatmul.f32.gmra.mxu0 %v2256
      %v2296 = vpop.f32.mrf.mxu0
      %v2297 = vadd.f32 %v922, %v2296
      %2298 = vmatmul.f32.gmra.mxu0 %v2259
      %v2299 = vpop.f32.mrf.mxu0
      %v2300 = vadd.f32 %v925, %v2299
      %2301 = vmatmul.f32.gmra.mxu0 %v2262
      %v2302 = vpop.f32.mrf.mxu0
      %v2303 = vadd.f32 %v928, %v2302
      %2304 = vmatmul.f32.gmra.mxu0 %v2265
      %v2305 = vpop.f32.mrf.mxu0
      %v2306 = vadd.f32 %v931, %v2305
      %2307 = vmatmul.f32.gmra.mxu0 %v2268
      %v2308 = vpop.f32.mrf.mxu0
      %v2309 = vadd.f32 %v934, %v2308
      %2310 = vmatmul.f32.gmra.mxu0 %v2271
      %v2311 = vpop.f32.mrf.mxu0
      %v2312 = vadd.f32 %v937, %v2311
      %2313 = vmatmul.f32.gmra.mxu0 %v2274
      %v2314 = vpop.f32.mrf.mxu0
      %v2315 = vadd.f32 %v940, %v2314
      %2316 = vmatmul.f32.gmra.mxu0 %v2277
      %v2317 = vpop.f32.mrf.mxu0
      %v2318 = vadd.f32 %v943, %v2317
      %2319 = vdwg.mxu0
      %2321 = vset.pattern.permute.xlu0 0
      %2322 = vperm.xlu0 %2321, %v2141
      %v2323 = vpop.permute.xlu0 %2322
      %2326 = vset.pattern.permute.xlu0 0
      %2327 = vperm.xlu0 %2326, %v2142
      %v2328 = vpop.permute.xlu0 %2327
      %2331 = vset.pattern.permute.xlu0 0
      %2332 = vperm.xlu0 %2331, %v2143
      %v2333 = vpop.permute.xlu0 %2332
      %2336 = vset.pattern.permute.xlu0 0
      %2337 = vperm.xlu0 %2336, %v2144
      %v2338 = vpop.permute.xlu0 %2337
      %2341 = vset.pattern.permute.xlu0 0
      %2342 = vperm.xlu0 %2341, %v2145
      %v2343 = vpop.permute.xlu0 %2342
      %2346 = vset.pattern.permute.xlu0 0
      %2347 = vperm.xlu0 %2346, %v2146
      %v2348 = vpop.permute.xlu0 %2347
      %2351 = vset.pattern.permute.xlu0 0
      %2352 = vperm.xlu0 %2351, %v2147
      %v2353 = vpop.permute.xlu0 %2352
      %2356 = vset.pattern.permute.xlu0 0
      %2357 = vperm.xlu0 %2356, %v2148
      %v2358 = vpop.permute.xlu0 %2357
      %v2360 = vmul.f32 %v2323, %v2200
      %v2361 = vmul.f32 %v2328, %v2203
      %v2362 = vmul.f32 %v2333, %v2206
      %v2363 = vmul.f32 %v2338, %v2209
      %v2364 = vmul.f32 %v2343, %v2212
      %v2365 = vmul.f32 %v2348, %v2215
      %v2366 = vmul.f32 %v2353, %v2218
      %v2367 = vmul.f32 %v2358, %v2221
      %v2368 = vmax.f32 %v2360, 0.0
      %v2369 = vmax.f32 %v2361, 0.0
      %v2370 = vmax.f32 %v2362, 0.0
      %v2371 = vmax.f32 %v2363, 0.0
      %v2372 = vmax.f32 %v2364, 0.0
      %v2373 = vmax.f32 %v2365, 0.0
      %v2374 = vmax.f32 %v2366, 0.0
      %v2375 = vmax.f32 %v2367, 0.0
      %2377 = vset.pattern.permute.xlu0 0
      %2378 = vperm.xlu0 %2377, %v2150
      %v2379 = vpop.permute.xlu0 %2378
      %2382 = vset.pattern.permute.xlu0 0
      %2383 = vperm.xlu0 %2382, %v2151
      %v2384 = vpop.permute.xlu0 %2383
      %2387 = vset.pattern.permute.xlu0 0
      %2388 = vperm.xlu0 %2387, %v2152
      %v2389 = vpop.permute.xlu0 %2388
      %2392 = vset.pattern.permute.xlu0 0
      %2393 = vperm.xlu0 %2392, %v2153
      %v2394 = vpop.permute.xlu0 %2393
      %2397 = vset.pattern.permute.xlu0 0
      %2398 = vperm.xlu0 %2397, %v2154
      %v2399 = vpop.permute.xlu0 %2398
      %2402 = vset.pattern.permute.xlu0 0
      %2403 = vperm.xlu0 %2402, %v2155
      %v2404 = vpop.permute.xlu0 %2403
      %2407 = vset.pattern.permute.xlu0 0
      %2408 = vperm.xlu0 %2407, %v2156
      %v2409 = vpop.permute.xlu0 %2408
      %2412 = vset.pattern.permute.xlu0 0
      %2413 = vperm.xlu0 %2412, %v2157
      %v2414 = vpop.permute.xlu0 %2413
      %v2416 = vmul.f32 %v2379, %v2297
      %v2417 = vmul.f32 %v2384, %v2300
      %v2418 = vmul.f32 %v2389, %v2303
      %v2419 = vmul.f32 %v2394, %v2306
      %v2420 = vmul.f32 %v2399, %v2309
      %v2421 = vmul.f32 %v2404, %v2312
      %v2422 = vmul.f32 %v2409, %v2315
      %v2423 = vmul.f32 %v2414, %v2318
      %v2424 = vmax.f32 %v2416, 0.0
      %v2425 = vmax.f32 %v2417, 0.0
      %v2426 = vmax.f32 %v2418, 0.0
      %v2427 = vmax.f32 %v2419, 0.0
      %v2428 = vmax.f32 %v2420, 0.0
      %v2429 = vmax.f32 %v2421, 0.0
      %v2430 = vmax.f32 %v2422, 0.0
      %v2431 = vmax.f32 %v2423, 0.0
      %2432 = vmatpush.msra.mxu0 0.0
      %2433 = vmatpush.msra.mxu0 0.0
      %2434 = vmatpush.msra.mxu0 0.0
      %2435 = vmatpush.msra.mxu0 0.0
      %2436 = vmatpush.msra.mxu0 0.0
      %2437 = vmatpush.msra.mxu0 0.0
      %2438 = vmatpush.msra.mxu0 0.0
      %2439 = vmatpush.msra.mxu0 0.0
      %2440 = vmatpush.msra.mxu0 %v2375
      %2441 = vmatpush.msra.mxu0 %v2374
      %2442 = vmatpush.msra.mxu0 %v2373
      %2443 = vmatpush.msra.mxu0 %v2372
      %2444 = vmatpush.msra.mxu0 %v2371
      %2445 = vmatpush.msra.mxu0 %v2370
      %2446 = vmatpush.msra.mxu0 %v2369
      %2447 = vmatpush.msra.mxu0 %v2368
      %2448 = vmatmul.f32.gmra.mxu0 %v2159
      %v2449 = vpop.f32.mrf.mxu0
      %v2450 = vadd.f32 %v2368, %v2449
      %2451 = vmatmul.f32.gmra.mxu0 %v2162
      %v2452 = vpop.f32.mrf.mxu0
      %v2453 = vadd.f32 %v2369, %v2452
      %2454 = vmatmul.f32.gmra.mxu0 %v2165
      %v2455 = vpop.f32.mrf.mxu0
      %v2456 = vadd.f32 %v2370, %v2455
      %2457 = vmatmul.f32.gmra.mxu0 %v2168
      %v2458 = vpop.f32.mrf.mxu0
      %v2459 = vadd.f32 %v2371, %v2458
      %2460 = vmatmul.f32.gmra.mxu0 %v2171
      %v2461 = vpop.f32.mrf.mxu0
      %v2462 = vadd.f32 %v2372, %v2461
      %2463 = vmatmul.f32.gmra.mxu0 %v2174
      %v2464 = vpop.f32.mrf.mxu0
      %v2465 = vadd.f32 %v2373, %v2464
      %2466 = vmatmul.f32.gmra.mxu0 %v2177
      %v2467 = vpop.f32.mrf.mxu0
      %v2468 = vadd.f32 %v2374, %v2467
      %2469 = vmatmul.f32.gmra.mxu0 %v2180
      %v2470 = vpop.f32.mrf.mxu0
      %v2471 = vadd.f32 %v2375, %v2470
      %2472 = vdwg.mxu0
      %2473 = vmatpush.msra.mxu0 0.0
      %2474 = vmatpush.msra.mxu0 0.0
      %2475 = vmatpush.msra.mxu0 0.0
      %2476 = vmatpush.msra.mxu0 0.0
      %2477 = vmatpush.msra.mxu0 0.0
      %2478 = vmatpush.msra.mxu0 0.0
      %2479 = vmatpush.msra.mxu0 0.0
      %2480 = vmatpush.msra.mxu0 0.0
      %2481 = vmatpush.msra.mxu0 %v2431
      %2482 = vmatpush.msra.mxu0 %v2430
      %2483 = vmatpush.msra.mxu0 %v2429
      %2484 = vmatpush.msra.mxu0 %v2428
      %2485 = vmatpush.msra.mxu0 %v2427
      %2486 = vmatpush.msra.mxu0 %v2426
      %2487 = vmatpush.msra.mxu0 %v2425
      %2488 = vmatpush.msra.mxu0 %v2424
      %2489 = vmatmul.f32.gmra.mxu0 %v2256
      %v2490 = vpop.f32.mrf.mxu0
      %v2491 = vadd.f32 %v2424, %v2490
      %2492 = vmatmul.f32.gmra.mxu0 %v2259
      %v2493 = vpop.f32.mrf.mxu0
      %v2494 = vadd.f32 %v2425, %v2493
      %2495 = vmatmul.f32.gmra.mxu0 %v2262
      %v2496 = vpop.f32.mrf.mxu0
      %v2497 = vadd.f32 %v2426, %v2496
      %2498 = vmatmul.f32.gmra.mxu0 %v2265
      %v2499 = vpop.f32.mrf.mxu0
      %v2500 = vadd.f32 %v2427, %v2499
      %2501 = vmatmul.f32.gmra.mxu0 %v2268
      %v2502 = vpop.f32.mrf.mxu0
      %v2503 = vadd.f32 %v2428, %v2502
      %2504 = vmatmul.f32.gmra.mxu0 %v2271
      %v2505 = vpop.f32.mrf.mxu0
      %v2506 = vadd.f32 %v2429, %v2505
      %2507 = vmatmul.f32.gmra.mxu0 %v2274
      %v2508 = vpop.f32.mrf.mxu0
      %v2509 = vadd.f32 %v2430, %v2508
      %2510 = vmatmul.f32.gmra.mxu0 %v2277
      %v2511 = vpop.f32.mrf.mxu0
      %v2512 = vadd.f32 %v2431, %v2511
      %2513 = vdwg.mxu0
      %v2515 = vsel %vm1358, %v2491, 0
      %v2518 = vsel %vm1358, %v2494, 0
      %v2521 = vsel %vm1358, %v2497, 0
      %v2524 = vsel %vm1358, %v2500, 0
      %v2527 = vsel %vm1358, %v2503, 0
      %v2530 = vsel %vm1358, %v2506, 0
      %v2533 = vsel %vm1358, %v2509, 0
      %v2536 = vsel %vm1358, %v2512, 0
      %2538 = vmatpush.msra.mxu0 0.0
      %2539 = vmatpush.msra.mxu0 0.0
      %2540 = vmatpush.msra.mxu0 0.0
      %2541 = vmatpush.msra.mxu0 0.0
      %2542 = vmatpush.msra.mxu0 0.0
      %2543 = vmatpush.msra.mxu0 0.0
      %2544 = vmatpush.msra.mxu0 0.0
      %2545 = vmatpush.msra.mxu0 0.0
      %2546 = vmatpush.msra.mxu0 0.0
      %2547 = vmatpush.msra.mxu0 0.0
      %2548 = vmatpush.msra.mxu0 0.0
      %2549 = vmatpush.msra.mxu0 0.0
      %2550 = vmatpush.msra.mxu0 %v976
      %2551 = vmatpush.msra.mxu0 %v975
      %2552 = vmatpush.msra.mxu0 %v974
      %2553 = vmatpush.msra.mxu0 %v973
      %2554 = vmatmul.f32.gmra.mxu0 %v2515
      %v2555 = vpop.f32.mrf.mxu0
      %v2556 = vadd.f32 0.0, %v2555
      %2557 = vmatmul.f32.gmra.mxu0 %v2518
      %v2558 = vpop.f32.mrf.mxu0
      %v2559 = vadd.f32 0.0, %v2558
      %2560 = vmatmul.f32.gmra.mxu0 %v2521
      %v2561 = vpop.f32.mrf.mxu0
      %v2562 = vadd.f32 0.0, %v2561
      %2563 = vmatmul.f32.gmra.mxu0 %v2524
      %v2564 = vpop.f32.mrf.mxu0
      %v2565 = vadd.f32 0.0, %v2564
      %2566 = vmatmul.f32.gmra.mxu0 %v2527
      %v2567 = vpop.f32.mrf.mxu0
      %v2568 = vadd.f32 0.0, %v2567
      %2569 = vmatmul.f32.gmra.mxu0 %v2530
      %v2570 = vpop.f32.mrf.mxu0
      %v2571 = vadd.f32 0.0, %v2570
      %2572 = vmatmul.f32.gmra.mxu0 %v2533
      %v2573 = vpop.f32.mrf.mxu0
      %v2574 = vadd.f32 0.0, %v2573
      %2575 = vmatmul.f32.gmra.mxu0 %v2536
      %v2576 = vpop.f32.mrf.mxu0
      %v2577 = vadd.f32 0.0, %v2576
      %2578 = vdwg.mxu0
      %v2580 = vsel %vm1358, %v2450, 0
      %v2583 = vsel %vm1358, %v2453, 0
      %v2586 = vsel %vm1358, %v2456, 0
      %v2589 = vsel %vm1358, %v2459, 0
      %v2592 = vsel %vm1358, %v2462, 0
      %v2595 = vsel %vm1358, %v2465, 0
      %v2598 = vsel %vm1358, %v2468, 0
      %v2601 = vsel %vm1358, %v2471, 0
      %2603 = vmatpush.msra.mxu0 0.0
      %2604 = vmatpush.msra.mxu0 0.0
      %2605 = vmatpush.msra.mxu0 0.0
      %2606 = vmatpush.msra.mxu0 0.0
      %2607 = vmatpush.msra.mxu0 0.0
      %2608 = vmatpush.msra.mxu0 0.0
      %2609 = vmatpush.msra.mxu0 0.0
      %2610 = vmatpush.msra.mxu0 0.0
      %2611 = vmatpush.msra.mxu0 0.0
      %2612 = vmatpush.msra.mxu0 0.0
      %2613 = vmatpush.msra.mxu0 0.0
      %2614 = vmatpush.msra.mxu0 0.0
      %2615 = vmatpush.msra.mxu0 %v972
      %2616 = vmatpush.msra.mxu0 %v971
      %2617 = vmatpush.msra.mxu0 %v970
      %2618 = vmatpush.msra.mxu0 %v969
      %2619 = vmatmul.f32.gmra.mxu0 %v2580
      %v2620 = vpop.f32.mrf.mxu0
      %v2621 = vadd.f32 %v2556, %v2620
      %2622 = vmatmul.f32.gmra.mxu0 %v2583
      %v2623 = vpop.f32.mrf.mxu0
      %v2624 = vadd.f32 %v2559, %v2623
      %2625 = vmatmul.f32.gmra.mxu0 %v2586
      %v2626 = vpop.f32.mrf.mxu0
      %v2627 = vadd.f32 %v2562, %v2626
      %2628 = vmatmul.f32.gmra.mxu0 %v2589
      %v2629 = vpop.f32.mrf.mxu0
      %v2630 = vadd.f32 %v2565, %v2629
      %2631 = vmatmul.f32.gmra.mxu0 %v2592
      %v2632 = vpop.f32.mrf.mxu0
      %v2633 = vadd.f32 %v2568, %v2632
      %2634 = vmatmul.f32.gmra.mxu0 %v2595
      %v2635 = vpop.f32.mrf.mxu0
      %v2636 = vadd.f32 %v2571, %v2635
      %2637 = vmatmul.f32.gmra.mxu0 %v2598
      %v2638 = vpop.f32.mrf.mxu0
      %v2639 = vadd.f32 %v2574, %v2638
      %2640 = vmatmul.f32.gmra.mxu0 %v2601
      %v2641 = vpop.f32.mrf.mxu0
      %v2642 = vadd.f32 %v2577, %v2641
      %2643 = vdwg.mxu0
      %v2644 = vmul.f32 %v2141, 0.5
      %v2645 = vmul.f32 %v2142, 0.5
      %v2646 = vmul.f32 %v2143, 0.5
      %v2647 = vmul.f32 %v2144, 0.5
      %v2648 = vmul.f32 %v2145, 0.5
      %v2649 = vmul.f32 %v2146, 0.5
      %v2650 = vmul.f32 %v2147, 0.5
      %v2651 = vmul.f32 %v2148, 0.5
      %2653 = vset.pattern.permute.xlu0 0
      %2654 = vperm.xlu0 %2653, %v2644
      %v2655 = vpop.permute.xlu0 %2654
      %2658 = vset.pattern.permute.xlu0 0
      %2659 = vperm.xlu0 %2658, %v2645
      %v2660 = vpop.permute.xlu0 %2659
      %2663 = vset.pattern.permute.xlu0 0
      %2664 = vperm.xlu0 %2663, %v2646
      %v2665 = vpop.permute.xlu0 %2664
      %2668 = vset.pattern.permute.xlu0 0
      %2669 = vperm.xlu0 %2668, %v2647
      %v2670 = vpop.permute.xlu0 %2669
      %2673 = vset.pattern.permute.xlu0 0
      %2674 = vperm.xlu0 %2673, %v2648
      %v2675 = vpop.permute.xlu0 %2674
      %2678 = vset.pattern.permute.xlu0 0
      %2679 = vperm.xlu0 %2678, %v2649
      %v2680 = vpop.permute.xlu0 %2679
      %2683 = vset.pattern.permute.xlu0 0
      %2684 = vperm.xlu0 %2683, %v2650
      %v2685 = vpop.permute.xlu0 %2684
      %2688 = vset.pattern.permute.xlu0 0
      %2689 = vperm.xlu0 %2688, %v2651
      %v2690 = vpop.permute.xlu0 %2689
      %v2692 = vmul.f32 %v2655, %v2621
      %v2693 = vmul.f32 %v2660, %v2624
      %v2694 = vmul.f32 %v2665, %v2627
      %v2695 = vmul.f32 %v2670, %v2630
      %v2696 = vmul.f32 %v2675, %v2633
      %v2697 = vmul.f32 %v2680, %v2636
      %v2698 = vmul.f32 %v2685, %v2639
      %v2699 = vmul.f32 %v2690, %v2642
      %s2700 = scalar_lea.vmem %s387, 128
      %2701 = vst [vmem:[%s2700] sm:$0xff] %v2692
      %2702 = vst [vmem:[%s2700 + $0x8] sm:$0xff] %v2693
      %2703 = vst [vmem:[%s2700 + $0x10] sm:$0xff] %v2694
      %2704 = vst [vmem:[%s2700 + $0x18] sm:$0xff] %v2695
      %2705 = vst [vmem:[%s2700 + $0x20] sm:$0xff] %v2696
      %2706 = vst [vmem:[%s2700 + $0x28] sm:$0xff] %v2697
      %2707 = vst [vmem:[%s2700 + $0x30] sm:$0xff] %v2698
      %2708 = vst [vmem:[%s2700 + $0x38] sm:$0xff] %v2699
      %s2709 = scalar_lea.vmem %s366, 192
      %v2710 = vld [vmem:[%s2709] sm:$0xff]
      %v2711 = vld [vmem:[%s2709 + $0x8] sm:$0xff]
      %v2712 = vld [vmem:[%s2709 + $0x10] sm:$0xff]
      %v2713 = vld [vmem:[%s2709 + $0x18] sm:$0xff]
      %v2714 = vld [vmem:[%s2709 + $0x20] sm:$0xff]
      %v2715 = vld [vmem:[%s2709 + $0x28] sm:$0xff]
      %v2716 = vld [vmem:[%s2709 + $0x30] sm:$0xff]
      %v2717 = vld [vmem:[%s2709 + $0x38] sm:$0xff]
      %s2718 = scalar_lea.vmem %s373, 192
      %v2719 = vld [vmem:[%s2718] sm:$0xff]
      %v2720 = vld [vmem:[%s2718 + $0x8] sm:$0xff]
      %v2721 = vld [vmem:[%s2718 + $0x10] sm:$0xff]
      %v2722 = vld [vmem:[%s2718 + $0x18] sm:$0xff]
      %v2723 = vld [vmem:[%s2718 + $0x20] sm:$0xff]
      %v2724 = vld [vmem:[%s2718 + $0x28] sm:$0xff]
      %v2725 = vld [vmem:[%s2718 + $0x30] sm:$0xff]
      %v2726 = vld [vmem:[%s2718 + $0x38] sm:$0xff]
      %s2727 = scalar_lea.vmem %s380, 192
      %v2728 = vld [vmem:[%s2727] sm:$0xff]
      %v2729 = vld [vmem:[%s2727 + $0x8] sm:$0xff]
      %v2730 = vld [vmem:[%s2727 + $0x10] sm:$0xff]
      %v2731 = vld [vmem:[%s2727 + $0x18] sm:$0xff]
      %v2732 = vld [vmem:[%s2727 + $0x20] sm:$0xff]
      %v2733 = vld [vmem:[%s2727 + $0x28] sm:$0xff]
      %v2734 = vld [vmem:[%s2727 + $0x30] sm:$0xff]
      %v2735 = vld [vmem:[%s2727 + $0x38] sm:$0xff]
      %v2737 = vsel %vm1001, %v2710, 0
      %v2740 = vsel %vm1001, %v2711, 0
      %v2743 = vsel %vm1001, %v2712, 0
      %v2746 = vsel %vm1001, %v2713, 0
      %v2749 = vsel %vm1001, %v2714, 0
      %v2752 = vsel %vm1001, %v2715, 0
      %v2755 = vsel %vm1001, %v2716, 0
      %v2758 = vsel %vm1001, %v2717, 0
      %2760 = vmatpush.msra.mxu0 0.0
      %2761 = vmatpush.msra.mxu0 0.0
      %2762 = vmatpush.msra.mxu0 0.0
      %2763 = vmatpush.msra.mxu0 0.0
      %2764 = vmatpush.msra.mxu0 0.0
      %2765 = vmatpush.msra.mxu0 0.0
      %2766 = vmatpush.msra.mxu0 0.0
      %2767 = vmatpush.msra.mxu0 0.0
      %2768 = vmatpush.msra.mxu0 %v709
      %2769 = vmatpush.msra.mxu0 %v706
      %2770 = vmatpush.msra.mxu0 %v703
      %2771 = vmatpush.msra.mxu0 %v700
      %2772 = vmatpush.msra.mxu0 %v697
      %2773 = vmatpush.msra.mxu0 %v694
      %2774 = vmatpush.msra.mxu0 %v691
      %2775 = vmatpush.msra.mxu0 %v688
      %2776 = vmatmul.f32.gmra.mxu0 %v2737
      %v2777 = vpop.f32.mrf.mxu0
      %v2778 = vadd.f32 %v688, %v2777
      %2779 = vmatmul.f32.gmra.mxu0 %v2740
      %v2780 = vpop.f32.mrf.mxu0
      %v2781 = vadd.f32 %v691, %v2780
      %2782 = vmatmul.f32.gmra.mxu0 %v2743
      %v2783 = vpop.f32.mrf.mxu0
      %v2784 = vadd.f32 %v694, %v2783
      %2785 = vmatmul.f32.gmra.mxu0 %v2746
      %v2786 = vpop.f32.mrf.mxu0
      %v2787 = vadd.f32 %v697, %v2786
      %2788 = vmatmul.f32.gmra.mxu0 %v2749
      %v2789 = vpop.f32.mrf.mxu0
      %v2790 = vadd.f32 %v700, %v2789
      %2791 = vmatmul.f32.gmra.mxu0 %v2752
      %v2792 = vpop.f32.mrf.mxu0
      %v2793 = vadd.f32 %v703, %v2792
      %2794 = vmatmul.f32.gmra.mxu0 %v2755
      %v2795 = vpop.f32.mrf.mxu0
      %v2796 = vadd.f32 %v706, %v2795
      %2797 = vmatmul.f32.gmra.mxu0 %v2758
      %v2798 = vpop.f32.mrf.mxu0
      %v2799 = vadd.f32 %v709, %v2798
      %2800 = vdwg.mxu0
      %2801 = vxpose.xlu0.b32.start [1/16] %v2710, 128
      %2802 = vxpose.xlu0.b32.cont [2/16] %v2711, 128
      %2803 = vxpose.xlu0.b32.cont [3/16] %v2712, 128
      %2804 = vxpose.xlu0.b32.cont [4/16] %v2713, 128
      %2805 = vxpose.xlu0.b32.cont [5/16] %v2714, 128
      %2806 = vxpose.xlu0.b32.cont [6/16] %v2715, 128
      %2807 = vxpose.xlu0.b32.cont [7/16] %v2716, 128
      %2808 = vxpose.xlu0.b32.cont [8/16] %v2717, 128
      %2809 = vxpose.xlu0.b32.cont [9/16] 0.0, 128
      %2810 = vxpose.xlu0.b32.cont [10/16] 0.0, 128
      %2811 = vxpose.xlu0.b32.cont [11/16] 0.0, 128
      %2812 = vxpose.xlu0.b32.cont [12/16] 0.0, 128
      %2813 = vxpose.xlu0.b32.cont [13/16] 0.0, 128
      %2814 = vxpose.xlu0.b32.cont [14/16] 0.0, 128
      %2815 = vxpose.xlu0.b32.cont [15/16] 0.0, 128
      %2816 = vxpose.xlu0.b32.end [16/16] 0.0, 128
      %v2817 = vpop.trf.xlu0
      %v2818 = vpop.trf.xlu0
      %v2819 = vpop.trf.xlu0
      %v2820 = vpop.trf.xlu0
      %v2821 = vpop.trf.xlu0
      %v2822 = vpop.trf.xlu0
      %v2823 = vpop.trf.xlu0
      %v2824 = vpop.trf.xlu0
      %v2825 = vpop.trf.xlu0
      %v2826 = vpop.trf.xlu0
      %v2827 = vpop.trf.xlu0
      %v2828 = vpop.trf.xlu0
      %v2829 = vpop.trf.xlu0
      %v2830 = vpop.trf.xlu0
      %v2831 = vpop.trf.xlu0
      %v2832 = vpop.trf.xlu0
      %v2834 = vsel %vm1001, %v2817, 0
      %v2837 = vsel %vm1001, %v2818, 0
      %v2840 = vsel %vm1001, %v2819, 0
      %v2843 = vsel %vm1001, %v2820, 0
      %v2846 = vsel %vm1001, %v2821, 0
      %v2849 = vsel %vm1001, %v2822, 0
      %v2852 = vsel %vm1001, %v2823, 0
      %v2855 = vsel %vm1001, %v2824, 0
      %2857 = vmatpush.msra.mxu0 0.0
      %2858 = vmatpush.msra.mxu0 0.0
      %2859 = vmatpush.msra.mxu0 0.0
      %2860 = vmatpush.msra.mxu0 0.0
      %2861 = vmatpush.msra.mxu0 0.0
      %2862 = vmatpush.msra.mxu0 0.0
      %2863 = vmatpush.msra.mxu0 0.0
      %2864 = vmatpush.msra.mxu0 0.0
      %2865 = vmatpush.msra.mxu0 %v967
      %2866 = vmatpush.msra.mxu0 %v964
      %2867 = vmatpush.msra.mxu0 %v961
      %2868 = vmatpush.msra.mxu0 %v958
      %2869 = vmatpush.msra.mxu0 %v955
      %2870 = vmatpush.msra.mxu0 %v952
      %2871 = vmatpush.msra.mxu0 %v949
      %2872 = vmatpush.msra.mxu0 %v946
      %2873 = vmatmul.f32.gmra.mxu0 %v2834
      %v2874 = vpop.f32.mrf.mxu0
      %v2875 = vadd.f32 %v946, %v2874
      %2876 = vmatmul.f32.gmra.mxu0 %v2837
      %v2877 = vpop.f32.mrf.mxu0
      %v2878 = vadd.f32 %v949, %v2877
      %2879 = vmatmul.f32.gmra.mxu0 %v2840
      %v2880 = vpop.f32.mrf.mxu0
      %v2881 = vadd.f32 %v952, %v2880
      %2882 = vmatmul.f32.gmra.mxu0 %v2843
      %v2883 = vpop.f32.mrf.mxu0
      %v2884 = vadd.f32 %v955, %v2883
      %2885 = vmatmul.f32.gmra.mxu0 %v2846
      %v2886 = vpop.f32.mrf.mxu0
      %v2887 = vadd.f32 %v958, %v2886
      %2888 = vmatmul.f32.gmra.mxu0 %v2849
      %v2889 = vpop.f32.mrf.mxu0
      %v2890 = vadd.f32 %v961, %v2889
      %2891 = vmatmul.f32.gmra.mxu0 %v2852
      %v2892 = vpop.f32.mrf.mxu0
      %v2893 = vadd.f32 %v964, %v2892
      %2894 = vmatmul.f32.gmra.mxu0 %v2855
      %v2895 = vpop.f32.mrf.mxu0
      %v2896 = vadd.f32 %v967, %v2895
      %2897 = vdwg.mxu0
      %2899 = vset.pattern.permute.xlu0 0
      %2900 = vperm.xlu0 %2899, %v2719
      %v2901 = vpop.permute.xlu0 %2900
      %2904 = vset.pattern.permute.xlu0 0
      %2905 = vperm.xlu0 %2904, %v2720
      %v2906 = vpop.permute.xlu0 %2905
      %2909 = vset.pattern.permute.xlu0 0
      %2910 = vperm.xlu0 %2909, %v2721
      %v2911 = vpop.permute.xlu0 %2910
      %2914 = vset.pattern.permute.xlu0 0
      %2915 = vperm.xlu0 %2914, %v2722
      %v2916 = vpop.permute.xlu0 %2915
      %2919 = vset.pattern.permute.xlu0 0
      %2920 = vperm.xlu0 %2919, %v2723
      %v2921 = vpop.permute.xlu0 %2920
      %2924 = vset.pattern.permute.xlu0 0
      %2925 = vperm.xlu0 %2924, %v2724
      %v2926 = vpop.permute.xlu0 %2925
      %2929 = vset.pattern.permute.xlu0 0
      %2930 = vperm.xlu0 %2929, %v2725
      %v2931 = vpop.permute.xlu0 %2930
      %2934 = vset.pattern.permute.xlu0 0
      %2935 = vperm.xlu0 %2934, %v2726
      %v2936 = vpop.permute.xlu0 %2935
      %v2938 = vmul.f32 %v2901, %v2778
      %v2939 = vmul.f32 %v2906, %v2781
      %v2940 = vmul.f32 %v2911, %v2784
      %v2941 = vmul.f32 %v2916, %v2787
      %v2942 = vmul.f32 %v2921, %v2790
      %v2943 = vmul.f32 %v2926, %v2793
      %v2944 = vmul.f32 %v2931, %v2796
      %v2945 = vmul.f32 %v2936, %v2799
      %v2946 = vmax.f32 %v2938, 0.0
      %v2947 = vmax.f32 %v2939, 0.0
      %v2948 = vmax.f32 %v2940, 0.0
      %v2949 = vmax.f32 %v2941, 0.0
      %v2950 = vmax.f32 %v2942, 0.0
      %v2951 = vmax.f32 %v2943, 0.0
      %v2952 = vmax.f32 %v2944, 0.0
      %v2953 = vmax.f32 %v2945, 0.0
      %2955 = vset.pattern.permute.xlu0 0
      %2956 = vperm.xlu0 %2955, %v2728
      %v2957 = vpop.permute.xlu0 %2956
      %2960 = vset.pattern.permute.xlu0 0
      %2961 = vperm.xlu0 %2960, %v2729
      %v2962 = vpop.permute.xlu0 %2961
      %2965 = vset.pattern.permute.xlu0 0
      %2966 = vperm.xlu0 %2965, %v2730
      %v2967 = vpop.permute.xlu0 %2966
      %2970 = vset.pattern.permute.xlu0 0
      %2971 = vperm.xlu0 %2970, %v2731
      %v2972 = vpop.permute.xlu0 %2971
      %2975 = vset.pattern.permute.xlu0 0
      %2976 = vperm.xlu0 %2975, %v2732
      %v2977 = vpop.permute.xlu0 %2976
      %2980 = vset.pattern.permute.xlu0 0
      %2981 = vperm.xlu0 %2980, %v2733
      %v2982 = vpop.permute.xlu0 %2981
      %2985 = vset.pattern.permute.xlu0 0
      %2986 = vperm.xlu0 %2985, %v2734
      %v2987 = vpop.permute.xlu0 %2986
      %2990 = vset.pattern.permute.xlu0 0
      %2991 = vperm.xlu0 %2990, %v2735
      %v2992 = vpop.permute.xlu0 %2991
      %v2994 = vmul.f32 %v2957, %v2875
      %v2995 = vmul.f32 %v2962, %v2878
      %v2996 = vmul.f32 %v2967, %v2881
      %v2997 = vmul.f32 %v2972, %v2884
      %v2998 = vmul.f32 %v2977, %v2887
      %v2999 = vmul.f32 %v2982, %v2890
      %v3000 = vmul.f32 %v2987, %v2893
      %v3001 = vmul.f32 %v2992, %v2896
      %v3002 = vmax.f32 %v2994, 0.0
      %v3003 = vmax.f32 %v2995, 0.0
      %v3004 = vmax.f32 %v2996, 0.0
      %v3005 = vmax.f32 %v2997, 0.0
      %v3006 = vmax.f32 %v2998, 0.0
      %v3007 = vmax.f32 %v2999, 0.0
      %v3008 = vmax.f32 %v3000, 0.0
      %v3009 = vmax.f32 %v3001, 0.0
      %3010 = vmatpush.msra.mxu0 0.0
      %3011 = vmatpush.msra.mxu0 0.0
      %3012 = vmatpush.msra.mxu0 0.0
      %3013 = vmatpush.msra.mxu0 0.0
      %3014 = vmatpush.msra.mxu0 0.0
      %3015 = vmatpush.msra.mxu0 0.0
      %3016 = vmatpush.msra.mxu0 0.0
      %3017 = vmatpush.msra.mxu0 0.0
      %3018 = vmatpush.msra.mxu0 %v2953
      %3019 = vmatpush.msra.mxu0 %v2952
      %3020 = vmatpush.msra.mxu0 %v2951
      %3021 = vmatpush.msra.mxu0 %v2950
      %3022 = vmatpush.msra.mxu0 %v2949
      %3023 = vmatpush.msra.mxu0 %v2948
      %3024 = vmatpush.msra.mxu0 %v2947
      %3025 = vmatpush.msra.mxu0 %v2946
      %3026 = vmatmul.f32.gmra.mxu0 %v2737
      %v3027 = vpop.f32.mrf.mxu0
      %v3028 = vadd.f32 %v2946, %v3027
      %3029 = vmatmul.f32.gmra.mxu0 %v2740
      %v3030 = vpop.f32.mrf.mxu0
      %v3031 = vadd.f32 %v2947, %v3030
      %3032 = vmatmul.f32.gmra.mxu0 %v2743
      %v3033 = vpop.f32.mrf.mxu0
      %v3034 = vadd.f32 %v2948, %v3033
      %3035 = vmatmul.f32.gmra.mxu0 %v2746
      %v3036 = vpop.f32.mrf.mxu0
      %v3037 = vadd.f32 %v2949, %v3036
      %3038 = vmatmul.f32.gmra.mxu0 %v2749
      %v3039 = vpop.f32.mrf.mxu0
      %v3040 = vadd.f32 %v2950, %v3039
      %3041 = vmatmul.f32.gmra.mxu0 %v2752
      %v3042 = vpop.f32.mrf.mxu0
      %v3043 = vadd.f32 %v2951, %v3042
      %3044 = vmatmul.f32.gmra.mxu0 %v2755
      %v3045 = vpop.f32.mrf.mxu0
      %v3046 = vadd.f32 %v2952, %v3045
      %3047 = vmatmul.f32.gmra.mxu0 %v2758
      %v3048 = vpop.f32.mrf.mxu0
      %v3049 = vadd.f32 %v2953, %v3048
      %3050 = vdwg.mxu0
      %3051 = vmatpush.msra.mxu0 0.0
      %3052 = vmatpush.msra.mxu0 0.0
      %3053 = vmatpush.msra.mxu0 0.0
      %3054 = vmatpush.msra.mxu0 0.0
      %3055 = vmatpush.msra.mxu0 0.0
      %3056 = vmatpush.msra.mxu0 0.0
      %3057 = vmatpush.msra.mxu0 0.0
      %3058 = vmatpush.msra.mxu0 0.0
      %3059 = vmatpush.msra.mxu0 %v3009
      %3060 = vmatpush.msra.mxu0 %v3008
      %3061 = vmatpush.msra.mxu0 %v3007
      %3062 = vmatpush.msra.mxu0 %v3006
      %3063 = vmatpush.msra.mxu0 %v3005
      %3064 = vmatpush.msra.mxu0 %v3004
      %3065 = vmatpush.msra.mxu0 %v3003
      %3066 = vmatpush.msra.mxu0 %v3002
      %3067 = vmatmul.f32.gmra.mxu0 %v2834
      %v3068 = vpop.f32.mrf.mxu0
      %v3069 = vadd.f32 %v3002, %v3068
      %3070 = vmatmul.f32.gmra.mxu0 %v2837
      %v3071 = vpop.f32.mrf.mxu0
      %v3072 = vadd.f32 %v3003, %v3071
      %3073 = vmatmul.f32.gmra.mxu0 %v2840
      %v3074 = vpop.f32.mrf.mxu0
      %v3075 = vadd.f32 %v3004, %v3074
      %3076 = vmatmul.f32.gmra.mxu0 %v2843
      %v3077 = vpop.f32.mrf.mxu0
      %v3078 = vadd.f32 %v3005, %v3077
      %3079 = vmatmul.f32.gmra.mxu0 %v2846
      %v3080 = vpop.f32.mrf.mxu0
      %v3081 = vadd.f32 %v3006, %v3080
      %3082 = vmatmul.f32.gmra.mxu0 %v2849
      %v3083 = vpop.f32.mrf.mxu0
      %v3084 = vadd.f32 %v3007, %v3083
      %3085 = vmatmul.f32.gmra.mxu0 %v2852
      %v3086 = vpop.f32.mrf.mxu0
      %v3087 = vadd.f32 %v3008, %v3086
      %3088 = vmatmul.f32.gmra.mxu0 %v2855
      %v3089 = vpop.f32.mrf.mxu0
      %v3090 = vadd.f32 %v3009, %v3089
      %3091 = vdwg.mxu0
      %v3093 = vsel %vm1358, %v3069, 0
      %v3096 = vsel %vm1358, %v3072, 0
      %v3099 = vsel %vm1358, %v3075, 0
      %v3102 = vsel %vm1358, %v3078, 0
      %v3105 = vsel %vm1358, %v3081, 0
      %v3108 = vsel %vm1358, %v3084, 0
      %v3111 = vsel %vm1358, %v3087, 0
      %v3114 = vsel %vm1358, %v3090, 0
      %3116 = vmatpush.msra.mxu0 0.0
      %3117 = vmatpush.msra.mxu0 0.0
      %3118 = vmatpush.msra.mxu0 0.0
      %3119 = vmatpush.msra.mxu0 0.0
      %3120 = vmatpush.msra.mxu0 0.0
      %3121 = vmatpush.msra.mxu0 0.0
      %3122 = vmatpush.msra.mxu0 0.0
      %3123 = vmatpush.msra.mxu0 0.0
      %3124 = vmatpush.msra.mxu0 0.0
      %3125 = vmatpush.msra.mxu0 0.0
      %3126 = vmatpush.msra.mxu0 0.0
      %3127 = vmatpush.msra.mxu0 0.0
      %3128 = vmatpush.msra.mxu0 %v976
      %3129 = vmatpush.msra.mxu0 %v975
      %3130 = vmatpush.msra.mxu0 %v974
      %3131 = vmatpush.msra.mxu0 %v973
      %3132 = vmatmul.f32.gmra.mxu0 %v3093
      %v3133 = vpop.f32.mrf.mxu0
      %v3134 = vadd.f32 0.0, %v3133
      %3135 = vmatmul.f32.gmra.mxu0 %v3096
      %v3136 = vpop.f32.mrf.mxu0
      %v3137 = vadd.f32 0.0, %v3136
      %3138 = vmatmul.f32.gmra.mxu0 %v3099
      %v3139 = vpop.f32.mrf.mxu0
      %v3140 = vadd.f32 0.0, %v3139
      %3141 = vmatmul.f32.gmra.mxu0 %v3102
      %v3142 = vpop.f32.mrf.mxu0
      %v3143 = vadd.f32 0.0, %v3142
      %3144 = vmatmul.f32.gmra.mxu0 %v3105
      %v3145 = vpop.f32.mrf.mxu0
      %v3146 = vadd.f32 0.0, %v3145
      %3147 = vmatmul.f32.gmra.mxu0 %v3108
      %v3148 = vpop.f32.mrf.mxu0
      %v3149 = vadd.f32 0.0, %v3148
      %3150 = vmatmul.f32.gmra.mxu0 %v3111
      %v3151 = vpop.f32.mrf.mxu0
      %v3152 = vadd.f32 0.0, %v3151
      %3153 = vmatmul.f32.gmra.mxu0 %v3114
      %v3154 = vpop.f32.mrf.mxu0
      %v3155 = vadd.f32 0.0, %v3154
      %3156 = vdwg.mxu0
      %v3158 = vsel %vm1358, %v3028, 0
      %v3161 = vsel %vm1358, %v3031, 0
      %v3164 = vsel %vm1358, %v3034, 0
      %v3167 = vsel %vm1358, %v3037, 0
      %v3170 = vsel %vm1358, %v3040, 0
      %v3173 = vsel %vm1358, %v3043, 0
      %v3176 = vsel %vm1358, %v3046, 0
      %v3179 = vsel %vm1358, %v3049, 0
      %3181 = vmatpush.msra.mxu0 0.0
      %3182 = vmatpush.msra.mxu0 0.0
      %3183 = vmatpush.msra.mxu0 0.0
      %3184 = vmatpush.msra.mxu0 0.0
      %3185 = vmatpush.msra.mxu0 0.0
      %3186 = vmatpush.msra.mxu0 0.0
      %3187 = vmatpush.msra.mxu0 0.0
      %3188 = vmatpush.msra.mxu0 0.0
      %3189 = vmatpush.msra.mxu0 0.0
      %3190 = vmatpush.msra.mxu0 0.0
      %3191 = vmatpush.msra.mxu0 0.0
      %3192 = vmatpush.msra.mxu0 0.0
      %3193 = vmatpush.msra.mxu0 %v972
      %3194 = vmatpush.msra.mxu0 %v971
      %3195 = vmatpush.msra.mxu0 %v970
      %3196 = vmatpush.msra.mxu0 %v969
      %3197 = vmatmul.f32.gmra.mxu0 %v3158
      %v3198 = vpop.f32.mrf.mxu0
      %v3199 = vadd.f32 %v3134, %v3198
      %3200 = vmatmul.f32.gmra.mxu0 %v3161
      %v3201 = vpop.f32.mrf.mxu0
      %v3202 = vadd.f32 %v3137, %v3201
      %3203 = vmatmul.f32.gmra.mxu0 %v3164
      %v3204 = vpop.f32.mrf.mxu0
      %v3205 = vadd.f32 %v3140, %v3204
      %3206 = vmatmul.f32.gmra.mxu0 %v3167
      %v3207 = vpop.f32.mrf.mxu0
      %v3208 = vadd.f32 %v3143, %v3207
      %3209 = vmatmul.f32.gmra.mxu0 %v3170
      %v3210 = vpop.f32.mrf.mxu0
      %v3211 = vadd.f32 %v3146, %v3210
      %3212 = vmatmul.f32.gmra.mxu0 %v3173
      %v3213 = vpop.f32.mrf.mxu0
      %v3214 = vadd.f32 %v3149, %v3213
      %3215 = vmatmul.f32.gmra.mxu0 %v3176
      %v3216 = vpop.f32.mrf.mxu0
      %v3217 = vadd.f32 %v3152, %v3216
      %3218 = vmatmul.f32.gmra.mxu0 %v3179
      %v3219 = vpop.f32.mrf.mxu0
      %v3220 = vadd.f32 %v3155, %v3219
      %3221 = vdwg.mxu0
      %v3222 = vmul.f32 %v2719, 0.5
      %v3223 = vmul.f32 %v2720, 0.5
      %v3224 = vmul.f32 %v2721, 0.5
      %v3225 = vmul.f32 %v2722, 0.5
      %v3226 = vmul.f32 %v2723, 0.5
      %v3227 = vmul.f32 %v2724, 0.5
      %v3228 = vmul.f32 %v2725, 0.5
      %v3229 = vmul.f32 %v2726, 0.5
      %3231 = vset.pattern.permute.xlu0 0
      %3232 = vperm.xlu0 %3231, %v3222
      %v3233 = vpop.permute.xlu0 %3232
      %3236 = vset.pattern.permute.xlu0 0
      %3237 = vperm.xlu0 %3236, %v3223
      %v3238 = vpop.permute.xlu0 %3237
      %3241 = vset.pattern.permute.xlu0 0
      %3242 = vperm.xlu0 %3241, %v3224
      %v3243 = vpop.permute.xlu0 %3242
      %3246 = vset.pattern.permute.xlu0 0
      %3247 = vperm.xlu0 %3246, %v3225
      %v3248 = vpop.permute.xlu0 %3247
      %3251 = vset.pattern.permute.xlu0 0
      %3252 = vperm.xlu0 %3251, %v3226
      %v3253 = vpop.permute.xlu0 %3252
      %3256 = vset.pattern.permute.xlu0 0
      %3257 = vperm.xlu0 %3256, %v3227
      %v3258 = vpop.permute.xlu0 %3257
      %3261 = vset.pattern.permute.xlu0 0
      %3262 = vperm.xlu0 %3261, %v3228
      %v3263 = vpop.permute.xlu0 %3262
      %3266 = vset.pattern.permute.xlu0 0
      %3267 = vperm.xlu0 %3266, %v3229
      %v3268 = vpop.permute.xlu0 %3267
      %v3270 = vmul.f32 %v3233, %v3199
      %v3271 = vmul.f32 %v3238, %v3202
      %v3272 = vmul.f32 %v3243, %v3205
      %v3273 = vmul.f32 %v3248, %v3208
      %v3274 = vmul.f32 %v3253, %v3211
      %v3275 = vmul.f32 %v3258, %v3214
      %v3276 = vmul.f32 %v3263, %v3217
      %v3277 = vmul.f32 %v3268, %v3220
      %s3278 = scalar_lea.vmem %s387, 192
      %3279 = vst [vmem:[%s3278] sm:$0xff] %v3270
      %3280 = vst [vmem:[%s3278 + $0x8] sm:$0xff] %v3271
      %3281 = vst [vmem:[%s3278 + $0x10] sm:$0xff] %v3272
      %3282 = vst [vmem:[%s3278 + $0x18] sm:$0xff] %v3273
      %3283 = vst [vmem:[%s3278 + $0x20] sm:$0xff] %v3274
      %3284 = vst [vmem:[%s3278 + $0x28] sm:$0xff] %v3275
      %3285 = vst [vmem:[%s3278 + $0x30] sm:$0xff] %v3276
      %3286 = vst [vmem:[%s3278 + $0x38] sm:$0xff] %v3277
      %s3287 = smul.u32 4, %s19
      %p3288 = scmp.lt.s32.totalorder %s3287, 7
      %s3289 = scalar_select %p3288, %s3287, 7
      %s3290 = smul.addr %s3289, 8
      %s3291 = smul.addr %s3290, 8
      %s3292 = scalar_lea.vmem %s8, %s3291
      // Predicated region
      $region53: #{gcn_forward.1} parent=51 // pred_check
        %p3293 = pneg %p225
      $region54: #{gcn_forward.1} parent=51 // pred_check_branch
        %3295 = sbr.rel (%p3293) target = $region56
      $region55: #{gcn_forward.1} parent=51 // pred_region
        %s3296 = smul.u32 4, %s19
      $region56: #{gcn_forward.1} parent=51 // pred_fallthru
        _
    $region52: #{gcn_forward.1} parent=5 // pred_fallthru
      _
    %p3297 = scmp.le.s32.totalorder 2, %s14
    // Predicated region
    $region57: #{gcn_forward.1} parent=5 // pred_check
      %p3298 = pneg %p3297
    $region58: #{gcn_forward.1} parent=5 // pred_check_branch
      %3300 = sbr.rel (%p3298) target = $region60
    $region59: #{gcn_forward.1} parent=5 // pred_region
      %s3301 = ssub.s32 %s14, 2
      // Predicated region
      $region61: #{gcn_forward.1} parent=59 // pred_check
        %p3302 = pneg %p231
      $region62: #{gcn_forward.1} parent=59 // pred_check_branch
        %3304 = sbr.rel (%p3302) target = $region64
      $region63: #{gcn_forward.1} parent=59 // pred_region
        %s3305 = smul.u32 4, %s20
        %p3306 = scmp.lt.s32.totalorder %s3305, 7
        %s3307 = scalar_select %p3306, %s3305, 7
        %s3308 = smul.addr %s3307, 8
        %s3309 = smul.addr %s3308, 8
        %s3310 = scalar_lea.vmem %s8, %s3309
      $region64: #{gcn_forward.1} parent=59 // pred_fallthru
        _
    $region60: #{gcn_forward.1} parent=5 // pred_fallthru
      _
  $region6: #{gcn_forward.1} parent=0 // loop_footer
    %s18 = sadd.s32 1, %s14
  $region7: #{gcn_forward.1} parent=0 // loop_footer_branch
    %13 = sbr.rel target = $region3
  $region8: #{gcn_forward.1} parent=0 // loop_exit
    _

</llo_original>
